<compile_context>
chip_gen: v7x
topology: tpu7x:2x2x1
jax: 0.10.0
libtpu: 0.0.40
codegen_flags: <defaults>
</compile_context>

<pallas_src>
import functools
import numpy as np

import jax
import jax.numpy as jnp
from jax.experimental import pallas as pl
from jax.experimental.pallas import tpu as pltpu


_LN_EPS = 1e-5           # torch.nn.LayerNorm default
_PER_LAYER_REFS = 12     # refs per fused Block inside the kernel


# ----------------------------------------------------------------------------
# In-kernel helpers (all ops lower cleanly on Mosaic).
# ----------------------------------------------------------------------------
def _erf(x):
    # Abramowitz & Stegun 7.1.26 rational approximation, |abs err| < 1.5e-7,
    # i.e. exact-GELU semantics of torch.nn.GELU() to f32 precision.
    a1, a2, a3, a4, a5 = 0.254829592, -0.284496736, 1.421413741, -1.453152027, 1.061405429
    p = 0.3275911
    sgn = jnp.where(x >= 0.0, 1.0, -1.0)
    ax = jnp.abs(x)
    t = 1.0 / (1.0 + p * ax)
    poly = ((((a5 * t + a4) * t + a3) * t + a2) * t + a1) * t
    return sgn * (1.0 - poly * jnp.exp(-ax * ax))


def _gelu_exact(x):
    return 0.5 * x * (1.0 + _erf(x * (1.0 / np.sqrt(2.0))))


def _layernorm(x, g, b):
    mu = jnp.mean(x, axis=-1, keepdims=True)
    xc = x - mu
    var = jnp.mean(xc * xc, axis=-1, keepdims=True)
    return xc * jax.lax.rsqrt(var + _LN_EPS) * g + b


# ----------------------------------------------------------------------------
# One Block, fully in VMEM.  x is (rows, C) f32 with rows = Bblk * N.
# ----------------------------------------------------------------------------
def _block_body(x, g1_ref, b1_ref, qkvw_ref, projw_ref, projb_ref, g2_ref, b2_ref,
                f1w_ref, f1b_ref, f2w_ref, f2b_ref, bias_ref, *, num_heads, N):
    R, C = x.shape
    H = num_heads
    Dh = C // H
    Bblk = R // N

    # ---- LayerNorm 1 -> fused qkv projection (bf16 MXU, f32 accumulation) --------
    # scale is pre-folded into the q columns of qkv_w; qkv_bias=False -> no bias add.
    xn = _layernorm(x, g1_ref[...], b1_ref[...]).astype(jnp.bfloat16)
    qkv = jnp.dot(xn, qkvw_ref[...], preferred_element_type=jnp.float32)     # (R, 3C)

    # ---- per-head attention, folded straight into the output projection ----------
    # Each head accumulates oh @ projw[h*Dh:(h+1)*Dh] into a lane-dense (R, C) slab,
    # so no narrow-lane concatenation of head outputs is ever materialized.
    attn_proj = jnp.zeros((R, C), jnp.float32)
    for h in range(H):                                     # H is small & static
        qh = qkv[:, h * Dh:(h + 1) * Dh].reshape(Bblk, N, Dh).astype(jnp.bfloat16)
        kh = qkv[:, C + h * Dh:C + (h + 1) * Dh].reshape(Bblk, N, Dh).astype(jnp.bfloat16)
        vh = qkv[:, 2 * C + h * Dh:2 * C + (h + 1) * Dh].reshape(Bblk, N, Dh).astype(jnp.bfloat16)
        # q @ k^T via dot_general (contract last dims, single leading batch dim).
        s = jax.lax.dot_general(qh, kh, (((2,), (2,)), ((0,), (0,))),
                                preferred_element_type=jnp.float32)          # (Bblk, N, N)
        s = s + bias_ref[h][None]
        m = jnp.max(s, axis=-1, keepdims=True)
        p = jnp.exp(s - m)
        p = p * pl.reciprocal(jnp.sum(p, axis=-1, keepdims=True), approx=True)
        oh = jax.lax.dot_general(p.astype(jnp.bfloat16), vh, (((2,), (1,)), ((0,), (0,))),
                                 preferred_element_type=jnp.float32)         # (Bblk, N, Dh)
        attn_proj = attn_proj + jnp.dot(
            oh.reshape(R, Dh).astype(jnp.bfloat16),
            projw_ref[h * Dh:(h + 1) * Dh, :],
            preferred_element_type=jnp.float32)

    x1 = x + attn_proj + projb_ref[...]                    # residual (f32)

    # ---- LayerNorm 2 -> MLP (exact GELU in f32, bf16 matmuls) + residual ---------
    x1n = _layernorm(x1, g2_ref[...], b2_ref[...]).astype(jnp.bfloat16)
    hdn = jnp.dot(x1n, f1w_ref[...], preferred_element_type=jnp.float32) + f1b_ref[...]
    hdn = _gelu_exact(hdn).astype(jnp.bfloat16)
    mlp = jnp.dot(hdn, f2w_ref[...], preferred_element_type=jnp.float32) + f2b_ref[...]
    return x1 + mlp


def _stack_kernel(*refs, num_heads, tokens_per_window, num_layers):
    x_ref = refs[0]
    o_ref = refs[-1]
    params = refs[1:-1]
    x = x_ref[...].astype(jnp.float32)
    for l in range(num_layers):                            # fused Blocks, x stays in VMEM
        (g1, b1, qkvw, projw, projb, g2, b2,
         f1w, f1b, f2w, f2b, bias) = params[l * _PER_LAYER_REFS:(l + 1) * _PER_LAYER_REFS]
        x = _block_body(x, g1, b1, qkvw, projw, projb, g2, b2,
                        f1w, f1b, f2w, f2b, bias,
                        num_heads=num_heads, N=tokens_per_window)
    o_ref[...] = x.astype(o_ref.dtype)


# ----------------------------------------------------------------------------
# Generation-aware VMEM planning & tiling.
# ----------------------------------------------------------------------------
def _vmem_plan():
    try:
        cap = int(pltpu.get_tpu_info().vmem_capacity_bytes)
    except Exception:
        cap = 64 << 20                       # conservative (v7x per-TC VMEM)
    try:
        kind = jax.devices()[0].device_kind.lower()
    except Exception:
        kind = ""
    multi_tc = ("v7" in kind) or ("7x" in kind)      # 2 TensorCores/chip only on v7x
    budget = cap // 2                                 # sizing budget (weights + acts)
    vmem_limit = int(cap * 0.85)                      # explicit scoped-VMEM limit
    return budget, (2 if multi_tc else 1), vmem_limit


def _layer_weight_bytes(p):
    C = p["qkv_w"].shape[0]
    hidden = p["fc1_w"].shape[1]
    H, N, _ = p["rel_bias"].shape
    return ((C * 3 * C + C * C + C * hidden + hidden * C) * 2   # bf16 weights
            + H * N * N * 4                                     # f32 rel-pos bias
            + (8 * C + hidden) * 4)                             # f32 LN params / biases


def _group_layers(params_list, budget):
    """Fuse consecutive Blocks whose resident weights fit ~1/4 of the VMEM budget."""
    groups, cur, cur_bytes = [], [], 0
    for p in params_list:
        wb = _layer_weight_bytes(p)
        if cur and 2 * (cur_bytes + wb) > budget // 2:
            groups.append(cur)
            cur, cur_bytes = [], 0
        cur.append(p)
        cur_bytes += wb
    if cur:
        groups.append(cur)
    return groups


def _choose_window_block(B, N, C, hidden, H, weight_bytes, budget, min_steps):
    """Largest divisor of B fitting the VMEM budget; >=min_steps grid steps; prefer
    row counts (Bblk*N) that are multiples of the MXU edge (256)."""
    # rough per-window f32 working set (x, xn, qkv, attn accum, mlp hidden, bf16 shadows)
    act = 4 * N * (10 * C + 6 * C + 3 * hidden) + 2 * 4 * N * N
    io = 2 * 2 * 4 * N * C                       # double-buffered x in + out blocks
    avail = max(budget - 2 * weight_bytes, act + io)
    cap = max(1, avail // (act + io))
    if min_steps > 1:
        cap = min(cap, max(1, B // min_steps))   # only force a split on 2-TC chips
    cap = min(cap, B)
    divs = [d for d in range(1, cap + 1) if B % d == 0]
    best = max(divs)
    aligned = [d for d in divs if (d * N) % 256 == 0]
    if aligned and 2 * max(aligned) >= best:
        best = max(aligned)
    return best


# ----------------------------------------------------------------------------
# Wrapper: one pallas_call per group of fused Blocks, gridded over window blocks.
# ----------------------------------------------------------------------------
def _blocks_call(group, x2, *, num_heads, B, N, budget, min_steps, vmem_limit):
    R_total, C = x2.shape
    H = num_heads
    Dh = C // H
    hidden = group[0]["fc1_w"].shape[1]
    scale = Dh ** (-0.5)

    weight_bytes = sum(_layer_weight_bytes(p) for p in group)
    Bblk = _choose_window_block(B, N, C, hidden, H, weight_bytes, budget, min_steps)
    rows = Bblk * N
    grid = (B // Bblk,)

    def rep2(shape):
        return pl.BlockSpec(shape, lambda i: (0, 0))      # VMEM-resident across steps

    def rep3(shape):
        return pl.BlockSpec(shape, lambda i: (0, 0, 0))

    operands, specs = [], []

    def add(arr, spec):
        operands.append(arr)
        specs.append(spec)

    for p in group:
        # fold attention scale into the q columns of qkv_w (exact: qkv_bias=False)
        qkv_w = jnp.concatenate([p["qkv_w"][:, :C] * scale, p["qkv_w"][:, C:]], axis=1)
        add(p["ln1_g"].reshape(1, C).astype(jnp.float32), rep2((1, C)))
        add(p["ln1_b"].reshape(1, C).astype(jnp.float32), rep2((1, C)))
        add(qkv_w.astype(jnp.bfloat16), rep2((C, 3 * C)))
        add(p["proj_w"].astype(jnp.bfloat16), rep2((C, C)))
        add(p["proj_b"].reshape(1, C).astype(jnp.float32), rep2((1, C)))
        add(p["ln2_g"].reshape(1, C).astype(jnp.float32), rep2((1, C)))
        add(p["ln2_b"].reshape(1, C).astype(jnp.float32), rep2((1, C)))
        add(p["fc1_w"].astype(jnp.bfloat16), rep2((C, hidden)))
        add(p["fc1_b"].reshape(1, hidden).astype(jnp.float32), rep2((1, hidden)))
        add(p["fc2_w"].astype(jnp.bfloat16), rep2((hidden, C)))
        add(p["fc2_b"].reshape(1, C).astype(jnp.float32), rep2((1, C)))
        add(p["rel_bias"].astype(jnp.float32), rep3((H, N, N)))

    kernel = functools.partial(_stack_kernel, num_heads=H, tokens_per_window=N,
                               num_layers=len(group))
    return pl.pallas_call(
        kernel,
        out_shape=jax.ShapeDtypeStruct((R_total, C), x2.dtype),
        grid=grid,
        in_specs=[pl.BlockSpec((rows, C), lambda i: (i, 0))] + specs,
        out_specs=pl.BlockSpec((rows, C), lambda i: (i, 0)),
        compiler_params=pltpu.CompilerParams(
            dimension_semantics=("parallel",),
            vmem_limit_bytes=vmem_limit),
    )(x2, *operands)


def transformer_encoder_forward(params_list, x, num_heads):
    B, N, C = x.shape
    budget, min_steps, vmem_limit = _vmem_plan()
    groups = _group_layers(params_list, budget)
    x2 = x.reshape(B * N, C)                     # 2-D slab: simple row-blocked tiling
    for g in groups:
        x2 = _blocks_call(g, x2, num_heads=num_heads, B=B, N=N, budget=budget,
                          min_steps=min_steps, vmem_limit=vmem_limit)
    return x2.reshape(B, N, C)


# ----------------------------------------------------------------------------
# Parameter init (relative-position bias precomputed ONCE here).
# ----------------------------------------------------------------------------
def make_relative_position_index(window_size):
    ws = window_size
    coords = np.stack(np.meshgrid(np.arange(ws), np.arange(ws), indexing="ij"))
    coords_flatten = coords.reshape(2, -1)
    rel = coords_flatten[:, :, None] - coords_flatten[:, None, :]
    rel = rel.transpose(1, 2, 0).copy()
    rel[:, :, 0] += ws - 1
    rel[:, :, 1] += ws - 1
    rel[:, :, 0] *= 2 * ws - 1
    return rel.sum(-1)                                                       # (N, N)


def init_block_params(key, dim, num_heads, window_size, mlp_ratio=4.0):
    N = window_size * window_size
    hidden = int(dim * mlp_ratio)
    ks = jax.random.split(key, 7)
    # trunc_normal_(std=0.02) approximated by normal*0.02 (init only, not fwd semantics)
    table = jax.random.normal(ks[0], ((2 * window_size - 1) ** 2, num_heads),
                              jnp.float32) * 0.02
    rpi = make_relative_position_index(window_size).reshape(-1)
    rel_bias = table[rpi].reshape(N, N, num_heads).transpose(2, 0, 1)        # (H, N, N)
    return {
        "ln1_g": jnp.ones((dim,), jnp.float32),
        "ln1_b": jnp.zeros((dim,), jnp.float32),
        "qkv_w": jax.random.normal(ks[1], (dim, 3 * dim), jnp.float32) * 0.02,
        # qkv_bias=False in the module -> no qkv bias parameter at all
        "proj_w": jax.random.normal(ks[2], (dim, dim), jnp.float32) * 0.02,
        "proj_b": jax.random.normal(ks[3], (dim,), jnp.float32) * 0.02,
        "ln2_g": jnp.ones((dim,), jnp.float32),
        "ln2_b": jnp.zeros((dim,), jnp.float32),
        "fc1_w": jax.random.normal(ks[4], (dim, hidden), jnp.float32) * 0.02,
        "fc1_b": jax.random.normal(ks[5], (hidden,), jnp.float32) * 0.02,
        "fc2_w": jax.random.normal(ks[6], (hidden, dim), jnp.float32) * 0.02,
        "fc2_b": jax.random.normal(jax.random.fold_in(ks[6], 1), (dim,), jnp.float32) * 0.02,
        "rel_bias": jnp.asarray(rel_bias),
    }


# ----------------------------------------------------------------------------
# Pure-JAX (f32) reference for validation.
# ----------------------------------------------------------------------------
def block_reference(p, x, num_heads):
    B, N, C = x.shape
    Dh = C // num_heads
    scale = Dh ** (-0.5)

    def ln(v, g, b):
        mu = v.mean(-1, keepdims=True)
        var = ((v - mu) ** 2).mean(-1, keepdims=True)
        return (v - mu) * jax.lax.rsqrt(var + _LN_EPS) * g + b

    h = ln(x, p["ln1_g"], p["ln1_b"])
    qkv = h @ p["qkv_w"]
    qkv = qkv.reshape(B, N, 3, num_heads, Dh).transpose(2, 0, 3, 1, 4)
    q, k, v = qkv[0], qkv[1], qkv[2]
    attn = jnp.einsum("bhnd,bhmd->bhnm", q, k) * scale + p["rel_bias"][None]
    attn = jax.nn.softmax(attn, axis=-1)
    o = jnp.einsum("bhnm,bhmd->bhnd", attn, v).transpose(0, 2, 1, 3).reshape(B, N, C)
    x = x + (o @ p["proj_w"] + p["proj_b"])
    h = ln(x, p["ln2_g"], p["ln2_b"])
    h = jax.nn.gelu(h @ p["fc1_w"] + p["fc1_b"], approximate=False)
    return x + (h @ p["fc2_w"] + p["fc2_b"])


def transformer_encoder_reference(params_list, x, num_heads):
    for p in params_list:
        x = block_reference(p, x, num_heads)
    return x


if __name__ == "__main__":
    # Small shapes consistent with the module: N must equal window_size**2.
    depth = 2
    B = 2
    window_size = 4
    N = window_size * window_size      # 16 tokens per window
    dim = 64
    num_heads = 4                      # TransformerEncoder default heads=4
    mlp_ratio = 4.0

    key = jax.random.PRNGKey(0)
    kx, *kps = jax.random.split(key, depth + 1)
    params_list = [init_block_params(k, dim, num_heads, window_size, mlp_ratio)
                   for k in kps]
    x = jax.random.normal(kx, (B, N, dim), jnp.float32)

    out = transformer_encoder_forward(params_list, x, num_heads)
    out = jax.block_until_ready(out)
    assert out.shape == (B, N, dim)

    ref = transformer_encoder_reference(params_list, x, num_heads)
    # bf16 matmul inputs with f32 accumulation -> ~1e-2 relative error budget.
    np.testing.assert_allclose(np.asarray(out), np.asarray(ref), atol=2e-2, rtol=2e-2)

    print("KERNEL_OK")
</pallas_src>

<mosaic_0001>
module attributes {stable_mosaic.version = 11 : i64} {
  func.func @_stack_kernel(%arg0: i32, %arg1: memref<32x64xf32, #tpu.memory_space<vmem>>, %arg2: memref<1x64xf32, #tpu.memory_space<vmem>>, %arg3: memref<1x64xf32, #tpu.memory_space<vmem>>, %arg4: memref<64x192xbf16, #tpu.memory_space<vmem>>, %arg5: memref<64x64xbf16, #tpu.memory_space<vmem>>, %arg6: memref<1x64xf32, #tpu.memory_space<vmem>>, %arg7: memref<1x64xf32, #tpu.memory_space<vmem>>, %arg8: memref<1x64xf32, #tpu.memory_space<vmem>>, %arg9: memref<64x256xbf16, #tpu.memory_space<vmem>>, %arg10: memref<1x256xf32, #tpu.memory_space<vmem>>, %arg11: memref<256x64xbf16, #tpu.memory_space<vmem>>, %arg12: memref<1x64xf32, #tpu.memory_space<vmem>>, %arg13: memref<4x16x16xf32, #tpu.memory_space<vmem>>, %arg14: memref<1x64xf32, #tpu.memory_space<vmem>>, %arg15: memref<1x64xf32, #tpu.memory_space<vmem>>, %arg16: memref<64x192xbf16, #tpu.memory_space<vmem>>, %arg17: memref<64x64xbf16, #tpu.memory_space<vmem>>, %arg18: memref<1x64xf32, #tpu.memory_space<vmem>>, %arg19: memref<1x64xf32, #tpu.memory_space<vmem>>, %arg20: memref<1x64xf32, #tpu.memory_space<vmem>>, %arg21: memref<64x256xbf16, #tpu.memory_space<vmem>>, %arg22: memref<1x256xf32, #tpu.memory_space<vmem>>, %arg23: memref<256x64xbf16, #tpu.memory_space<vmem>>, %arg24: memref<1x64xf32, #tpu.memory_space<vmem>>, %arg25: memref<4x16x16xf32, #tpu.memory_space<vmem>>, %arg26: memref<32x64xf32, #tpu.memory_space<vmem>>) attributes {dimension_semantics = [#tpu.dimension_semantics<parallel>], iteration_bounds = array<i64: 1>, scalar_prefetch = 0 : i64, scratch_operands = 0 : i64, tpu.core_type = #tpu.core_type<tc>, window_params = [{transform_indices = @transform_0, window_bounds = array<i64: 32, 64>}, {pipeline_mode = #tpu.pipeline_mode<synchronous>, transform_indices = @transform_1, window_bounds = array<i64: 1, 64>}, {pipeline_mode = #tpu.pipeline_mode<synchronous>, transform_indices = @transform_2, window_bounds = array<i64: 1, 64>}, {pipeline_mode = #tpu.pipeline_mode<synchronous>, transform_indices = @transform_3, window_bounds = array<i64: 64, 192>}, {pipeline_mode = #tpu.pipeline_mode<synchronous>, transform_indices = @transform_4, window_bounds = array<i64: 64, 64>}, {pipeline_mode = #tpu.pipeline_mode<synchronous>, transform_indices = @transform_5, window_bounds = array<i64: 1, 64>}, {pipeline_mode = #tpu.pipeline_mode<synchronous>, transform_indices = @transform_6, window_bounds = array<i64: 1, 64>}, {pipeline_mode = #tpu.pipeline_mode<synchronous>, transform_indices = @transform_7, window_bounds = array<i64: 1, 64>}, {pipeline_mode = #tpu.pipeline_mode<synchronous>, transform_indices = @transform_8, window_bounds = array<i64: 64, 256>}, {pipeline_mode = #tpu.pipeline_mode<synchronous>, transform_indices = @transform_9, window_bounds = array<i64: 1, 256>}, {pipeline_mode = #tpu.pipeline_mode<synchronous>, transform_indices = @transform_10, window_bounds = array<i64: 256, 64>}, {pipeline_mode = #tpu.pipeline_mode<synchronous>, transform_indices = @transform_11, window_bounds = array<i64: 1, 64>}, {pipeline_mode = #tpu.pipeline_mode<synchronous>, transform_indices = @transform_12, window_bounds = array<i64: 4, 16, 16>}, {pipeline_mode = #tpu.pipeline_mode<synchronous>, transform_indices = @transform_13, window_bounds = array<i64: 1, 64>}, {pipeline_mode = #tpu.pipeline_mode<synchronous>, transform_indices = @transform_14, window_bounds = array<i64: 1, 64>}, {pipeline_mode = #tpu.pipeline_mode<synchronous>, transform_indices = @transform_15, window_bounds = array<i64: 64, 192>}, {pipeline_mode = #tpu.pipeline_mode<synchronous>, transform_indices = @transform_16, window_bounds = array<i64: 64, 64>}, {pipeline_mode = #tpu.pipeline_mode<synchronous>, transform_indices = @transform_17, window_bounds = array<i64: 1, 64>}, {pipeline_mode = #tpu.pipeline_mode<synchronous>, transform_indices = @transform_18, window_bounds = array<i64: 1, 64>}, {pipeline_mode = #tpu.pipeline_mode<synchronous>, transform_indices = @transform_19, window_bounds = array<i64: 1, 64>}, {pipeline_mode = #tpu.pipeline_mode<synchronous>, transform_indices = @transform_20, window_bounds = array<i64: 64, 256>}, {pipeline_mode = #tpu.pipeline_mode<synchronous>, transform_indices = @transform_21, window_bounds = array<i64: 1, 256>}, {pipeline_mode = #tpu.pipeline_mode<synchronous>, transform_indices = @transform_22, window_bounds = array<i64: 256, 64>}, {pipeline_mode = #tpu.pipeline_mode<synchronous>, transform_indices = @transform_23, window_bounds = array<i64: 1, 64>}, {pipeline_mode = #tpu.pipeline_mode<synchronous>, transform_indices = @transform_24, window_bounds = array<i64: 4, 16, 16>}, {transform_indices = @transform_25, window_bounds = array<i64: 32, 64>}]} {
    %c0 = arith.constant 0 : index
    %c0_0 = arith.constant 0 : index
    %0 = vector.load %arg1[%c0, %c0_0] : memref<32x64xf32, #tpu.memory_space<vmem>>, vector<32x64xf32>
    %c0_1 = arith.constant 0 : index
    %c0_2 = arith.constant 0 : index
    %1 = vector.load %arg2[%c0_1, %c0_2] : memref<1x64xf32, #tpu.memory_space<vmem>>, vector<1x64xf32>
    %c0_3 = arith.constant 0 : index
    %c0_4 = arith.constant 0 : index
    %2 = vector.load %arg3[%c0_3, %c0_4] : memref<1x64xf32, #tpu.memory_space<vmem>>, vector<1x64xf32>
    %cst = arith.constant dense<0.000000e+00> : vector<32xf32>
    %3 = vector.multi_reduction <add>, %0, %cst [1] : vector<32x64xf32> to vector<32xf32>
    %4 = vector.shape_cast %3 : vector<32xf32> to vector<32x1xf32>
    %cst_5 = arith.constant 6.400000e+01 : f32
    %5 = vector.broadcast %cst_5 : f32 to vector<32x1xf32>
    %6 = arith.divf %4, %5 : vector<32x1xf32>
    %7 = vector.broadcast %6 : vector<32x1xf32> to vector<32x64xf32>
    %8 = arith.subf %0, %7 : vector<32x64xf32>
    %9 = arith.mulf %8, %8 : vector<32x64xf32>
    %cst_6 = arith.constant dense<0.000000e+00> : vector<32xf32>
    %10 = vector.multi_reduction <add>, %9, %cst_6 [1] : vector<32x64xf32> to vector<32xf32>
    %11 = vector.shape_cast %10 : vector<32xf32> to vector<32x1xf32>
    %cst_7 = arith.constant 6.400000e+01 : f32
    %12 = vector.broadcast %cst_7 : f32 to vector<32x1xf32>
    %13 = arith.divf %11, %12 : vector<32x1xf32>
    %cst_8 = arith.constant 9.99999974E-6 : f32
    %14 = vector.broadcast %cst_8 : f32 to vector<32x1xf32>
    %15 = arith.addf %13, %14 : vector<32x1xf32>
    %16 = math.rsqrt %15 : vector<32x1xf32>
    %17 = vector.broadcast %16 : vector<32x1xf32> to vector<32x64xf32>
    %18 = arith.mulf %8, %17 : vector<32x64xf32>
    %19 = vector.broadcast %1 : vector<1x64xf32> to vector<32x64xf32>
    %20 = arith.mulf %18, %19 : vector<32x64xf32>
    %21 = vector.broadcast %2 : vector<1x64xf32> to vector<32x64xf32>
    %22 = arith.addf %20, %21 : vector<32x64xf32>
    %23 = arith.truncf %22 : vector<32x64xf32> to vector<32x64xbf16>
    %c0_9 = arith.constant 0 : index
    %c0_10 = arith.constant 0 : index
    %24 = vector.load %arg4[%c0_9, %c0_10] : memref<64x192xbf16, #tpu.memory_space<vmem>>, vector<64x192xbf16>
    %cst_11 = arith.constant dense<0.000000e+00> : vector<32x192xf32>
    %25 = tpu.matmul %23, %24, %cst_11 {dimension_numbers = #tpu.dot_dimension_numbers<[1], [0], [0], [1], [0, 0, 1, 1], [], []>} : vector<32x64xbf16>, vector<64x192xbf16>, vector<32x192xf32> -> vector<32x192xf32>
    %cst_12 = arith.constant 0.000000e+00 : f32
    %26 = vector.broadcast %cst_12 : f32 to vector<32x64xf32>
    %27 = vector.extract_strided_slice %25 {offsets = [0, 0], sizes = [32, 16], strides = [1, 1]} : vector<32x192xf32> to vector<32x16xf32>
    %28 = vector.shape_cast %27 : vector<32x16xf32> to vector<2x16x16xf32>
    %29 = arith.truncf %28 : vector<2x16x16xf32> to vector<2x16x16xbf16>
    %30 = vector.extract_strided_slice %25 {offsets = [0, 64], sizes = [32, 16], strides = [1, 1]} : vector<32x192xf32> to vector<32x16xf32>
    %31 = vector.shape_cast %30 : vector<32x16xf32> to vector<2x16x16xf32>
    %32 = arith.truncf %31 : vector<2x16x16xf32> to vector<2x16x16xbf16>
    %33 = vector.extract_strided_slice %25 {offsets = [0, 128], sizes = [32, 16], strides = [1, 1]} : vector<32x192xf32> to vector<32x16xf32>
    %34 = vector.shape_cast %33 : vector<32x16xf32> to vector<2x16x16xf32>
    %35 = arith.truncf %34 : vector<2x16x16xf32> to vector<2x16x16xbf16>
    %cst_13 = arith.constant dense<0.000000e+00> : vector<2x16x16xf32>
    %36 = tpu.matmul %29, %32, %cst_13 {dimension_numbers = #tpu.dot_dimension_numbers<[2], [2], [1], [1], [0, 0, 0, 1, 1, 1], [0], [0]>} : vector<2x16x16xbf16>, vector<2x16x16xbf16>, vector<2x16x16xf32> -> vector<2x16x16xf32>
    %c0_14 = arith.constant 0 : index
    %c0_15 = arith.constant 0 : index
    %c0_16 = arith.constant 0 : index
    %37 = vector.load %arg13[%c0_14, %c0_15, %c0_16] : memref<4x16x16xf32, #tpu.memory_space<vmem>>, vector<1x16x16xf32>
    %38 = vector.shape_cast %37 : vector<1x16x16xf32> to vector<16x16xf32>
    %39 = vector.shape_cast %38 : vector<16x16xf32> to vector<1x16x16xf32>
    %40 = vector.broadcast %39 : vector<1x16x16xf32> to vector<2x16x16xf32>
    %41 = arith.addf %36, %40 : vector<2x16x16xf32>
    %cst_17 = arith.constant dense<0xFF800000> : vector<2x16xf32>
    %42 = vector.multi_reduction <maximumf>, %41, %cst_17 [2] : vector<2x16x16xf32> to vector<2x16xf32>
    %43 = vector.shape_cast %42 : vector<2x16xf32> to vector<2x16x1xf32>
    %44 = vector.broadcast %43 : vector<2x16x1xf32> to vector<2x16x16xf32>
    %45 = arith.subf %41, %44 : vector<2x16x16xf32>
    %46 = math.exp %45 : vector<2x16x16xf32>
    %cst_18 = arith.constant dense<0.000000e+00> : vector<2x16xf32>
    %47 = vector.multi_reduction <add>, %46, %cst_18 [2] : vector<2x16x16xf32> to vector<2x16xf32>
    %48 = vector.shape_cast %47 : vector<2x16xf32> to vector<2x16x1xf32>
    %49 = tpu.reciprocal %48 {approx = true} : vector<2x16x1xf32> -> vector<2x16x1xf32>
    %50 = vector.broadcast %49 : vector<2x16x1xf32> to vector<2x16x16xf32>
    %51 = arith.mulf %46, %50 : vector<2x16x16xf32>
    %52 = arith.truncf %51 : vector<2x16x16xf32> to vector<2x16x16xbf16>
    %cst_19 = arith.constant dense<0.000000e+00> : vector<2x16x16xf32>
    %53 = tpu.matmul %52, %35, %cst_19 {dimension_numbers = #tpu.dot_dimension_numbers<[2], [1], [1], [2], [0, 0, 0, 1, 1, 2], [0], [0]>} : vector<2x16x16xbf16>, vector<2x16x16xbf16>, vector<2x16x16xf32> -> vector<2x16x16xf32>
    %54 = vector.shape_cast %53 : vector<2x16x16xf32> to vector<32x16xf32>
    %55 = arith.truncf %54 : vector<32x16xf32> to vector<32x16xbf16>
    %c0_20 = arith.constant 0 : index
    %c0_21 = arith.constant 0 : index
    %56 = vector.load %arg5[%c0_20, %c0_21] : memref<64x64xbf16, #tpu.memory_space<vmem>>, vector<16x64xbf16>
    %cst_22 = arith.constant dense<0.000000e+00> : vector<32x64xf32>
    %57 = tpu.matmul %55, %56, %cst_22 {dimension_numbers = #tpu.dot_dimension_numbers<[1], [0], [0], [1], [0, 0, 1, 1], [], []>} : vector<32x16xbf16>, vector<16x64xbf16>, vector<32x64xf32> -> vector<32x64xf32>
    %58 = arith.addf %26, %57 : vector<32x64xf32>
    %59 = vector.extract_strided_slice %25 {offsets = [0, 16], sizes = [32, 16], strides = [1, 1]} : vector<32x192xf32> to vector<32x16xf32>
    %60 = vector.shape_cast %59 : vector<32x16xf32> to vector<2x16x16xf32>
    %61 = arith.truncf %60 : vector<2x16x16xf32> to vector<2x16x16xbf16>
    %62 = vector.extract_strided_slice %25 {offsets = [0, 80], sizes = [32, 16], strides = [1, 1]} : vector<32x192xf32> to vector<32x16xf32>
    %63 = vector.shape_cast %62 : vector<32x16xf32> to vector<2x16x16xf32>
    %64 = arith.truncf %63 : vector<2x16x16xf32> to vector<2x16x16xbf16>
    %65 = vector.extract_strided_slice %25 {offsets = [0, 144], sizes = [32, 16], strides = [1, 1]} : vector<32x192xf32> to vector<32x16xf32>
    %66 = vector.shape_cast %65 : vector<32x16xf32> to vector<2x16x16xf32>
    %67 = arith.truncf %66 : vector<2x16x16xf32> to vector<2x16x16xbf16>
    %cst_23 = arith.constant dense<0.000000e+00> : vector<2x16x16xf32>
    %68 = tpu.matmul %61, %64, %cst_23 {dimension_numbers = #tpu.dot_dimension_numbers<[2], [2], [1], [1], [0, 0, 0, 1, 1, 1], [0], [0]>} : vector<2x16x16xbf16>, vector<2x16x16xbf16>, vector<2x16x16xf32> -> vector<2x16x16xf32>
    %c1 = arith.constant 1 : index
    %c0_24 = arith.constant 0 : index
    %c0_25 = arith.constant 0 : index
    %69 = vector.load %arg13[%c1, %c0_24, %c0_25] : memref<4x16x16xf32, #tpu.memory_space<vmem>>, vector<1x16x16xf32>
    %70 = vector.shape_cast %69 : vector<1x16x16xf32> to vector<16x16xf32>
    %71 = vector.shape_cast %70 : vector<16x16xf32> to vector<1x16x16xf32>
    %72 = vector.broadcast %71 : vector<1x16x16xf32> to vector<2x16x16xf32>
    %73 = arith.addf %68, %72 : vector<2x16x16xf32>
    %cst_26 = arith.constant dense<0xFF800000> : vector<2x16xf32>
    %74 = vector.multi_reduction <maximumf>, %73, %cst_26 [2] : vector<2x16x16xf32> to vector<2x16xf32>
    %75 = vector.shape_cast %74 : vector<2x16xf32> to vector<2x16x1xf32>
    %76 = vector.broadcast %75 : vector<2x16x1xf32> to vector<2x16x16xf32>
    %77 = arith.subf %73, %76 : vector<2x16x16xf32>
    %78 = math.exp %77 : vector<2x16x16xf32>
    %cst_27 = arith.constant dense<0.000000e+00> : vector<2x16xf32>
    %79 = vector.multi_reduction <add>, %78, %cst_27 [2] : vector<2x16x16xf32> to vector<2x16xf32>
    %80 = vector.shape_cast %79 : vector<2x16xf32> to vector<2x16x1xf32>
    %81 = tpu.reciprocal %80 {approx = true} : vector<2x16x1xf32> -> vector<2x16x1xf32>
    %82 = vector.broadcast %81 : vector<2x16x1xf32> to vector<2x16x16xf32>
    %83 = arith.mulf %78, %82 : vector<2x16x16xf32>
    %84 = arith.truncf %83 : vector<2x16x16xf32> to vector<2x16x16xbf16>
    %cst_28 = arith.constant dense<0.000000e+00> : vector<2x16x16xf32>
    %85 = tpu.matmul %84, %67, %cst_28 {dimension_numbers = #tpu.dot_dimension_numbers<[2], [1], [1], [2], [0, 0, 0, 1, 1, 2], [0], [0]>} : vector<2x16x16xbf16>, vector<2x16x16xbf16>, vector<2x16x16xf32> -> vector<2x16x16xf32>
    %86 = vector.shape_cast %85 : vector<2x16x16xf32> to vector<32x16xf32>
    %87 = arith.truncf %86 : vector<32x16xf32> to vector<32x16xbf16>
    %c16 = arith.constant 16 : index
    %c0_29 = arith.constant 0 : index
    %88 = vector.load %arg5[%c16, %c0_29] : memref<64x64xbf16, #tpu.memory_space<vmem>>, vector<16x64xbf16>
    %cst_30 = arith.constant dense<0.000000e+00> : vector<32x64xf32>
    %89 = tpu.matmul %87, %88, %cst_30 {dimension_numbers = #tpu.dot_dimension_numbers<[1], [0], [0], [1], [0, 0, 1, 1], [], []>} : vector<32x16xbf16>, vector<16x64xbf16>, vector<32x64xf32> -> vector<32x64xf32>
    %90 = arith.addf %58, %89 : vector<32x64xf32>
    %91 = vector.extract_strided_slice %25 {offsets = [0, 32], sizes = [32, 16], strides = [1, 1]} : vector<32x192xf32> to vector<32x16xf32>
    %92 = vector.shape_cast %91 : vector<32x16xf32> to vector<2x16x16xf32>
    %93 = arith.truncf %92 : vector<2x16x16xf32> to vector<2x16x16xbf16>
    %94 = vector.extract_strided_slice %25 {offsets = [0, 96], sizes = [32, 16], strides = [1, 1]} : vector<32x192xf32> to vector<32x16xf32>
    %95 = vector.shape_cast %94 : vector<32x16xf32> to vector<2x16x16xf32>
    %96 = arith.truncf %95 : vector<2x16x16xf32> to vector<2x16x16xbf16>
    %97 = vector.extract_strided_slice %25 {offsets = [0, 160], sizes = [32, 16], strides = [1, 1]} : vector<32x192xf32> to vector<32x16xf32>
    %98 = vector.shape_cast %97 : vector<32x16xf32> to vector<2x16x16xf32>
    %99 = arith.truncf %98 : vector<2x16x16xf32> to vector<2x16x16xbf16>
    %cst_31 = arith.constant dense<0.000000e+00> : vector<2x16x16xf32>
    %100 = tpu.matmul %93, %96, %cst_31 {dimension_numbers = #tpu.dot_dimension_numbers<[2], [2], [1], [1], [0, 0, 0, 1, 1, 1], [0], [0]>} : vector<2x16x16xbf16>, vector<2x16x16xbf16>, vector<2x16x16xf32> -> vector<2x16x16xf32>
    %c2 = arith.constant 2 : index
    %c0_32 = arith.constant 0 : index
    %c0_33 = arith.constant 0 : index
    %101 = vector.load %arg13[%c2, %c0_32, %c0_33] : memref<4x16x16xf32, #tpu.memory_space<vmem>>, vector<1x16x16xf32>
    %102 = vector.shape_cast %101 : vector<1x16x16xf32> to vector<16x16xf32>
    %103 = vector.shape_cast %102 : vector<16x16xf32> to vector<1x16x16xf32>
    %104 = vector.broadcast %103 : vector<1x16x16xf32> to vector<2x16x16xf32>
    %105 = arith.addf %100, %104 : vector<2x16x16xf32>
    %cst_34 = arith.constant dense<0xFF800000> : vector<2x16xf32>
    %106 = vector.multi_reduction <maximumf>, %105, %cst_34 [2] : vector<2x16x16xf32> to vector<2x16xf32>
    %107 = vector.shape_cast %106 : vector<2x16xf32> to vector<2x16x1xf32>
    %108 = vector.broadcast %107 : vector<2x16x1xf32> to vector<2x16x16xf32>
    %109 = arith.subf %105, %108 : vector<2x16x16xf32>
    %110 = math.exp %109 : vector<2x16x16xf32>
    %cst_35 = arith.constant dense<0.000000e+00> : vector<2x16xf32>
    %111 = vector.multi_reduction <add>, %110, %cst_35 [2] : vector<2x16x16xf32> to vector<2x16xf32>
    %112 = vector.shape_cast %111 : vector<2x16xf32> to vector<2x16x1xf32>
    %113 = tpu.reciprocal %112 {approx = true} : vector<2x16x1xf32> -> vector<2x16x1xf32>
    %114 = vector.broadcast %113 : vector<2x16x1xf32> to vector<2x16x16xf32>
    %115 = arith.mulf %110, %114 : vector<2x16x16xf32>
    %116 = arith.truncf %115 : vector<2x16x16xf32> to vector<2x16x16xbf16>
    %cst_36 = arith.constant dense<0.000000e+00> : vector<2x16x16xf32>
    %117 = tpu.matmul %116, %99, %cst_36 {dimension_numbers = #tpu.dot_dimension_numbers<[2], [1], [1], [2], [0, 0, 0, 1, 1, 2], [0], [0]>} : vector<2x16x16xbf16>, vector<2x16x16xbf16>, vector<2x16x16xf32> -> vector<2x16x16xf32>
    %118 = vector.shape_cast %117 : vector<2x16x16xf32> to vector<32x16xf32>
    %119 = arith.truncf %118 : vector<32x16xf32> to vector<32x16xbf16>
    %c32 = arith.constant 32 : index
    %c0_37 = arith.constant 0 : index
    %120 = vector.load %arg5[%c32, %c0_37] : memref<64x64xbf16, #tpu.memory_space<vmem>>, vector<16x64xbf16>
    %cst_38 = arith.constant dense<0.000000e+00> : vector<32x64xf32>
    %121 = tpu.matmul %119, %120, %cst_38 {dimension_numbers = #tpu.dot_dimension_numbers<[1], [0], [0], [1], [0, 0, 1, 1], [], []>} : vector<32x16xbf16>, vector<16x64xbf16>, vector<32x64xf32> -> vector<32x64xf32>
    %122 = arith.addf %90, %121 : vector<32x64xf32>
    %123 = vector.extract_strided_slice %25 {offsets = [0, 48], sizes = [32, 16], strides = [1, 1]} : vector<32x192xf32> to vector<32x16xf32>
    %124 = vector.shape_cast %123 : vector<32x16xf32> to vector<2x16x16xf32>
    %125 = arith.truncf %124 : vector<2x16x16xf32> to vector<2x16x16xbf16>
    %126 = vector.extract_strided_slice %25 {offsets = [0, 112], sizes = [32, 16], strides = [1, 1]} : vector<32x192xf32> to vector<32x16xf32>
    %127 = vector.shape_cast %126 : vector<32x16xf32> to vector<2x16x16xf32>
    %128 = arith.truncf %127 : vector<2x16x16xf32> to vector<2x16x16xbf16>
    %129 = vector.extract_strided_slice %25 {offsets = [0, 176], sizes = [32, 16], strides = [1, 1]} : vector<32x192xf32> to vector<32x16xf32>
    %130 = vector.shape_cast %129 : vector<32x16xf32> to vector<2x16x16xf32>
    %131 = arith.truncf %130 : vector<2x16x16xf32> to vector<2x16x16xbf16>
    %cst_39 = arith.constant dense<0.000000e+00> : vector<2x16x16xf32>
    %132 = tpu.matmul %125, %128, %cst_39 {dimension_numbers = #tpu.dot_dimension_numbers<[2], [2], [1], [1], [0, 0, 0, 1, 1, 1], [0], [0]>} : vector<2x16x16xbf16>, vector<2x16x16xbf16>, vector<2x16x16xf32> -> vector<2x16x16xf32>
    %c3 = arith.constant 3 : index
    %c0_40 = arith.constant 0 : index
    %c0_41 = arith.constant 0 : index
    %133 = vector.load %arg13[%c3, %c0_40, %c0_41] : memref<4x16x16xf32, #tpu.memory_space<vmem>>, vector<1x16x16xf32>
    %134 = vector.shape_cast %133 : vector<1x16x16xf32> to vector<16x16xf32>
    %135 = vector.shape_cast %134 : vector<16x16xf32> to vector<1x16x16xf32>
    %136 = vector.broadcast %135 : vector<1x16x16xf32> to vector<2x16x16xf32>
    %137 = arith.addf %132, %136 : vector<2x16x16xf32>
    %cst_42 = arith.constant dense<0xFF800000> : vector<2x16xf32>
    %138 = vector.multi_reduction <maximumf>, %137, %cst_42 [2] : vector<2x16x16xf32> to vector<2x16xf32>
    %139 = vector.shape_cast %138 : vector<2x16xf32> to vector<2x16x1xf32>
    %140 = vector.broadcast %139 : vector<2x16x1xf32> to vector<2x16x16xf32>
    %141 = arith.subf %137, %140 : vector<2x16x16xf32>
    %142 = math.exp %141 : vector<2x16x16xf32>
    %cst_43 = arith.constant dense<0.000000e+00> : vector<2x16xf32>
    %143 = vector.multi_reduction <add>, %142, %cst_43 [2] : vector<2x16x16xf32> to vector<2x16xf32>
    %144 = vector.shape_cast %143 : vector<2x16xf32> to vector<2x16x1xf32>
    %145 = tpu.reciprocal %144 {approx = true} : vector<2x16x1xf32> -> vector<2x16x1xf32>
    %146 = vector.broadcast %145 : vector<2x16x1xf32> to vector<2x16x16xf32>
    %147 = arith.mulf %142, %146 : vector<2x16x16xf32>
    %148 = arith.truncf %147 : vector<2x16x16xf32> to vector<2x16x16xbf16>
    %cst_44 = arith.constant dense<0.000000e+00> : vector<2x16x16xf32>
    %149 = tpu.matmul %148, %131, %cst_44 {dimension_numbers = #tpu.dot_dimension_numbers<[2], [1], [1], [2], [0, 0, 0, 1, 1, 2], [0], [0]>} : vector<2x16x16xbf16>, vector<2x16x16xbf16>, vector<2x16x16xf32> -> vector<2x16x16xf32>
    %150 = vector.shape_cast %149 : vector<2x16x16xf32> to vector<32x16xf32>
    %151 = arith.truncf %150 : vector<32x16xf32> to vector<32x16xbf16>
    %c48 = arith.constant 48 : index
    %c0_45 = arith.constant 0 : index
    %152 = vector.load %arg5[%c48, %c0_45] : memref<64x64xbf16, #tpu.memory_space<vmem>>, vector<16x64xbf16>
    %cst_46 = arith.constant dense<0.000000e+00> : vector<32x64xf32>
    %153 = tpu.matmul %151, %152, %cst_46 {dimension_numbers = #tpu.dot_dimension_numbers<[1], [0], [0], [1], [0, 0, 1, 1], [], []>} : vector<32x16xbf16>, vector<16x64xbf16>, vector<32x64xf32> -> vector<32x64xf32>
    %154 = arith.addf %122, %153 : vector<32x64xf32>
    %155 = arith.addf %0, %154 : vector<32x64xf32>
    %c0_47 = arith.constant 0 : index
    %c0_48 = arith.constant 0 : index
    %156 = vector.load %arg6[%c0_47, %c0_48] : memref<1x64xf32, #tpu.memory_space<vmem>>, vector<1x64xf32>
    %157 = vector.broadcast %156 : vector<1x64xf32> to vector<32x64xf32>
    %158 = arith.addf %155, %157 : vector<32x64xf32>
    %c0_49 = arith.constant 0 : index
    %c0_50 = arith.constant 0 : index
    %159 = vector.load %arg7[%c0_49, %c0_50] : memref<1x64xf32, #tpu.memory_space<vmem>>, vector<1x64xf32>
    %c0_51 = arith.constant 0 : index
    %c0_52 = arith.constant 0 : index
    %160 = vector.load %arg8[%c0_51, %c0_52] : memref<1x64xf32, #tpu.memory_space<vmem>>, vector<1x64xf32>
    %cst_53 = arith.constant dense<0.000000e+00> : vector<32xf32>
    %161 = vector.multi_reduction <add>, %158, %cst_53 [1] : vector<32x64xf32> to vector<32xf32>
    %162 = vector.shape_cast %161 : vector<32xf32> to vector<32x1xf32>
    %cst_54 = arith.constant 6.400000e+01 : f32
    %163 = vector.broadcast %cst_54 : f32 to vector<32x1xf32>
    %164 = arith.divf %162, %163 : vector<32x1xf32>
    %165 = vector.broadcast %164 : vector<32x1xf32> to vector<32x64xf32>
    %166 = arith.subf %158, %165 : vector<32x64xf32>
    %167 = arith.mulf %166, %166 : vector<32x64xf32>
    %cst_55 = arith.constant dense<0.000000e+00> : vector<32xf32>
    %168 = vector.multi_reduction <add>, %167, %cst_55 [1] : vector<32x64xf32> to vector<32xf32>
    %169 = vector.shape_cast %168 : vector<32xf32> to vector<32x1xf32>
    %cst_56 = arith.constant 6.400000e+01 : f32
    %170 = vector.broadcast %cst_56 : f32 to vector<32x1xf32>
    %171 = arith.divf %169, %170 : vector<32x1xf32>
    %cst_57 = arith.constant 9.99999974E-6 : f32
    %172 = vector.broadcast %cst_57 : f32 to vector<32x1xf32>
    %173 = arith.addf %171, %172 : vector<32x1xf32>
    %174 = math.rsqrt %173 : vector<32x1xf32>
    %175 = vector.broadcast %174 : vector<32x1xf32> to vector<32x64xf32>
    %176 = arith.mulf %166, %175 : vector<32x64xf32>
    %177 = vector.broadcast %159 : vector<1x64xf32> to vector<32x64xf32>
    %178 = arith.mulf %176, %177 : vector<32x64xf32>
    %179 = vector.broadcast %160 : vector<1x64xf32> to vector<32x64xf32>
    %180 = arith.addf %178, %179 : vector<32x64xf32>
    %181 = arith.truncf %180 : vector<32x64xf32> to vector<32x64xbf16>
    %c0_58 = arith.constant 0 : index
    %c0_59 = arith.constant 0 : index
    %182 = vector.load %arg9[%c0_58, %c0_59] : memref<64x256xbf16, #tpu.memory_space<vmem>>, vector<64x256xbf16>
    %cst_60 = arith.constant dense<0.000000e+00> : vector<32x256xf32>
    %183 = tpu.matmul %181, %182, %cst_60 {dimension_numbers = #tpu.dot_dimension_numbers<[1], [0], [0], [1], [0, 0, 1, 1], [], []>} : vector<32x64xbf16>, vector<64x256xbf16>, vector<32x256xf32> -> vector<32x256xf32>
    %c0_61 = arith.constant 0 : index
    %c0_62 = arith.constant 0 : index
    %184 = vector.load %arg10[%c0_61, %c0_62] : memref<1x256xf32, #tpu.memory_space<vmem>>, vector<1x256xf32>
    %185 = vector.broadcast %184 : vector<1x256xf32> to vector<32x256xf32>
    %186 = arith.addf %183, %185 : vector<32x256xf32>
    %cst_63 = arith.constant 5.000000e-01 : f32
    %187 = vector.broadcast %cst_63 : f32 to vector<32x256xf32>
    %188 = arith.mulf %187, %186 : vector<32x256xf32>
    %cst_64 = arith.constant 0.707106769 : f32
    %189 = vector.broadcast %cst_64 : f32 to vector<32x256xf32>
    %190 = arith.mulf %186, %189 : vector<32x256xf32>
    %cst_65 = arith.constant 0.000000e+00 : f32
    %191 = vector.broadcast %cst_65 : f32 to vector<32x256xf32>
    %192 = arith.cmpf oge, %190, %191 : vector<32x256xf32>
    %cst_66 = arith.constant 1.000000e+00 : f32
    %cst_67 = arith.constant -1.000000e+00 : f32
    %193 = vector.broadcast %cst_66 : f32 to vector<32x256xf32>
    %194 = vector.broadcast %cst_67 : f32 to vector<32x256xf32>
    %195 = arith.select %192, %193, %194 : vector<32x256xi1>, vector<32x256xf32>
    %196 = math.absf %190 : vector<32x256xf32>
    %cst_68 = arith.constant 0.327591091 : f32
    %197 = vector.broadcast %cst_68 : f32 to vector<32x256xf32>
    %198 = arith.mulf %197, %196 : vector<32x256xf32>
    %cst_69 = arith.constant 1.000000e+00 : f32
    %199 = vector.broadcast %cst_69 : f32 to vector<32x256xf32>
    %200 = arith.addf %199, %198 : vector<32x256xf32>
    %cst_70 = arith.constant 1.000000e+00 : f32
    %201 = vector.broadcast %cst_70 : f32 to vector<32x256xf32>
    %202 = arith.divf %201, %200 : vector<32x256xf32>
    %cst_71 = arith.constant 1.06140542 : f32
    %203 = vector.broadcast %cst_71 : f32 to vector<32x256xf32>
    %204 = arith.mulf %203, %202 : vector<32x256xf32>
    %cst_72 = arith.constant -1.45315206 : f32
    %205 = vector.broadcast %cst_72 : f32 to vector<32x256xf32>
    %206 = arith.addf %204, %205 : vector<32x256xf32>
    %207 = arith.mulf %206, %202 : vector<32x256xf32>
    %cst_73 = arith.constant 1.42141378 : f32
    %208 = vector.broadcast %cst_73 : f32 to vector<32x256xf32>
    %209 = arith.addf %207, %208 : vector<32x256xf32>
    %210 = arith.mulf %209, %202 : vector<32x256xf32>
    %cst_74 = arith.constant -0.284496725 : f32
    %211 = vector.broadcast %cst_74 : f32 to vector<32x256xf32>
    %212 = arith.addf %210, %211 : vector<32x256xf32>
    %213 = arith.mulf %212, %202 : vector<32x256xf32>
    %cst_75 = arith.constant 0.254829586 : f32
    %214 = vector.broadcast %cst_75 : f32 to vector<32x256xf32>
    %215 = arith.addf %213, %214 : vector<32x256xf32>
    %216 = arith.mulf %215, %202 : vector<32x256xf32>
    %cst_76 = arith.constant 0.000000e+00 : f32
    %217 = vector.broadcast %cst_76 : f32 to vector<32x256xf32>
    %218 = arith.subf %217, %196 : vector<32x256xf32>
    %219 = arith.mulf %218, %196 : vector<32x256xf32>
    %220 = math.exp %219 : vector<32x256xf32>
    %221 = arith.mulf %216, %220 : vector<32x256xf32>
    %cst_77 = arith.constant 1.000000e+00 : f32
    %222 = vector.broadcast %cst_77 : f32 to vector<32x256xf32>
    %223 = arith.subf %222, %221 : vector<32x256xf32>
    %224 = arith.mulf %195, %223 : vector<32x256xf32>
    %cst_78 = arith.constant 1.000000e+00 : f32
    %225 = vector.broadcast %cst_78 : f32 to vector<32x256xf32>
    %226 = arith.addf %225, %224 : vector<32x256xf32>
    %227 = arith.mulf %188, %226 : vector<32x256xf32>
    %228 = arith.truncf %227 : vector<32x256xf32> to vector<32x256xbf16>
    %c0_79 = arith.constant 0 : index
    %c0_80 = arith.constant 0 : index
    %229 = vector.load %arg11[%c0_79, %c0_80] : memref<256x64xbf16, #tpu.memory_space<vmem>>, vector<256x64xbf16>
    %cst_81 = arith.constant dense<0.000000e+00> : vector<32x64xf32>
    %230 = tpu.matmul %228, %229, %cst_81 {dimension_numbers = #tpu.dot_dimension_numbers<[1], [0], [0], [1], [0, 0, 1, 1], [], []>} : vector<32x256xbf16>, vector<256x64xbf16>, vector<32x64xf32> -> vector<32x64xf32>
    %c0_82 = arith.constant 0 : index
    %c0_83 = arith.constant 0 : index
    %231 = vector.load %arg12[%c0_82, %c0_83] : memref<1x64xf32, #tpu.memory_space<vmem>>, vector<1x64xf32>
    %232 = vector.broadcast %231 : vector<1x64xf32> to vector<32x64xf32>
    %233 = arith.addf %230, %232 : vector<32x64xf32>
    %234 = arith.addf %158, %233 : vector<32x64xf32>
    %c0_84 = arith.constant 0 : index
    %c0_85 = arith.constant 0 : index
    %235 = vector.load %arg14[%c0_84, %c0_85] : memref<1x64xf32, #tpu.memory_space<vmem>>, vector<1x64xf32>
    %c0_86 = arith.constant 0 : index
    %c0_87 = arith.constant 0 : index
    %236 = vector.load %arg15[%c0_86, %c0_87] : memref<1x64xf32, #tpu.memory_space<vmem>>, vector<1x64xf32>
    %cst_88 = arith.constant dense<0.000000e+00> : vector<32xf32>
    %237 = vector.multi_reduction <add>, %234, %cst_88 [1] : vector<32x64xf32> to vector<32xf32>
    %238 = vector.shape_cast %237 : vector<32xf32> to vector<32x1xf32>
    %cst_89 = arith.constant 6.400000e+01 : f32
    %239 = vector.broadcast %cst_89 : f32 to vector<32x1xf32>
    %240 = arith.divf %238, %239 : vector<32x1xf32>
    %241 = vector.broadcast %240 : vector<32x1xf32> to vector<32x64xf32>
    %242 = arith.subf %234, %241 : vector<32x64xf32>
    %243 = arith.mulf %242, %242 : vector<32x64xf32>
    %cst_90 = arith.constant dense<0.000000e+00> : vector<32xf32>
    %244 = vector.multi_reduction <add>, %243, %cst_90 [1] : vector<32x64xf32> to vector<32xf32>
    %245 = vector.shape_cast %244 : vector<32xf32> to vector<32x1xf32>
    %cst_91 = arith.constant 6.400000e+01 : f32
    %246 = vector.broadcast %cst_91 : f32 to vector<32x1xf32>
    %247 = arith.divf %245, %246 : vector<32x1xf32>
    %cst_92 = arith.constant 9.99999974E-6 : f32
    %248 = vector.broadcast %cst_92 : f32 to vector<32x1xf32>
    %249 = arith.addf %247, %248 : vector<32x1xf32>
    %250 = math.rsqrt %249 : vector<32x1xf32>
    %251 = vector.broadcast %250 : vector<32x1xf32> to vector<32x64xf32>
    %252 = arith.mulf %242, %251 : vector<32x64xf32>
    %253 = vector.broadcast %235 : vector<1x64xf32> to vector<32x64xf32>
    %254 = arith.mulf %252, %253 : vector<32x64xf32>
    %255 = vector.broadcast %236 : vector<1x64xf32> to vector<32x64xf32>
    %256 = arith.addf %254, %255 : vector<32x64xf32>
    %257 = arith.truncf %256 : vector<32x64xf32> to vector<32x64xbf16>
    %c0_93 = arith.constant 0 : index
    %c0_94 = arith.constant 0 : index
    %258 = vector.load %arg16[%c0_93, %c0_94] : memref<64x192xbf16, #tpu.memory_space<vmem>>, vector<64x192xbf16>
    %cst_95 = arith.constant dense<0.000000e+00> : vector<32x192xf32>
    %259 = tpu.matmul %257, %258, %cst_95 {dimension_numbers = #tpu.dot_dimension_numbers<[1], [0], [0], [1], [0, 0, 1, 1], [], []>} : vector<32x64xbf16>, vector<64x192xbf16>, vector<32x192xf32> -> vector<32x192xf32>
    %cst_96 = arith.constant 0.000000e+00 : f32
    %260 = vector.broadcast %cst_96 : f32 to vector<32x64xf32>
    %261 = vector.extract_strided_slice %259 {offsets = [0, 0], sizes = [32, 16], strides = [1, 1]} : vector<32x192xf32> to vector<32x16xf32>
    %262 = vector.shape_cast %261 : vector<32x16xf32> to vector<2x16x16xf32>
    %263 = arith.truncf %262 : vector<2x16x16xf32> to vector<2x16x16xbf16>
    %264 = vector.extract_strided_slice %259 {offsets = [0, 64], sizes = [32, 16], strides = [1, 1]} : vector<32x192xf32> to vector<32x16xf32>
    %265 = vector.shape_cast %264 : vector<32x16xf32> to vector<2x16x16xf32>
    %266 = arith.truncf %265 : vector<2x16x16xf32> to vector<2x16x16xbf16>
    %267 = vector.extract_strided_slice %259 {offsets = [0, 128], sizes = [32, 16], strides = [1, 1]} : vector<32x192xf32> to vector<32x16xf32>
    %268 = vector.shape_cast %267 : vector<32x16xf32> to vector<2x16x16xf32>
    %269 = arith.truncf %268 : vector<2x16x16xf32> to vector<2x16x16xbf16>
    %cst_97 = arith.constant dense<0.000000e+00> : vector<2x16x16xf32>
    %270 = tpu.matmul %263, %266, %cst_97 {dimension_numbers = #tpu.dot_dimension_numbers<[2], [2], [1], [1], [0, 0, 0, 1, 1, 1], [0], [0]>} : vector<2x16x16xbf16>, vector<2x16x16xbf16>, vector<2x16x16xf32> -> vector<2x16x16xf32>
    %c0_98 = arith.constant 0 : index
    %c0_99 = arith.constant 0 : index
    %c0_100 = arith.constant 0 : index
    %271 = vector.load %arg25[%c0_98, %c0_99, %c0_100] : memref<4x16x16xf32, #tpu.memory_space<vmem>>, vector<1x16x16xf32>
    %272 = vector.shape_cast %271 : vector<1x16x16xf32> to vector<16x16xf32>
    %273 = vector.shape_cast %272 : vector<16x16xf32> to vector<1x16x16xf32>
    %274 = vector.broadcast %273 : vector<1x16x16xf32> to vector<2x16x16xf32>
    %275 = arith.addf %270, %274 : vector<2x16x16xf32>
    %cst_101 = arith.constant dense<0xFF800000> : vector<2x16xf32>
    %276 = vector.multi_reduction <maximumf>, %275, %cst_101 [2] : vector<2x16x16xf32> to vector<2x16xf32>
    %277 = vector.shape_cast %276 : vector<2x16xf32> to vector<2x16x1xf32>
    %278 = vector.broadcast %277 : vector<2x16x1xf32> to vector<2x16x16xf32>
    %279 = arith.subf %275, %278 : vector<2x16x16xf32>
    %280 = math.exp %279 : vector<2x16x16xf32>
    %cst_102 = arith.constant dense<0.000000e+00> : vector<2x16xf32>
    %281 = vector.multi_reduction <add>, %280, %cst_102 [2] : vector<2x16x16xf32> to vector<2x16xf32>
    %282 = vector.shape_cast %281 : vector<2x16xf32> to vector<2x16x1xf32>
    %283 = tpu.reciprocal %282 {approx = true} : vector<2x16x1xf32> -> vector<2x16x1xf32>
    %284 = vector.broadcast %283 : vector<2x16x1xf32> to vector<2x16x16xf32>
    %285 = arith.mulf %280, %284 : vector<2x16x16xf32>
    %286 = arith.truncf %285 : vector<2x16x16xf32> to vector<2x16x16xbf16>
    %cst_103 = arith.constant dense<0.000000e+00> : vector<2x16x16xf32>
    %287 = tpu.matmul %286, %269, %cst_103 {dimension_numbers = #tpu.dot_dimension_numbers<[2], [1], [1], [2], [0, 0, 0, 1, 1, 2], [0], [0]>} : vector<2x16x16xbf16>, vector<2x16x16xbf16>, vector<2x16x16xf32> -> vector<2x16x16xf32>
    %288 = vector.shape_cast %287 : vector<2x16x16xf32> to vector<32x16xf32>
    %289 = arith.truncf %288 : vector<32x16xf32> to vector<32x16xbf16>
    %c0_104 = arith.constant 0 : index
    %c0_105 = arith.constant 0 : index
    %290 = vector.load %arg17[%c0_104, %c0_105] : memref<64x64xbf16, #tpu.memory_space<vmem>>, vector<16x64xbf16>
    %cst_106 = arith.constant dense<0.000000e+00> : vector<32x64xf32>
    %291 = tpu.matmul %289, %290, %cst_106 {dimension_numbers = #tpu.dot_dimension_numbers<[1], [0], [0], [1], [0, 0, 1, 1], [], []>} : vector<32x16xbf16>, vector<16x64xbf16>, vector<32x64xf32> -> vector<32x64xf32>
    %292 = arith.addf %260, %291 : vector<32x64xf32>
    %293 = vector.extract_strided_slice %259 {offsets = [0, 16], sizes = [32, 16], strides = [1, 1]} : vector<32x192xf32> to vector<32x16xf32>
    %294 = vector.shape_cast %293 : vector<32x16xf32> to vector<2x16x16xf32>
    %295 = arith.truncf %294 : vector<2x16x16xf32> to vector<2x16x16xbf16>
    %296 = vector.extract_strided_slice %259 {offsets = [0, 80], sizes = [32, 16], strides = [1, 1]} : vector<32x192xf32> to vector<32x16xf32>
    %297 = vector.shape_cast %296 : vector<32x16xf32> to vector<2x16x16xf32>
    %298 = arith.truncf %297 : vector<2x16x16xf32> to vector<2x16x16xbf16>
    %299 = vector.extract_strided_slice %259 {offsets = [0, 144], sizes = [32, 16], strides = [1, 1]} : vector<32x192xf32> to vector<32x16xf32>
    %300 = vector.shape_cast %299 : vector<32x16xf32> to vector<2x16x16xf32>
    %301 = arith.truncf %300 : vector<2x16x16xf32> to vector<2x16x16xbf16>
    %cst_107 = arith.constant dense<0.000000e+00> : vector<2x16x16xf32>
    %302 = tpu.matmul %295, %298, %cst_107 {dimension_numbers = #tpu.dot_dimension_numbers<[2], [2], [1], [1], [0, 0, 0, 1, 1, 1], [0], [0]>} : vector<2x16x16xbf16>, vector<2x16x16xbf16>, vector<2x16x16xf32> -> vector<2x16x16xf32>
    %c1_108 = arith.constant 1 : index
    %c0_109 = arith.constant 0 : index
    %c0_110 = arith.constant 0 : index
    %303 = vector.load %arg25[%c1_108, %c0_109, %c0_110] : memref<4x16x16xf32, #tpu.memory_space<vmem>>, vector<1x16x16xf32>
    %304 = vector.shape_cast %303 : vector<1x16x16xf32> to vector<16x16xf32>
    %305 = vector.shape_cast %304 : vector<16x16xf32> to vector<1x16x16xf32>
    %306 = vector.broadcast %305 : vector<1x16x16xf32> to vector<2x16x16xf32>
    %307 = arith.addf %302, %306 : vector<2x16x16xf32>
    %cst_111 = arith.constant dense<0xFF800000> : vector<2x16xf32>
    %308 = vector.multi_reduction <maximumf>, %307, %cst_111 [2] : vector<2x16x16xf32> to vector<2x16xf32>
    %309 = vector.shape_cast %308 : vector<2x16xf32> to vector<2x16x1xf32>
    %310 = vector.broadcast %309 : vector<2x16x1xf32> to vector<2x16x16xf32>
    %311 = arith.subf %307, %310 : vector<2x16x16xf32>
    %312 = math.exp %311 : vector<2x16x16xf32>
    %cst_112 = arith.constant dense<0.000000e+00> : vector<2x16xf32>
    %313 = vector.multi_reduction <add>, %312, %cst_112 [2] : vector<2x16x16xf32> to vector<2x16xf32>
    %314 = vector.shape_cast %313 : vector<2x16xf32> to vector<2x16x1xf32>
    %315 = tpu.reciprocal %314 {approx = true} : vector<2x16x1xf32> -> vector<2x16x1xf32>
    %316 = vector.broadcast %315 : vector<2x16x1xf32> to vector<2x16x16xf32>
    %317 = arith.mulf %312, %316 : vector<2x16x16xf32>
    %318 = arith.truncf %317 : vector<2x16x16xf32> to vector<2x16x16xbf16>
    %cst_113 = arith.constant dense<0.000000e+00> : vector<2x16x16xf32>
    %319 = tpu.matmul %318, %301, %cst_113 {dimension_numbers = #tpu.dot_dimension_numbers<[2], [1], [1], [2], [0, 0, 0, 1, 1, 2], [0], [0]>} : vector<2x16x16xbf16>, vector<2x16x16xbf16>, vector<2x16x16xf32> -> vector<2x16x16xf32>
    %320 = vector.shape_cast %319 : vector<2x16x16xf32> to vector<32x16xf32>
    %321 = arith.truncf %320 : vector<32x16xf32> to vector<32x16xbf16>
    %c16_114 = arith.constant 16 : index
    %c0_115 = arith.constant 0 : index
    %322 = vector.load %arg17[%c16_114, %c0_115] : memref<64x64xbf16, #tpu.memory_space<vmem>>, vector<16x64xbf16>
    %cst_116 = arith.constant dense<0.000000e+00> : vector<32x64xf32>
    %323 = tpu.matmul %321, %322, %cst_116 {dimension_numbers = #tpu.dot_dimension_numbers<[1], [0], [0], [1], [0, 0, 1, 1], [], []>} : vector<32x16xbf16>, vector<16x64xbf16>, vector<32x64xf32> -> vector<32x64xf32>
    %324 = arith.addf %292, %323 : vector<32x64xf32>
    %325 = vector.extract_strided_slice %259 {offsets = [0, 32], sizes = [32, 16], strides = [1, 1]} : vector<32x192xf32> to vector<32x16xf32>
    %326 = vector.shape_cast %325 : vector<32x16xf32> to vector<2x16x16xf32>
    %327 = arith.truncf %326 : vector<2x16x16xf32> to vector<2x16x16xbf16>
    %328 = vector.extract_strided_slice %259 {offsets = [0, 96], sizes = [32, 16], strides = [1, 1]} : vector<32x192xf32> to vector<32x16xf32>
    %329 = vector.shape_cast %328 : vector<32x16xf32> to vector<2x16x16xf32>
    %330 = arith.truncf %329 : vector<2x16x16xf32> to vector<2x16x16xbf16>
    %331 = vector.extract_strided_slice %259 {offsets = [0, 160], sizes = [32, 16], strides = [1, 1]} : vector<32x192xf32> to vector<32x16xf32>
    %332 = vector.shape_cast %331 : vector<32x16xf32> to vector<2x16x16xf32>
    %333 = arith.truncf %332 : vector<2x16x16xf32> to vector<2x16x16xbf16>
    %cst_117 = arith.constant dense<0.000000e+00> : vector<2x16x16xf32>
    %334 = tpu.matmul %327, %330, %cst_117 {dimension_numbers = #tpu.dot_dimension_numbers<[2], [2], [1], [1], [0, 0, 0, 1, 1, 1], [0], [0]>} : vector<2x16x16xbf16>, vector<2x16x16xbf16>, vector<2x16x16xf32> -> vector<2x16x16xf32>
    %c2_118 = arith.constant 2 : index
    %c0_119 = arith.constant 0 : index
    %c0_120 = arith.constant 0 : index
    %335 = vector.load %arg25[%c2_118, %c0_119, %c0_120] : memref<4x16x16xf32, #tpu.memory_space<vmem>>, vector<1x16x16xf32>
    %336 = vector.shape_cast %335 : vector<1x16x16xf32> to vector<16x16xf32>
    %337 = vector.shape_cast %336 : vector<16x16xf32> to vector<1x16x16xf32>
    %338 = vector.broadcast %337 : vector<1x16x16xf32> to vector<2x16x16xf32>
    %339 = arith.addf %334, %338 : vector<2x16x16xf32>
    %cst_121 = arith.constant dense<0xFF800000> : vector<2x16xf32>
    %340 = vector.multi_reduction <maximumf>, %339, %cst_121 [2] : vector<2x16x16xf32> to vector<2x16xf32>
    %341 = vector.shape_cast %340 : vector<2x16xf32> to vector<2x16x1xf32>
    %342 = vector.broadcast %341 : vector<2x16x1xf32> to vector<2x16x16xf32>
    %343 = arith.subf %339, %342 : vector<2x16x16xf32>
    %344 = math.exp %343 : vector<2x16x16xf32>
    %cst_122 = arith.constant dense<0.000000e+00> : vector<2x16xf32>
    %345 = vector.multi_reduction <add>, %344, %cst_122 [2] : vector<2x16x16xf32> to vector<2x16xf32>
    %346 = vector.shape_cast %345 : vector<2x16xf32> to vector<2x16x1xf32>
    %347 = tpu.reciprocal %346 {approx = true} : vector<2x16x1xf32> -> vector<2x16x1xf32>
    %348 = vector.broadcast %347 : vector<2x16x1xf32> to vector<2x16x16xf32>
    %349 = arith.mulf %344, %348 : vector<2x16x16xf32>
    %350 = arith.truncf %349 : vector<2x16x16xf32> to vector<2x16x16xbf16>
    %cst_123 = arith.constant dense<0.000000e+00> : vector<2x16x16xf32>
    %351 = tpu.matmul %350, %333, %cst_123 {dimension_numbers = #tpu.dot_dimension_numbers<[2], [1], [1], [2], [0, 0, 0, 1, 1, 2], [0], [0]>} : vector<2x16x16xbf16>, vector<2x16x16xbf16>, vector<2x16x16xf32> -> vector<2x16x16xf32>
    %352 = vector.shape_cast %351 : vector<2x16x16xf32> to vector<32x16xf32>
    %353 = arith.truncf %352 : vector<32x16xf32> to vector<32x16xbf16>
    %c32_124 = arith.constant 32 : index
    %c0_125 = arith.constant 0 : index
    %354 = vector.load %arg17[%c32_124, %c0_125] : memref<64x64xbf16, #tpu.memory_space<vmem>>, vector<16x64xbf16>
    %cst_126 = arith.constant dense<0.000000e+00> : vector<32x64xf32>
    %355 = tpu.matmul %353, %354, %cst_126 {dimension_numbers = #tpu.dot_dimension_numbers<[1], [0], [0], [1], [0, 0, 1, 1], [], []>} : vector<32x16xbf16>, vector<16x64xbf16>, vector<32x64xf32> -> vector<32x64xf32>
    %356 = arith.addf %324, %355 : vector<32x64xf32>
    %357 = vector.extract_strided_slice %259 {offsets = [0, 48], sizes = [32, 16], strides = [1, 1]} : vector<32x192xf32> to vector<32x16xf32>
    %358 = vector.shape_cast %357 : vector<32x16xf32> to vector<2x16x16xf32>
    %359 = arith.truncf %358 : vector<2x16x16xf32> to vector<2x16x16xbf16>
    %360 = vector.extract_strided_slice %259 {offsets = [0, 112], sizes = [32, 16], strides = [1, 1]} : vector<32x192xf32> to vector<32x16xf32>
    %361 = vector.shape_cast %360 : vector<32x16xf32> to vector<2x16x16xf32>
    %362 = arith.truncf %361 : vector<2x16x16xf32> to vector<2x16x16xbf16>
    %363 = vector.extract_strided_slice %259 {offsets = [0, 176], sizes = [32, 16], strides = [1, 1]} : vector<32x192xf32> to vector<32x16xf32>
    %364 = vector.shape_cast %363 : vector<32x16xf32> to vector<2x16x16xf32>
    %365 = arith.truncf %364 : vector<2x16x16xf32> to vector<2x16x16xbf16>
    %cst_127 = arith.constant dense<0.000000e+00> : vector<2x16x16xf32>
    %366 = tpu.matmul %359, %362, %cst_127 {dimension_numbers = #tpu.dot_dimension_numbers<[2], [2], [1], [1], [0, 0, 0, 1, 1, 1], [0], [0]>} : vector<2x16x16xbf16>, vector<2x16x16xbf16>, vector<2x16x16xf32> -> vector<2x16x16xf32>
    %c3_128 = arith.constant 3 : index
    %c0_129 = arith.constant 0 : index
    %c0_130 = arith.constant 0 : index
    %367 = vector.load %arg25[%c3_128, %c0_129, %c0_130] : memref<4x16x16xf32, #tpu.memory_space<vmem>>, vector<1x16x16xf32>
    %368 = vector.shape_cast %367 : vector<1x16x16xf32> to vector<16x16xf32>
    %369 = vector.shape_cast %368 : vector<16x16xf32> to vector<1x16x16xf32>
    %370 = vector.broadcast %369 : vector<1x16x16xf32> to vector<2x16x16xf32>
    %371 = arith.addf %366, %370 : vector<2x16x16xf32>
    %cst_131 = arith.constant dense<0xFF800000> : vector<2x16xf32>
    %372 = vector.multi_reduction <maximumf>, %371, %cst_131 [2] : vector<2x16x16xf32> to vector<2x16xf32>
    %373 = vector.shape_cast %372 : vector<2x16xf32> to vector<2x16x1xf32>
    %374 = vector.broadcast %373 : vector<2x16x1xf32> to vector<2x16x16xf32>
    %375 = arith.subf %371, %374 : vector<2x16x16xf32>
    %376 = math.exp %375 : vector<2x16x16xf32>
    %cst_132 = arith.constant dense<0.000000e+00> : vector<2x16xf32>
    %377 = vector.multi_reduction <add>, %376, %cst_132 [2] : vector<2x16x16xf32> to vector<2x16xf32>
    %378 = vector.shape_cast %377 : vector<2x16xf32> to vector<2x16x1xf32>
    %379 = tpu.reciprocal %378 {approx = true} : vector<2x16x1xf32> -> vector<2x16x1xf32>
    %380 = vector.broadcast %379 : vector<2x16x1xf32> to vector<2x16x16xf32>
    %381 = arith.mulf %376, %380 : vector<2x16x16xf32>
    %382 = arith.truncf %381 : vector<2x16x16xf32> to vector<2x16x16xbf16>
    %cst_133 = arith.constant dense<0.000000e+00> : vector<2x16x16xf32>
    %383 = tpu.matmul %382, %365, %cst_133 {dimension_numbers = #tpu.dot_dimension_numbers<[2], [1], [1], [2], [0, 0, 0, 1, 1, 2], [0], [0]>} : vector<2x16x16xbf16>, vector<2x16x16xbf16>, vector<2x16x16xf32> -> vector<2x16x16xf32>
    %384 = vector.shape_cast %383 : vector<2x16x16xf32> to vector<32x16xf32>
    %385 = arith.truncf %384 : vector<32x16xf32> to vector<32x16xbf16>
    %c48_134 = arith.constant 48 : index
    %c0_135 = arith.constant 0 : index
    %386 = vector.load %arg17[%c48_134, %c0_135] : memref<64x64xbf16, #tpu.memory_space<vmem>>, vector<16x64xbf16>
    %cst_136 = arith.constant dense<0.000000e+00> : vector<32x64xf32>
    %387 = tpu.matmul %385, %386, %cst_136 {dimension_numbers = #tpu.dot_dimension_numbers<[1], [0], [0], [1], [0, 0, 1, 1], [], []>} : vector<32x16xbf16>, vector<16x64xbf16>, vector<32x64xf32> -> vector<32x64xf32>
    %388 = arith.addf %356, %387 : vector<32x64xf32>
    %389 = arith.addf %234, %388 : vector<32x64xf32>
    %c0_137 = arith.constant 0 : index
    %c0_138 = arith.constant 0 : index
    %390 = vector.load %arg18[%c0_137, %c0_138] : memref<1x64xf32, #tpu.memory_space<vmem>>, vector<1x64xf32>
    %391 = vector.broadcast %390 : vector<1x64xf32> to vector<32x64xf32>
    %392 = arith.addf %389, %391 : vector<32x64xf32>
    %c0_139 = arith.constant 0 : index
    %c0_140 = arith.constant 0 : index
    %393 = vector.load %arg19[%c0_139, %c0_140] : memref<1x64xf32, #tpu.memory_space<vmem>>, vector<1x64xf32>
    %c0_141 = arith.constant 0 : index
    %c0_142 = arith.constant 0 : index
    %394 = vector.load %arg20[%c0_141, %c0_142] : memref<1x64xf32, #tpu.memory_space<vmem>>, vector<1x64xf32>
    %cst_143 = arith.constant dense<0.000000e+00> : vector<32xf32>
    %395 = vector.multi_reduction <add>, %392, %cst_143 [1] : vector<32x64xf32> to vector<32xf32>
    %396 = vector.shape_cast %395 : vector<32xf32> to vector<32x1xf32>
    %cst_144 = arith.constant 6.400000e+01 : f32
    %397 = vector.broadcast %cst_144 : f32 to vector<32x1xf32>
    %398 = arith.divf %396, %397 : vector<32x1xf32>
    %399 = vector.broadcast %398 : vector<32x1xf32> to vector<32x64xf32>
    %400 = arith.subf %392, %399 : vector<32x64xf32>
    %401 = arith.mulf %400, %400 : vector<32x64xf32>
    %cst_145 = arith.constant dense<0.000000e+00> : vector<32xf32>
    %402 = vector.multi_reduction <add>, %401, %cst_145 [1] : vector<32x64xf32> to vector<32xf32>
    %403 = vector.shape_cast %402 : vector<32xf32> to vector<32x1xf32>
    %cst_146 = arith.constant 6.400000e+01 : f32
    %404 = vector.broadcast %cst_146 : f32 to vector<32x1xf32>
    %405 = arith.divf %403, %404 : vector<32x1xf32>
    %cst_147 = arith.constant 9.99999974E-6 : f32
    %406 = vector.broadcast %cst_147 : f32 to vector<32x1xf32>
    %407 = arith.addf %405, %406 : vector<32x1xf32>
    %408 = math.rsqrt %407 : vector<32x1xf32>
    %409 = vector.broadcast %408 : vector<32x1xf32> to vector<32x64xf32>
    %410 = arith.mulf %400, %409 : vector<32x64xf32>
    %411 = vector.broadcast %393 : vector<1x64xf32> to vector<32x64xf32>
    %412 = arith.mulf %410, %411 : vector<32x64xf32>
    %413 = vector.broadcast %394 : vector<1x64xf32> to vector<32x64xf32>
    %414 = arith.addf %412, %413 : vector<32x64xf32>
    %415 = arith.truncf %414 : vector<32x64xf32> to vector<32x64xbf16>
    %c0_148 = arith.constant 0 : index
    %c0_149 = arith.constant 0 : index
    %416 = vector.load %arg21[%c0_148, %c0_149] : memref<64x256xbf16, #tpu.memory_space<vmem>>, vector<64x256xbf16>
    %cst_150 = arith.constant dense<0.000000e+00> : vector<32x256xf32>
    %417 = tpu.matmul %415, %416, %cst_150 {dimension_numbers = #tpu.dot_dimension_numbers<[1], [0], [0], [1], [0, 0, 1, 1], [], []>} : vector<32x64xbf16>, vector<64x256xbf16>, vector<32x256xf32> -> vector<32x256xf32>
    %c0_151 = arith.constant 0 : index
    %c0_152 = arith.constant 0 : index
    %418 = vector.load %arg22[%c0_151, %c0_152] : memref<1x256xf32, #tpu.memory_space<vmem>>, vector<1x256xf32>
    %419 = vector.broadcast %418 : vector<1x256xf32> to vector<32x256xf32>
    %420 = arith.addf %417, %419 : vector<32x256xf32>
    %cst_153 = arith.constant 5.000000e-01 : f32
    %421 = vector.broadcast %cst_153 : f32 to vector<32x256xf32>
    %422 = arith.mulf %421, %420 : vector<32x256xf32>
    %cst_154 = arith.constant 0.707106769 : f32
    %423 = vector.broadcast %cst_154 : f32 to vector<32x256xf32>
    %424 = arith.mulf %420, %423 : vector<32x256xf32>
    %cst_155 = arith.constant 0.000000e+00 : f32
    %425 = vector.broadcast %cst_155 : f32 to vector<32x256xf32>
    %426 = arith.cmpf oge, %424, %425 : vector<32x256xf32>
    %cst_156 = arith.constant 1.000000e+00 : f32
    %cst_157 = arith.constant -1.000000e+00 : f32
    %427 = vector.broadcast %cst_156 : f32 to vector<32x256xf32>
    %428 = vector.broadcast %cst_157 : f32 to vector<32x256xf32>
    %429 = arith.select %426, %427, %428 : vector<32x256xi1>, vector<32x256xf32>
    %430 = math.absf %424 : vector<32x256xf32>
    %cst_158 = arith.constant 0.327591091 : f32
    %431 = vector.broadcast %cst_158 : f32 to vector<32x256xf32>
    %432 = arith.mulf %431, %430 : vector<32x256xf32>
    %cst_159 = arith.constant 1.000000e+00 : f32
    %433 = vector.broadcast %cst_159 : f32 to vector<32x256xf32>
    %434 = arith.addf %433, %432 : vector<32x256xf32>
    %cst_160 = arith.constant 1.000000e+00 : f32
    %435 = vector.broadcast %cst_160 : f32 to vector<32x256xf32>
    %436 = arith.divf %435, %434 : vector<32x256xf32>
    %cst_161 = arith.constant 1.06140542 : f32
    %437 = vector.broadcast %cst_161 : f32 to vector<32x256xf32>
    %438 = arith.mulf %437, %436 : vector<32x256xf32>
    %cst_162 = arith.constant -1.45315206 : f32
    %439 = vector.broadcast %cst_162 : f32 to vector<32x256xf32>
    %440 = arith.addf %438, %439 : vector<32x256xf32>
    %441 = arith.mulf %440, %436 : vector<32x256xf32>
    %cst_163 = arith.constant 1.42141378 : f32
    %442 = vector.broadcast %cst_163 : f32 to vector<32x256xf32>
    %443 = arith.addf %441, %442 : vector<32x256xf32>
    %444 = arith.mulf %443, %436 : vector<32x256xf32>
    %cst_164 = arith.constant -0.284496725 : f32
    %445 = vector.broadcast %cst_164 : f32 to vector<32x256xf32>
    %446 = arith.addf %444, %445 : vector<32x256xf32>
    %447 = arith.mulf %446, %436 : vector<32x256xf32>
    %cst_165 = arith.constant 0.254829586 : f32
    %448 = vector.broadcast %cst_165 : f32 to vector<32x256xf32>
    %449 = arith.addf %447, %448 : vector<32x256xf32>
    %450 = arith.mulf %449, %436 : vector<32x256xf32>
    %cst_166 = arith.constant 0.000000e+00 : f32
    %451 = vector.broadcast %cst_166 : f32 to vector<32x256xf32>
    %452 = arith.subf %451, %430 : vector<32x256xf32>
    %453 = arith.mulf %452, %430 : vector<32x256xf32>
    %454 = math.exp %453 : vector<32x256xf32>
    %455 = arith.mulf %450, %454 : vector<32x256xf32>
    %cst_167 = arith.constant 1.000000e+00 : f32
    %456 = vector.broadcast %cst_167 : f32 to vector<32x256xf32>
    %457 = arith.subf %456, %455 : vector<32x256xf32>
    %458 = arith.mulf %429, %457 : vector<32x256xf32>
    %cst_168 = arith.constant 1.000000e+00 : f32
    %459 = vector.broadcast %cst_168 : f32 to vector<32x256xf32>
    %460 = arith.addf %459, %458 : vector<32x256xf32>
    %461 = arith.mulf %422, %460 : vector<32x256xf32>
    %462 = arith.truncf %461 : vector<32x256xf32> to vector<32x256xbf16>
    %c0_169 = arith.constant 0 : index
    %c0_170 = arith.constant 0 : index
    %463 = vector.load %arg23[%c0_169, %c0_170] : memref<256x64xbf16, #tpu.memory_space<vmem>>, vector<256x64xbf16>
    %cst_171 = arith.constant dense<0.000000e+00> : vector<32x64xf32>
    %464 = tpu.matmul %462, %463, %cst_171 {dimension_numbers = #tpu.dot_dimension_numbers<[1], [0], [0], [1], [0, 0, 1, 1], [], []>} : vector<32x256xbf16>, vector<256x64xbf16>, vector<32x64xf32> -> vector<32x64xf32>
    %c0_172 = arith.constant 0 : index
    %c0_173 = arith.constant 0 : index
    %465 = vector.load %arg24[%c0_172, %c0_173] : memref<1x64xf32, #tpu.memory_space<vmem>>, vector<1x64xf32>
    %466 = vector.broadcast %465 : vector<1x64xf32> to vector<32x64xf32>
    %467 = arith.addf %464, %466 : vector<32x64xf32>
    %468 = arith.addf %392, %467 : vector<32x64xf32>
    %c0_174 = arith.constant 0 : index
    %c0_175 = arith.constant 0 : index
    %469 = vector.load %arg26[%c0_174, %c0_175] : memref<32x64xf32, #tpu.memory_space<vmem>>, vector<32x64xf32>
    tpu.vector_store %arg26[%c0_174, %c0_175], %468 {strides = array<i32>} : memref<32x64xf32, #tpu.memory_space<vmem>>, vector<32x64xf32>,
    return
  }
  func.func @transform_0(%arg0: i32) -> (i32, i32) {
    %c0_i32 = arith.constant 0 : i32
    %c0_i32_0 = arith.constant 0 : i32
    return %arg0, %c0_i32 : i32, i32
  }
  func.func @transform_1(%arg0: i32) -> (i32, i32) {
    %c0_i32 = arith.constant 0 : i32
    %c0_i32_0 = arith.constant 0 : i32
    %c0_i32_1 = arith.constant 0 : i32
    return %c0_i32, %c0_i32_0 : i32, i32
  }
  func.func @transform_2(%arg0: i32) -> (i32, i32) {
    %c0_i32 = arith.constant 0 : i32
    %c0_i32_0 = arith.constant 0 : i32
    %c0_i32_1 = arith.constant 0 : i32
    return %c0_i32, %c0_i32_0 : i32, i32
  }
  func.func @transform_3(%arg0: i32) -> (i32, i32) {
    %c0_i32 = arith.constant 0 : i32
    %c0_i32_0 = arith.constant 0 : i32
    %c0_i32_1 = arith.constant 0 : i32
    return %c0_i32, %c0_i32_0 : i32, i32
  }
  func.func @transform_4(%arg0: i32) -> (i32, i32) {
    %c0_i32 = arith.constant 0 : i32
    %c0_i32_0 = arith.constant 0 : i32
    %c0_i32_1 = arith.constant 0 : i32
    return %c0_i32, %c0_i32_0 : i32, i32
  }
  func.func @transform_5(%arg0: i32) -> (i32, i32) {
    %c0_i32 = arith.constant 0 : i32
    %c0_i32_0 = arith.constant 0 : i32
    %c0_i32_1 = arith.constant 0 : i32
    return %c0_i32, %c0_i32_0 : i32, i32
  }
  func.func @transform_6(%arg0: i32) -> (i32, i32) {
    %c0_i32 = arith.constant 0 : i32
    %c0_i32_0 = arith.constant 0 : i32
    %c0_i32_1 = arith.constant 0 : i32
    return %c0_i32, %c0_i32_0 : i32, i32
  }
  func.func @transform_7(%arg0: i32) -> (i32, i32) {
    %c0_i32 = arith.constant 0 : i32
    %c0_i32_0 = arith.constant 0 : i32
    %c0_i32_1 = arith.constant 0 : i32
    return %c0_i32, %c0_i32_0 : i32, i32
  }
  func.func @transform_8(%arg0: i32) -> (i32, i32) {
    %c0_i32 = arith.constant 0 : i32
    %c0_i32_0 = arith.constant 0 : i32
    %c0_i32_1 = arith.constant 0 : i32
    return %c0_i32, %c0_i32_0 : i32, i32
  }
  func.func @transform_9(%arg0: i32) -> (i32, i32) {
    %c0_i32 = arith.constant 0 : i32
    %c0_i32_0 = arith.constant 0 : i32
    %c0_i32_1 = arith.constant 0 : i32
    return %c0_i32, %c0_i32_0 : i32, i32
  }
  func.func @transform_10(%arg0: i32) -> (i32, i32) {
    %c0_i32 = arith.constant 0 : i32
    %c0_i32_0 = arith.constant 0 : i32
    %c0_i32_1 = arith.constant 0 : i32
    return %c0_i32, %c0_i32_0 : i32, i32
  }
  func.func @transform_11(%arg0: i32) -> (i32, i32) {
    %c0_i32 = arith.constant 0 : i32
    %c0_i32_0 = arith.constant 0 : i32
    %c0_i32_1 = arith.constant 0 : i32
    return %c0_i32, %c0_i32_0 : i32, i32
  }
  func.func @transform_12(%arg0: i32) -> (i32, i32, i32) {
    %c0_i32 = arith.constant 0 : i32
    %c0_i32_0 = arith.constant 0 : i32
    %c0_i32_1 = arith.constant 0 : i32
    %c0_i32_2 = arith.constant 0 : i32
    return %c0_i32, %c0_i32_0, %c0_i32_1 : i32, i32, i32
  }
  func.func @transform_13(%arg0: i32) -> (i32, i32) {
    %c0_i32 = arith.constant 0 : i32
    %c0_i32_0 = arith.constant 0 : i32
    %c0_i32_1 = arith.constant 0 : i32
    return %c0_i32, %c0_i32_0 : i32, i32
  }
  func.func @transform_14(%arg0: i32) -> (i32, i32) {
    %c0_i32 = arith.constant 0 : i32
    %c0_i32_0 = arith.constant 0 : i32
    %c0_i32_1 = arith.constant 0 : i32
    return %c0_i32, %c0_i32_0 : i32, i32
  }
  func.func @transform_15(%arg0: i32) -> (i32, i32) {
    %c0_i32 = arith.constant 0 : i32
    %c0_i32_0 = arith.constant 0 : i32
    %c0_i32_1 = arith.constant 0 : i32
    return %c0_i32, %c0_i32_0 : i32, i32
  }
  func.func @transform_16(%arg0: i32) -> (i32, i32) {
    %c0_i32 = arith.constant 0 : i32
    %c0_i32_0 = arith.constant 0 : i32
    %c0_i32_1 = arith.constant 0 : i32
    return %c0_i32, %c0_i32_0 : i32, i32
  }
  func.func @transform_17(%arg0: i32) -> (i32, i32) {
    %c0_i32 = arith.constant 0 : i32
    %c0_i32_0 = arith.constant 0 : i32
    %c0_i32_1 = arith.constant 0 : i32
    return %c0_i32, %c0_i32_0 : i32, i32
  }
  func.func @transform_18(%arg0: i32) -> (i32, i32) {
    %c0_i32 = arith.constant 0 : i32
    %c0_i32_0 = arith.constant 0 : i32
    %c0_i32_1 = arith.constant 0 : i32
    return %c0_i32, %c0_i32_0 : i32, i32
  }
  func.func @transform_19(%arg0: i32) -> (i32, i32) {
    %c0_i32 = arith.constant 0 : i32
    %c0_i32_0 = arith.constant 0 : i32
    %c0_i32_1 = arith.constant 0 : i32
    return %c0_i32, %c0_i32_0 : i32, i32
  }
  func.func @transform_20(%arg0: i32) -> (i32, i32) {
    %c0_i32 = arith.constant 0 : i32
    %c0_i32_0 = arith.constant 0 : i32
    %c0_i32_1 = arith.constant 0 : i32
    return %c0_i32, %c0_i32_0 : i32, i32
  }
  func.func @transform_21(%arg0: i32) -> (i32, i32) {
    %c0_i32 = arith.constant 0 : i32
    %c0_i32_0 = arith.constant 0 : i32
    %c0_i32_1 = arith.constant 0 : i32
    return %c0_i32, %c0_i32_0 : i32, i32
  }
  func.func @transform_22(%arg0: i32) -> (i32, i32) {
    %c0_i32 = arith.constant 0 : i32
    %c0_i32_0 = arith.constant 0 : i32
    %c0_i32_1 = arith.constant 0 : i32
    return %c0_i32, %c0_i32_0 : i32, i32
  }
  func.func @transform_23(%arg0: i32) -> (i32, i32) {
    %c0_i32 = arith.constant 0 : i32
    %c0_i32_0 = arith.constant 0 : i32
    %c0_i32_1 = arith.constant 0 : i32
    return %c0_i32, %c0_i32_0 : i32, i32
  }
  func.func @transform_24(%arg0: i32) -> (i32, i32, i32) {
    %c0_i32 = arith.constant 0 : i32
    %c0_i32_0 = arith.constant 0 : i32
    %c0_i32_1 = arith.constant 0 : i32
    %c0_i32_2 = arith.constant 0 : i32
    return %c0_i32, %c0_i32_0, %c0_i32_1 : i32, i32, i32
  }
  func.func @transform_25(%arg0: i32) -> (i32, i32) {
    %c0_i32 = arith.constant 0 : i32
    %c0_i32_0 = arith.constant 0 : i32
    return %arg0, %c0_i32 : i32, i32
  }
}

</mosaic_0001>

<llo_original>
// kernel: tpu_custom_call.1
$region0: #{tpu_custom_call.1}
  #allocation0 [shape = 'u32[]', space=smem, size = 0x4, offset = 0x4, fixed_abs, tag = 'smem constant byte address 0x4 - core index']
  #allocation1 [shape = 'u32[144,128]{1,0:T(1,128)}', space=vmem, size = 0x12000, scoped, tag = 'internal scratch']
  %s0 = inlined_call_operand.hbm [shape: f32[32,64], index: 0, kind: input, shape index: {}]
  %s1 = inlined_call_operand.hbm [shape: f32[1,64], index: 1, kind: input, shape index: {}]
  %s2 = inlined_call_operand.hbm [shape: f32[1,64], index: 2, kind: input, shape index: {}]
  %s3 = inlined_call_operand.vmem [shape: bf16[64,192], index: 3, kind: input, shape index: {}]
  %s4 = inlined_call_operand.hbm [shape: bf16[64,64], index: 4, kind: input, shape index: {}]
  %s5 = inlined_call_operand.hbm [shape: f32[1,64], index: 5, kind: input, shape index: {}]
  %s6 = inlined_call_operand.hbm [shape: f32[1,64], index: 6, kind: input, shape index: {}]
  %s7 = inlined_call_operand.hbm [shape: f32[1,64], index: 7, kind: input, shape index: {}]
  %s8 = inlined_call_operand.vmem [shape: bf16[64,256], index: 8, kind: input, shape index: {}]
  %s9 = inlined_call_operand.vmem [shape: f32[1,256], index: 9, kind: input, shape index: {}]
  %s10 = inlined_call_operand.vmem [shape: bf16[256,64], index: 10, kind: input, shape index: {}]
  %s11 = inlined_call_operand.hbm [shape: f32[1,64], index: 11, kind: input, shape index: {}]
  %s12 = inlined_call_operand.vmem [shape: f32[4,16,16], index: 12, kind: input, shape index: {}]
  %s13 = inlined_call_operand.hbm [shape: f32[1,64], index: 13, kind: input, shape index: {}]
  %s14 = inlined_call_operand.hbm [shape: f32[1,64], index: 14, kind: input, shape index: {}]
  %s15 = inlined_call_operand.vmem [shape: bf16[64,192], index: 15, kind: input, shape index: {}]
  %s16 = inlined_call_operand.hbm [shape: bf16[64,64], index: 16, kind: input, shape index: {}]
  %s17 = inlined_call_operand.hbm [shape: f32[1,64], index: 17, kind: input, shape index: {}]
  %s18 = inlined_call_operand.hbm [shape: f32[1,64], index: 18, kind: input, shape index: {}]
  %s19 = inlined_call_operand.hbm [shape: f32[1,64], index: 19, kind: input, shape index: {}]
  %s20 = inlined_call_operand.vmem [shape: bf16[64,256], index: 20, kind: input, shape index: {}]
  %s21 = inlined_call_operand.vmem [shape: f32[1,256], index: 21, kind: input, shape index: {}]
  %s22 = inlined_call_operand.vmem [shape: bf16[256,64], index: 22, kind: input, shape index: {}]
  %s23 = inlined_call_operand.vmem [shape: f32[1,64], index: 23, kind: input, shape index: {}]
  %s24 = inlined_call_operand.vmem [shape: f32[4,16,16], index: 24, kind: input, shape index: {}]
  %s25 = inlined_call_operand.hbm [shape: f32[32,64], index: 25, kind: output, shape index: {}]
  %s26 = sld [smem:[#allocation0]]
  $region166: #{tpu_custom_call.1} parent=0
    _
  %s28 = ssub.s32 1, %s26
  %s29 = scalar_select 0, %s28, %s26
  $region1: #{tpu_custom_call.1} parent=0
    #allocation2 [shape = 'u8[16384]{0}', space=vmem, size = 0x4000, scoped, tag = 'input window, operand 0, single buffered']
    #allocation3 [shape = 's32[1]{0}', space=sflag, size = 0x4, scoped, tag = 'scoped memory for tpu_custom_call.1']
    #allocation4 [shape = 's32[1]{0}', space=sflag, size = 0x4, scoped, tag = 'scoped memory for tpu_custom_call.1']
    #allocation5 [shape = 'u8[512]{0}', space=vmem, size = 0x400, scoped, tag = 'input window, operand 1, single buffered']
    #allocation6 [shape = 's32[1]{0}', space=sflag, size = 0x4, scoped, tag = 'scoped memory for tpu_custom_call.1']
    #allocation7 [shape = 'u8[512]{0}', space=vmem, size = 0x400, scoped, tag = 'input window, operand 2, single buffered']
    #allocation8 [shape = 'u8[16384]{0}', space=vmem, size = 0x4000, scoped, tag = 'input window, operand 4, single buffered']
    #allocation9 [shape = 's32[1]{0}', space=sflag, size = 0x4, scoped, tag = 'scoped memory for tpu_custom_call.1']
    #allocation10 [shape = 'u8[512]{0}', space=vmem, size = 0x400, scoped, tag = 'input window, operand 5, single buffered']
    #allocation11 [shape = 'u8[512]{0}', space=vmem, size = 0x400, scoped, tag = 'input window, operand 6, single buffered']
    #allocation12 [shape = 's32[1]{0}', space=sflag, size = 0x4, scoped, tag = 'scoped memory for tpu_custom_call.1']
    #allocation13 [shape = 'u8[512]{0}', space=vmem, size = 0x400, scoped, tag = 'input window, operand 7, single buffered']
    #allocation14 [shape = 'u8[512]{0}', space=vmem, size = 0x400, scoped, tag = 'input window, operand 11, single buffered']
    #allocation15 [shape = 's32[1]{0}', space=sflag, size = 0x4, scoped, tag = 'scoped memory for tpu_custom_call.1']
    #allocation16 [shape = 'u8[512]{0}', space=vmem, size = 0x400, scoped, tag = 'input window, operand 13, single buffered']
    #allocation17 [shape = 'u8[512]{0}', space=vmem, size = 0x400, scoped, tag = 'input window, operand 14, single buffered']
    #allocation18 [shape = 's32[1]{0}', space=sflag, size = 0x4, scoped, tag = 'scoped memory for tpu_custom_call.1']
    #allocation19 [shape = 'u8[16384]{0}', space=vmem, size = 0x4000, scoped, tag = 'input window, operand 16, single buffered']
    #allocation20 [shape = 'u8[512]{0}', space=vmem, size = 0x400, scoped, tag = 'input window, operand 17, single buffered']
    #allocation21 [shape = 's32[1]{0}', space=sflag, size = 0x4, scoped, tag = 'scoped memory for tpu_custom_call.1']
    #allocation22 [shape = 'u8[512]{0}', space=vmem, size = 0x400, scoped, tag = 'input window, operand 18, single buffered']
    #allocation23 [shape = 'u8[512]{0}', space=vmem, size = 0x400, scoped, tag = 'input window, operand 19, single buffered']
    #allocation24 [shape = 's32[1]{0}', space=sflag, size = 0x4, scoped, tag = 'scoped memory for tpu_custom_call.1']
    #allocation25 [shape = 'u8[16384]{0}', space=vmem, size = 0x4000, scoped, tag = 'output window, operand 0, single buffered']
    %30 = vsyncpa [#allocation3], 0
    %31 = vsyncpa [#allocation6], 0
    %32 = vsyncpa [#allocation9], 0
    %33 = vsyncpa [#allocation12], 0
    %34 = vsyncpa [#allocation15], 0
    %35 = vsyncpa [#allocation18], 0
    %36 = vsyncpa [#allocation21], 0
    %37 = vsyncpa [#allocation24], 0
    %38 = vsyncpa [#allocation4], 0
    // Predicated region
    $region2: #{tpu_custom_call.1} parent=1 // pred_check
      _
    $region3: #{tpu_custom_call.1} parent=1 // pred_check_branch
      %40 = sbr.rel (0) target = $region5
    $region4: #{tpu_custom_call.1} parent=1 // pred_region
      %s42 = ssub.s32 512, 512
      %43 = vsyncadd [#allocation3], %s42
      %s44 = sshll.u32 [#allocation2], 4
      %s45 = int_to_ptr.vmem [resolvable:$true] %s44
      %50 = dma.hbm_to_vmem [thread:$0]  %s0, 512, %s45, [#allocation3], 128, 128, 8
    $region5: #{tpu_custom_call.1} parent=1 // pred_fallthru
      _
    // Predicated region
    $region6: #{tpu_custom_call.1} parent=1 // pred_check
      _
    $region7: #{tpu_custom_call.1} parent=1 // pred_check_branch
      %52 = sbr.rel (0) target = $region9
    $region8: #{tpu_custom_call.1} parent=1 // pred_region
      %s54 = ssub.s32 16, 16
      %55 = vsyncadd [#allocation6], %s54
      %s57 = sshll.u32 [#allocation5], 4
      %s58 = int_to_ptr.vmem [resolvable:$true] %s57
      %60 = dma.hbm_to_vmem [thread:$0]  %s1, 16, %s58, [#allocation6]
    $region9: #{tpu_custom_call.1} parent=1 // pred_fallthru
      _
    // Predicated region
    $region10: #{tpu_custom_call.1} parent=1 // pred_check
      _
    $region11: #{tpu_custom_call.1} parent=1 // pred_check_branch
      %62 = sbr.rel (0) target = $region13
    $region12: #{tpu_custom_call.1} parent=1 // pred_region
      %s64 = ssub.s32 16, 16
      %65 = vsyncadd [#allocation6], %s64
      %s67 = sshll.u32 [#allocation7], 4
      %s68 = int_to_ptr.vmem [resolvable:$true] %s67
      %70 = dma.hbm_to_vmem [thread:$0]  %s2, 16, %s68, [#allocation6]
    $region13: #{tpu_custom_call.1} parent=1 // pred_fallthru
      _
    // Predicated region
    $region14: #{tpu_custom_call.1} parent=1 // pred_check
      _
    $region15: #{tpu_custom_call.1} parent=1 // pred_check_branch
      %72 = sbr.rel (0) target = $region17
    $region16: #{tpu_custom_call.1} parent=1 // pred_region
      _
    $region17: #{tpu_custom_call.1} parent=1 // pred_fallthru
      _
    // Predicated region
    $region18: #{tpu_custom_call.1} parent=1 // pred_check
      _
    $region19: #{tpu_custom_call.1} parent=1 // pred_check_branch
      %74 = sbr.rel (0) target = $region21
    $region20: #{tpu_custom_call.1} parent=1 // pred_region
      %s76 = ssub.s32 512, 512
      %77 = vsyncadd [#allocation9], %s76
      %s78 = sshll.u32 [#allocation8], 4
      %s79 = int_to_ptr.vmem [resolvable:$true] %s78
      %84 = dma.hbm_to_vmem [thread:$0]  %s4, 512, %s79, [#allocation9], 64, 64, 4
    $region21: #{tpu_custom_call.1} parent=1 // pred_fallthru
      _
    // Predicated region
    $region22: #{tpu_custom_call.1} parent=1 // pred_check
      _
    $region23: #{tpu_custom_call.1} parent=1 // pred_check_branch
      %86 = sbr.rel (0) target = $region25
    $region24: #{tpu_custom_call.1} parent=1 // pred_region
      %s88 = ssub.s32 16, 16
      %89 = vsyncadd [#allocation9], %s88
      %s91 = sshll.u32 [#allocation10], 4
      %s92 = int_to_ptr.vmem [resolvable:$true] %s91
      %94 = dma.hbm_to_vmem [thread:$0]  %s5, 16, %s92, [#allocation9]
    $region25: #{tpu_custom_call.1} parent=1 // pred_fallthru
      _
    // Predicated region
    $region26: #{tpu_custom_call.1} parent=1 // pred_check
      _
    $region27: #{tpu_custom_call.1} parent=1 // pred_check_branch
      %96 = sbr.rel (0) target = $region29
    $region28: #{tpu_custom_call.1} parent=1 // pred_region
      %s98 = ssub.s32 16, 16
      %99 = vsyncadd [#allocation12], %s98
      %s101 = sshll.u32 [#allocation11], 4
      %s102 = int_to_ptr.vmem [resolvable:$true] %s101
      %104 = dma.hbm_to_vmem [thread:$0]  %s6, 16, %s102, [#allocation12]
    $region29: #{tpu_custom_call.1} parent=1 // pred_fallthru
      _
    // Predicated region
    $region30: #{tpu_custom_call.1} parent=1 // pred_check
      _
    $region31: #{tpu_custom_call.1} parent=1 // pred_check_branch
      %106 = sbr.rel (0) target = $region33
    $region32: #{tpu_custom_call.1} parent=1 // pred_region
      %s108 = ssub.s32 16, 16
      %109 = vsyncadd [#allocation12], %s108
      %s111 = sshll.u32 [#allocation13], 4
      %s112 = int_to_ptr.vmem [resolvable:$true] %s111
      %114 = dma.hbm_to_vmem [thread:$0]  %s7, 16, %s112, [#allocation12]
    $region33: #{tpu_custom_call.1} parent=1 // pred_fallthru
      _
    // Predicated region
    $region34: #{tpu_custom_call.1} parent=1 // pred_check
      _
    $region35: #{tpu_custom_call.1} parent=1 // pred_check_branch
      %116 = sbr.rel (0) target = $region37
    $region36: #{tpu_custom_call.1} parent=1 // pred_region
      _
    $region37: #{tpu_custom_call.1} parent=1 // pred_fallthru
      _
    // Predicated region
    $region38: #{tpu_custom_call.1} parent=1 // pred_check
      _
    $region39: #{tpu_custom_call.1} parent=1 // pred_check_branch
      %118 = sbr.rel (0) target = $region41
    $region40: #{tpu_custom_call.1} parent=1 // pred_region
      _
    $region41: #{tpu_custom_call.1} parent=1 // pred_fallthru
      _
    // Predicated region
    $region42: #{tpu_custom_call.1} parent=1 // pred_check
      _
    $region43: #{tpu_custom_call.1} parent=1 // pred_check_branch
      %120 = sbr.rel (0) target = $region45
    $region44: #{tpu_custom_call.1} parent=1 // pred_region
      _
    $region45: #{tpu_custom_call.1} parent=1 // pred_fallthru
      _
    // Predicated region
    $region46: #{tpu_custom_call.1} parent=1 // pred_check
      _
    $region47: #{tpu_custom_call.1} parent=1 // pred_check_branch
      %122 = sbr.rel (0) target = $region49
    $region48: #{tpu_custom_call.1} parent=1 // pred_region
      %s124 = ssub.s32 16, 16
      %125 = vsyncadd [#allocation15], %s124
      %s127 = sshll.u32 [#allocation14], 4
      %s128 = int_to_ptr.vmem [resolvable:$true] %s127
      %130 = dma.hbm_to_vmem [thread:$0]  %s11, 16, %s128, [#allocation15]
    $region49: #{tpu_custom_call.1} parent=1 // pred_fallthru
      _
    // Predicated region
    $region50: #{tpu_custom_call.1} parent=1 // pred_check
      _
    $region51: #{tpu_custom_call.1} parent=1 // pred_check_branch
      %132 = sbr.rel (0) target = $region53
    $region52: #{tpu_custom_call.1} parent=1 // pred_region
      _
    $region53: #{tpu_custom_call.1} parent=1 // pred_fallthru
      _
    // Predicated region
    $region54: #{tpu_custom_call.1} parent=1 // pred_check
      _
    $region55: #{tpu_custom_call.1} parent=1 // pred_check_branch
      %134 = sbr.rel (0) target = $region57
    $region56: #{tpu_custom_call.1} parent=1 // pred_region
      %s136 = ssub.s32 16, 16
      %137 = vsyncadd [#allocation15], %s136
      %s139 = sshll.u32 [#allocation16], 4
      %s140 = int_to_ptr.vmem [resolvable:$true] %s139
      %142 = dma.hbm_to_vmem [thread:$0]  %s13, 16, %s140, [#allocation15]
    $region57: #{tpu_custom_call.1} parent=1 // pred_fallthru
      _
    // Predicated region
    $region58: #{tpu_custom_call.1} parent=1 // pred_check
      _
    $region59: #{tpu_custom_call.1} parent=1 // pred_check_branch
      %144 = sbr.rel (0) target = $region61
    $region60: #{tpu_custom_call.1} parent=1 // pred_region
      %s146 = ssub.s32 16, 16
      %147 = vsyncadd [#allocation18], %s146
      %s149 = sshll.u32 [#allocation17], 4
      %s150 = int_to_ptr.vmem [resolvable:$true] %s149
      %152 = dma.hbm_to_vmem [thread:$0]  %s14, 16, %s150, [#allocation18]
    $region61: #{tpu_custom_call.1} parent=1 // pred_fallthru
      _
    // Predicated region
    $region62: #{tpu_custom_call.1} parent=1 // pred_check
      _
    $region63: #{tpu_custom_call.1} parent=1 // pred_check_branch
      %154 = sbr.rel (0) target = $region65
    $region64: #{tpu_custom_call.1} parent=1 // pred_region
      _
    $region65: #{tpu_custom_call.1} parent=1 // pred_fallthru
      _
    // Predicated region
    $region66: #{tpu_custom_call.1} parent=1 // pred_check
      _
    $region67: #{tpu_custom_call.1} parent=1 // pred_check_branch
      %156 = sbr.rel (0) target = $region69
    $region68: #{tpu_custom_call.1} parent=1 // pred_region
      %s158 = ssub.s32 512, 512
      %159 = vsyncadd [#allocation18], %s158
      %s160 = sshll.u32 [#allocation19], 4
      %s161 = int_to_ptr.vmem [resolvable:$true] %s160
      %166 = dma.hbm_to_vmem [thread:$0]  %s16, 512, %s161, [#allocation18], 64, 64, 4
    $region69: #{tpu_custom_call.1} parent=1 // pred_fallthru
      _
    // Predicated region
    $region70: #{tpu_custom_call.1} parent=1 // pred_check
      _
    $region71: #{tpu_custom_call.1} parent=1 // pred_check_branch
      %168 = sbr.rel (0) target = $region73
    $region72: #{tpu_custom_call.1} parent=1 // pred_region
      %s170 = ssub.s32 16, 16
      %171 = vsyncadd [#allocation21], %s170
      %s173 = sshll.u32 [#allocation20], 4
      %s174 = int_to_ptr.vmem [resolvable:$true] %s173
      %176 = dma.hbm_to_vmem [thread:$0]  %s17, 16, %s174, [#allocation21]
    $region73: #{tpu_custom_call.1} parent=1 // pred_fallthru
      _
    // Predicated region
    $region74: #{tpu_custom_call.1} parent=1 // pred_check
      _
    $region75: #{tpu_custom_call.1} parent=1 // pred_check_branch
      %178 = sbr.rel (0) target = $region77
    $region76: #{tpu_custom_call.1} parent=1 // pred_region
      %s180 = ssub.s32 16, 16
      %181 = vsyncadd [#allocation21], %s180
      %s183 = sshll.u32 [#allocation22], 4
      %s184 = int_to_ptr.vmem [resolvable:$true] %s183
      %186 = dma.hbm_to_vmem [thread:$0]  %s18, 16, %s184, [#allocation21]
    $region77: #{tpu_custom_call.1} parent=1 // pred_fallthru
      _
    // Predicated region
    $region78: #{tpu_custom_call.1} parent=1 // pred_check
      _
    $region79: #{tpu_custom_call.1} parent=1 // pred_check_branch
      %188 = sbr.rel (0) target = $region81
    $region80: #{tpu_custom_call.1} parent=1 // pred_region
      %s190 = ssub.s32 16, 16
      %191 = vsyncadd [#allocation24], %s190
      %s193 = sshll.u32 [#allocation23], 4
      %s194 = int_to_ptr.vmem [resolvable:$true] %s193
      %196 = dma.hbm_to_vmem [thread:$0]  %s19, 16, %s194, [#allocation24]
    $region81: #{tpu_custom_call.1} parent=1 // pred_fallthru
      _
    // Predicated region
    $region82: #{tpu_custom_call.1} parent=1 // pred_check
      _
    $region83: #{tpu_custom_call.1} parent=1 // pred_check_branch
      %198 = sbr.rel (0) target = $region85
    $region84: #{tpu_custom_call.1} parent=1 // pred_region
      _
    $region85: #{tpu_custom_call.1} parent=1 // pred_fallthru
      _
    // Predicated region
    $region86: #{tpu_custom_call.1} parent=1 // pred_check
      _
    $region87: #{tpu_custom_call.1} parent=1 // pred_check_branch
      %200 = sbr.rel (0) target = $region89
    $region88: #{tpu_custom_call.1} parent=1 // pred_region
      _
    $region89: #{tpu_custom_call.1} parent=1 // pred_fallthru
      _
    // Predicated region
    $region90: #{tpu_custom_call.1} parent=1 // pred_check
      _
    $region91: #{tpu_custom_call.1} parent=1 // pred_check_branch
      %202 = sbr.rel (0) target = $region93
    $region92: #{tpu_custom_call.1} parent=1 // pred_region
      _
    $region93: #{tpu_custom_call.1} parent=1 // pred_fallthru
      _
    // Predicated region
    $region94: #{tpu_custom_call.1} parent=1 // pred_check
      _
    $region95: #{tpu_custom_call.1} parent=1 // pred_check_branch
      %204 = sbr.rel (0) target = $region97
    $region96: #{tpu_custom_call.1} parent=1 // pred_region
      _
    $region97: #{tpu_custom_call.1} parent=1 // pred_fallthru
      _
    // Predicated region
    $region98: #{tpu_custom_call.1} parent=1 // pred_check
      _
    $region99: #{tpu_custom_call.1} parent=1 // pred_check_branch
      %206 = sbr.rel (0) target = $region101
    $region100: #{tpu_custom_call.1} parent=1 // pred_region
      _
    $region101: #{tpu_custom_call.1} parent=1 // pred_fallthru
      _
    // Predicated region
    $region102: #{tpu_custom_call.1} parent=1 // pred_check
      _
    $region103: #{tpu_custom_call.1} parent=1 // pred_check_branch
      %208 = sbr.rel (0) target = $region105
    $region104: #{tpu_custom_call.1} parent=1 // pred_region
      %209 = dma.done [#allocation3], 512
    $region105: #{tpu_custom_call.1} parent=1 // pred_fallthru
      _
    // Predicated region
    $region106: #{tpu_custom_call.1} parent=1 // pred_check
      _
    $region107: #{tpu_custom_call.1} parent=1 // pred_check_branch
      %211 = sbr.rel (0) target = $region109
    $region108: #{tpu_custom_call.1} parent=1 // pred_region
      %212 = dma.done [#allocation6], 16
    $region109: #{tpu_custom_call.1} parent=1 // pred_fallthru
      _
    // Predicated region
    $region110: #{tpu_custom_call.1} parent=1 // pred_check
      _
    $region111: #{tpu_custom_call.1} parent=1 // pred_check_branch
      %214 = sbr.rel (0) target = $region113
    $region112: #{tpu_custom_call.1} parent=1 // pred_region
      %215 = dma.done [#allocation6], 16
    $region113: #{tpu_custom_call.1} parent=1 // pred_fallthru
      _
    // Predicated region
    $region114: #{tpu_custom_call.1} parent=1 // pred_check
      _
    $region115: #{tpu_custom_call.1} parent=1 // pred_check_branch
      %217 = sbr.rel (0) target = $region117
    $region116: #{tpu_custom_call.1} parent=1 // pred_region
      %218 = dma.done [#allocation9], 512
    $region117: #{tpu_custom_call.1} parent=1 // pred_fallthru
      _
    // Predicated region
    $region118: #{tpu_custom_call.1} parent=1 // pred_check
      _
    $region119: #{tpu_custom_call.1} parent=1 // pred_check_branch
      %220 = sbr.rel (0) target = $region121
    $region120: #{tpu_custom_call.1} parent=1 // pred_region
      %221 = dma.done [#allocation9], 16
    $region121: #{tpu_custom_call.1} parent=1 // pred_fallthru
      _
    // Predicated region
    $region122: #{tpu_custom_call.1} parent=1 // pred_check
      _
    $region123: #{tpu_custom_call.1} parent=1 // pred_check_branch
      %223 = sbr.rel (0) target = $region125
    $region124: #{tpu_custom_call.1} parent=1 // pred_region
      %224 = dma.done [#allocation12], 16
    $region125: #{tpu_custom_call.1} parent=1 // pred_fallthru
      _
    // Predicated region
    $region126: #{tpu_custom_call.1} parent=1 // pred_check
      _
    $region127: #{tpu_custom_call.1} parent=1 // pred_check_branch
      %226 = sbr.rel (0) target = $region129
    $region128: #{tpu_custom_call.1} parent=1 // pred_region
      %227 = dma.done [#allocation12], 16
    $region129: #{tpu_custom_call.1} parent=1 // pred_fallthru
      _
    // Predicated region
    $region130: #{tpu_custom_call.1} parent=1 // pred_check
      _
    $region131: #{tpu_custom_call.1} parent=1 // pred_check_branch
      %229 = sbr.rel (0) target = $region133
    $region132: #{tpu_custom_call.1} parent=1 // pred_region
      %230 = dma.done [#allocation15], 16
    $region133: #{tpu_custom_call.1} parent=1 // pred_fallthru
      _
    // Predicated region
    $region134: #{tpu_custom_call.1} parent=1 // pred_check
      _
    $region135: #{tpu_custom_call.1} parent=1 // pred_check_branch
      %232 = sbr.rel (0) target = $region137
    $region136: #{tpu_custom_call.1} parent=1 // pred_region
      %233 = dma.done [#allocation15], 16
    $region137: #{tpu_custom_call.1} parent=1 // pred_fallthru
      _
    // Predicated region
    $region138: #{tpu_custom_call.1} parent=1 // pred_check
      _
    $region139: #{tpu_custom_call.1} parent=1 // pred_check_branch
      %235 = sbr.rel (0) target = $region141
    $region140: #{tpu_custom_call.1} parent=1 // pred_region
      %236 = dma.done [#allocation18], 16
    $region141: #{tpu_custom_call.1} parent=1 // pred_fallthru
      _
    // Predicated region
    $region142: #{tpu_custom_call.1} parent=1 // pred_check
      _
    $region143: #{tpu_custom_call.1} parent=1 // pred_check_branch
      %238 = sbr.rel (0) target = $region145
    $region144: #{tpu_custom_call.1} parent=1 // pred_region
      %239 = dma.done [#allocation18], 512
    $region145: #{tpu_custom_call.1} parent=1 // pred_fallthru
      _
    // Predicated region
    $region146: #{tpu_custom_call.1} parent=1 // pred_check
      _
    $region147: #{tpu_custom_call.1} parent=1 // pred_check_branch
      %241 = sbr.rel (0) target = $region149
    $region148: #{tpu_custom_call.1} parent=1 // pred_region
      %242 = dma.done [#allocation21], 16
    $region149: #{tpu_custom_call.1} parent=1 // pred_fallthru
      _
    // Predicated region
    $region150: #{tpu_custom_call.1} parent=1 // pred_check
      _
    $region151: #{tpu_custom_call.1} parent=1 // pred_check_branch
      %244 = sbr.rel (0) target = $region153
    $region152: #{tpu_custom_call.1} parent=1 // pred_region
      %245 = dma.done [#allocation21], 16
    $region153: #{tpu_custom_call.1} parent=1 // pred_fallthru
      _
    // Predicated region
    $region154: #{tpu_custom_call.1} parent=1 // pred_check
      _
    $region155: #{tpu_custom_call.1} parent=1 // pred_check_branch
      %247 = sbr.rel (0) target = $region157
    $region156: #{tpu_custom_call.1} parent=1 // pred_region
      %248 = dma.done [#allocation24], 16
    $region157: #{tpu_custom_call.1} parent=1 // pred_fallthru
      _
    %v250 = vld [vmem:[#allocation2] sm:$0xff]
    %v251 = vld [vmem:[#allocation2 + $0x8] sm:$0xff]
    %v252 = vld [vmem:[#allocation2 + $0x10] sm:$0xff]
    %v253 = vld [vmem:[#allocation2 + $0x18] sm:$0xff]
    %v254 = vld [vmem:[#allocation5] sm:$0x1]
    %v255 = vld [vmem:[#allocation7] sm:$0x1]
    %vm256 = vcmask 523264
    %v257 = vsel %vm256, %v250, 0.0
    %258 = vadd.xlane.f32.xlu0 %v257
    %v259 = vpop.xlane.xlu0 %258
    %v260 = vsel %vm256, %v251, 0.0
    %261 = vadd.xlane.f32.xlu0 %v260
    %v262 = vpop.xlane.xlu0 %261
    %v263 = vsel %vm256, %v252, 0.0
    %264 = vadd.xlane.f32.xlu0 %v263
    %v265 = vpop.xlane.xlu0 %264
    %v266 = vsel %vm256, %v253, 0.0
    %267 = vadd.xlane.f32.xlu0 %v266
    %v268 = vpop.xlane.xlu0 %267
    %v269 = vrcp.pop 64.0
    %v270 = vmul.f32 %v259, %v269
    %v271 = vmul.f32 %v262, %v269
    %v272 = vmul.f32 %v265, %v269
    %v273 = vmul.f32 %v268, %v269
    %v274 = vsub.f32 %v250, %v270
    %v275 = vsub.f32 %v251, %v271
    %v276 = vsub.f32 %v252, %v272
    %v277 = vsub.f32 %v253, %v273
    %v278 = vmul.f32 %v274, %v274
    %v279 = vmul.f32 %v275, %v275
    %v280 = vmul.f32 %v276, %v276
    %v281 = vmul.f32 %v277, %v277
    %v282 = vsel %vm256, %v278, 0.0
    %283 = vadd.xlane.f32.xlu0 %v282
    %v284 = vpop.xlane.xlu0 %283
    %v285 = vsel %vm256, %v279, 0.0
    %286 = vadd.xlane.f32.xlu0 %v285
    %v287 = vpop.xlane.xlu0 %286
    %v288 = vsel %vm256, %v280, 0.0
    %289 = vadd.xlane.f32.xlu0 %v288
    %v290 = vpop.xlane.xlu0 %289
    %v291 = vsel %vm256, %v281, 0.0
    %292 = vadd.xlane.f32.xlu0 %v291
    %v293 = vpop.xlane.xlu0 %292
    %v294 = vmul.f32 %v284, %v269
    %v295 = vmul.f32 %v287, %v269
    %v296 = vmul.f32 %v290, %v269
    %v297 = vmul.f32 %v293, %v269
    %v298 = vadd.f32 %v294, 1e-05
    %v299 = vadd.f32 %v295, 1e-05
    %v300 = vadd.f32 %v296, 1e-05
    %v301 = vadd.f32 %v297, 1e-05
    %v302 = vrsqrt.pop %v298
    %v303 = vrsqrt.pop %v299
    %v304 = vrsqrt.pop %v300
    %v305 = vrsqrt.pop %v301
    %v306 = vmul.f32 %v274, %v302
    %v307 = vmul.f32 %v275, %v303
    %v308 = vmul.f32 %v276, %v304
    %v309 = vmul.f32 %v277, %v305
    %v311 = vlaneseq
    %v312 = vshrl.u32 %v311, 7
    %v313 = vsub.s32 0, %v312
    %v314 = vrot.slane %v254, %v313
    %v316 = vmul.f32 %v306, %v314
    %v317 = vmul.f32 %v307, %v314
    %v318 = vmul.f32 %v308, %v314
    %v319 = vmul.f32 %v309, %v314
    %v321 = vlaneseq
    %v322 = vshrl.u32 %v321, 7
    %v323 = vsub.s32 0, %v322
    %v324 = vrot.slane %v255, %v323
    %v326 = vadd.f32 %v316, %v324
    %v327 = vadd.f32 %v317, %v324
    %v328 = vadd.f32 %v318, %v324
    %v329 = vadd.f32 %v319, %v324
    %v330 = vpack.c.bf16 %v327, %v326
    %v331 = vpack.c.bf16 %v329, %v328
    %v332 = vld [vmem:[%s3] sm:$0xff]
    %v333 = vld [vmem:[%s3 + $0x8] sm:$0xff]
    %v334 = vld [vmem:[%s3 + $0x10] sm:$0xff]
    %v335 = vld [vmem:[%s3 + $0x18] sm:$0xff]
    %v336 = vld [vmem:[%s3 + $0x20] sm:$0xff]
    %v337 = vld [vmem:[%s3 + $0x28] sm:$0xff]
    %v338 = vld [vmem:[%s3 + $0x30] sm:$0xff]
    %v339 = vld [vmem:[%s3 + $0x38] sm:$0xff]
    %v348 = vunpack.c.l.b16 %v332
    %v349 = vunpack.c.h.b16 %v332
    %v350 = vunpack.c.l.b16 %v333
    %v351 = vunpack.c.h.b16 %v333
    %v352 = vunpack.c.l.b16 %v334
    %v353 = vunpack.c.h.b16 %v334
    %v354 = vunpack.c.l.b16 %v335
    %v355 = vunpack.c.h.b16 %v335
    %v356 = vunpack.c.l.b16 %v336
    %v357 = vunpack.c.h.b16 %v336
    %v358 = vunpack.c.l.b16 %v337
    %v359 = vunpack.c.h.b16 %v337
    %v360 = vunpack.c.l.b16 %v338
    %v361 = vunpack.c.h.b16 %v338
    %v362 = vunpack.c.l.b16 %v339
    %v363 = vunpack.c.h.b16 %v339
    %v364 = vpack.c.b16 %v350, %v348
    %v365 = vpack.c.b16 %v351, %v349
    %v366 = vpack.c.b16 %v354, %v352
    %v367 = vpack.c.b16 %v355, %v353
    %v368 = vpack.c.b16 %v358, %v356
    %v369 = vpack.c.b16 %v359, %v357
    %v370 = vpack.c.b16 %v362, %v360
    %v371 = vpack.c.b16 %v363, %v361
    %v381 = vsel %vm256, %v330, 0
    %v384 = vsel %vm256, %v331, 0
    %386 = vmatprep.subr.bf16.mxu0 %v365
    %387 = vmatpush1.bf16.msra.mxu0 %v364
    %388 = vmatprep.subr.bf16.mxu0 %v367
    %389 = vmatpush1.bf16.msra.mxu0 %v366
    %390 = vmatprep.subr.bf16.mxu0 %v369
    %391 = vmatpush1.bf16.msra.mxu0 %v368
    %392 = vmatprep.subr.bf16.mxu0 %v371
    %393 = vmatpush1.bf16.msra.mxu0 %v370
    %394 = vmatprep.subr.bf16.mxu0 0
    %395 = vmatpush1.bf16.msra.mxu0 0
    %396 = vmatprep.subr.bf16.mxu0 0
    %397 = vmatpush1.bf16.msra.mxu0 0
    %398 = vmatprep.subr.bf16.mxu0 0
    %399 = vmatpush1.bf16.msra.mxu0 0
    %400 = vmatprep.subr.bf16.mxu0 0
    %401 = vmatpush1.bf16.msra.mxu0 0
    %402 = vmatprep.subr.bf16.mxu0 0
    %403 = vmatpush1.bf16.msra.mxu0 0
    %404 = vmatprep.subr.bf16.mxu0 0
    %405 = vmatpush1.bf16.msra.mxu0 0
    %406 = vmatprep.subr.bf16.mxu0 0
    %407 = vmatpush1.bf16.msra.mxu0 0
    %408 = vmatprep.subr.bf16.mxu0 0
    %409 = vmatpush1.bf16.msra.mxu0 0
    %410 = vmatprep.subr.bf16.mxu0 0
    %411 = vmatpush1.bf16.msra.mxu0 0
    %412 = vmatprep.subr.bf16.mxu0 0
    %413 = vmatpush1.bf16.msra.mxu0 0
    %414 = vmatprep.subr.bf16.mxu0 0
    %415 = vmatpush1.bf16.msra.mxu0 0
    %416 = vmatprep.subr.bf16.mxu0 0
    %417 = vmatpush1.bf16.msra.mxu0 0
    %418 = vmatprep.mubr.bf16.mxu0 0
    %419 = vmatmul.mubr.bf16.gmra.mrb[0].mxu0 %v381
    %v420 = vpop.f32.mrb[0].mxu0
    %v421 = vadd.f32 0.0, %v420
    %v422 = vpop.f32.mrb[0].mxu0
    %v423 = vadd.f32 0.0, %v422
    %v424 = vpop.f32.mrb[0].mxu0
    %v425 = vadd.f32 0.0, %v424
    %v426 = vpop.f32.mrb[0].mxu0
    %v427 = vadd.f32 0.0, %v426
    %428 = vmatprep.mubr.bf16.mxu0 0
    %429 = vmatmul.mubr.bf16.gmra.mrb[0].mxu0 %v384
    %v430 = vpop.f32.mrb[0].mxu0
    %v431 = vadd.f32 0.0, %v430
    %v432 = vpop.f32.mrb[0].mxu0
    %v433 = vadd.f32 0.0, %v432
    %v434 = vpop.f32.mrb[0].mxu0
    %v435 = vadd.f32 0.0, %v434
    %v436 = vpop.f32.mrb[0].mxu0
    %v437 = vadd.f32 0.0, %v436
    %438 = vdwg.mxu0
    %v439 = vpack.c.bf16 %v425, %v421
    %v440 = vpack.c.bf16 %v435, %v431
    %v441 = vpack.c.bf16 %v427, %v423
    %v442 = vpack.c.bf16 %v437, %v433
    %v443 = vld [vmem:[%s12] sm:$0xff]
    %v444 = vld [vmem:[%s12 + $0x8] sm:$0xff]
    %446 = vrot.lane.b32.xlu0 %v439, 64
    %v447 = vpop.permute.xlu0 %446
    %vm448 = vcmask 130048
    %v450 = vsel %vm448, %v439, 0
    %v453 = vsel %vm448, %v447, 0
    %455 = vmatprep.subr.bf16.mxu0 0
    %456 = vmatpush1.bf16.xpose.msra.mxu0 %v453
    %457 = vmatprep.subr.bf16.mxu0 0
    %458 = vmatpush1.bf16.xpose.msra.mxu0 0
    %459 = vmatprep.subr.bf16.mxu0 0
    %460 = vmatpush1.bf16.xpose.msra.mxu0 0
    %461 = vmatprep.subr.bf16.mxu0 0
    %462 = vmatpush1.bf16.xpose.msra.mxu0 0
    %463 = vmatprep.subr.bf16.mxu0 0
    %464 = vmatpush1.bf16.xpose.msra.mxu0 0
    %465 = vmatprep.subr.bf16.mxu0 0
    %466 = vmatpush1.bf16.xpose.msra.mxu0 0
    %467 = vmatprep.subr.bf16.mxu0 0
    %468 = vmatpush1.bf16.xpose.msra.mxu0 0
    %469 = vmatprep.subr.bf16.mxu0 0
    %470 = vmatpush1.bf16.xpose.msra.mxu0 0
    %471 = vmatprep.subr.bf16.mxu0 0
    %472 = vmatpush1.bf16.xpose.msra.mxu0 0
    %473 = vmatprep.subr.bf16.mxu0 0
    %474 = vmatpush1.bf16.xpose.msra.mxu0 0
    %475 = vmatprep.subr.bf16.mxu0 0
    %476 = vmatpush1.bf16.xpose.msra.mxu0 0
    %477 = vmatprep.subr.bf16.mxu0 0
    %478 = vmatpush1.bf16.xpose.msra.mxu0 0
    %479 = vmatprep.subr.bf16.mxu0 0
    %480 = vmatpush1.bf16.xpose.msra.mxu0 0
    %481 = vmatprep.subr.bf16.mxu0 0
    %482 = vmatpush1.bf16.xpose.msra.mxu0 0
    %483 = vmatprep.subr.bf16.mxu0 0
    %484 = vmatpush1.bf16.xpose.msra.mxu0 0
    %485 = vmatprep.subr.bf16.mxu0 0
    %486 = vmatpush1.bf16.xpose.msra.mxu0 0
    %487 = vmatprep.mubr.bf16.mxu0 0
    %488 = vmatmul.mubr.bf16.gmra.mrb[0].mxu0 %v450
    %v489 = vpop.f32.mrb[0].mxu0
    %v490 = vadd.f32 %v443, %v489
    %v491 = vpop.f32.mrb[0].mxu0
    %v492 = vpop.f32.mrb[0].mxu0
    %v493 = vadd.f32 %v444, %v492
    %v494 = vpop.f32.mrb[0].mxu0
    %495 = vdwg.mxu0
    %497 = vrot.lane.b32.xlu0 %v440, 64
    %v498 = vpop.permute.xlu0 %497
    %v500 = vsel %vm448, %v440, 0
    %v503 = vsel %vm448, %v498, 0
    %505 = vmatprep.subr.bf16.mxu0 0
    %506 = vmatpush1.bf16.xpose.msra.mxu0 %v503
    %507 = vmatprep.subr.bf16.mxu0 0
    %508 = vmatpush1.bf16.xpose.msra.mxu0 0
    %509 = vmatprep.subr.bf16.mxu0 0
    %510 = vmatpush1.bf16.xpose.msra.mxu0 0
    %511 = vmatprep.subr.bf16.mxu0 0
    %512 = vmatpush1.bf16.xpose.msra.mxu0 0
    %513 = vmatprep.subr.bf16.mxu0 0
    %514 = vmatpush1.bf16.xpose.msra.mxu0 0
    %515 = vmatprep.subr.bf16.mxu0 0
    %516 = vmatpush1.bf16.xpose.msra.mxu0 0
    %517 = vmatprep.subr.bf16.mxu0 0
    %518 = vmatpush1.bf16.xpose.msra.mxu0 0
    %519 = vmatprep.subr.bf16.mxu0 0
    %520 = vmatpush1.bf16.xpose.msra.mxu0 0
    %521 = vmatprep.subr.bf16.mxu0 0
    %522 = vmatpush1.bf16.xpose.msra.mxu0 0
    %523 = vmatprep.subr.bf16.mxu0 0
    %524 = vmatpush1.bf16.xpose.msra.mxu0 0
    %525 = vmatprep.subr.bf16.mxu0 0
    %526 = vmatpush1.bf16.xpose.msra.mxu0 0
    %527 = vmatprep.subr.bf16.mxu0 0
    %528 = vmatpush1.bf16.xpose.msra.mxu0 0
    %529 = vmatprep.subr.bf16.mxu0 0
    %530 = vmatpush1.bf16.xpose.msra.mxu0 0
    %531 = vmatprep.subr.bf16.mxu0 0
    %532 = vmatpush1.bf16.xpose.msra.mxu0 0
    %533 = vmatprep.subr.bf16.mxu0 0
    %534 = vmatpush1.bf16.xpose.msra.mxu0 0
    %535 = vmatprep.subr.bf16.mxu0 0
    %536 = vmatpush1.bf16.xpose.msra.mxu0 0
    %537 = vmatprep.mubr.bf16.mxu0 0
    %538 = vmatmul.mubr.bf16.gmra.mrb[0].mxu0 %v500
    %v539 = vpop.f32.mrb[0].mxu0
    %v540 = vadd.f32 %v443, %v539
    %v541 = vpop.f32.mrb[0].mxu0
    %v542 = vpop.f32.mrb[0].mxu0
    %v543 = vadd.f32 %v444, %v542
    %v544 = vpop.f32.mrb[0].mxu0
    %545 = vdwg.mxu0
    %v546 = vsel %vm448, %v490, -inf
    %547 = vmax.xlane.f32.xlu0 %v546
    %v548 = vpop.xlane.xlu0 %547
    %v549 = vsel %vm448, %v493, -inf
    %550 = vmax.xlane.f32.xlu0 %v549
    %v551 = vpop.xlane.xlu0 %550
    %v552 = vsel %vm448, %v540, -inf
    %553 = vmax.xlane.f32.xlu0 %v552
    %v554 = vpop.xlane.xlu0 %553
    %v555 = vsel %vm448, %v543, -inf
    %556 = vmax.xlane.f32.xlu0 %v555
    %v557 = vpop.xlane.xlu0 %556
    %v558 = vsub.f32 %v490, %v548
    %v559 = vsub.f32 %v493, %v551
    %v560 = vsub.f32 %v540, %v554
    %v561 = vsub.f32 %v543, %v557
    %v562 = vmul.f32 %v558, 1.442695
    %v563 = vpow.pop %v562
    %v564 = vmul.f32 %v559, 1.442695
    %v565 = vpow.pop %v564
    %v566 = vmul.f32 %v560, 1.442695
    %v567 = vpow.pop %v566
    %v568 = vmul.f32 %v561, 1.442695
    %v569 = vpow.pop %v568
    %v570 = vsel %vm448, %v563, 0.0
    %571 = vadd.xlane.f32.xlu0 %v570
    %v572 = vpop.xlane.xlu0 %571
    %v573 = vsel %vm448, %v565, 0.0
    %574 = vadd.xlane.f32.xlu0 %v573
    %v575 = vpop.xlane.xlu0 %574
    %v576 = vsel %vm448, %v567, 0.0
    %577 = vadd.xlane.f32.xlu0 %v576
    %v578 = vpop.xlane.xlu0 %577
    %v579 = vsel %vm448, %v569, 0.0
    %580 = vadd.xlane.f32.xlu0 %v579
    %v581 = vpop.xlane.xlu0 %580
    %v582 = vrcp.pop %v572
    %v583 = vrcp.pop %v575
    %v584 = vrcp.pop %v578
    %v585 = vrcp.pop %v581
    %v586 = vmul.f32 %v563, %v582
    %v587 = vmul.f32 %v565, %v583
    %v588 = vmul.f32 %v567, %v584
    %v589 = vmul.f32 %v569, %v585
    %v590 = vpack.c.bf16 %v587, %v586
    %v591 = vpack.c.bf16 %v589, %v588
    %v593 = vsel %vm448, %v590, 0
    %595 = vmatprep.subr.bf16.mxu0 0
    %596 = vmatpush1.bf16.msra.mxu0 %v441
    %597 = vmatprep.subr.bf16.mxu0 0
    %598 = vmatpush1.bf16.msra.mxu0 0
    %599 = vmatprep.subr.bf16.mxu0 0
    %600 = vmatpush1.bf16.msra.mxu0 0
    %601 = vmatprep.subr.bf16.mxu0 0
    %602 = vmatpush1.bf16.msra.mxu0 0
    %603 = vmatprep.subr.bf16.mxu0 0
    %604 = vmatpush1.bf16.msra.mxu0 0
    %605 = vmatprep.subr.bf16.mxu0 0
    %606 = vmatpush1.bf16.msra.mxu0 0
    %607 = vmatprep.subr.bf16.mxu0 0
    %608 = vmatpush1.bf16.msra.mxu0 0
    %609 = vmatprep.subr.bf16.mxu0 0
    %610 = vmatpush1.bf16.msra.mxu0 0
    %611 = vmatprep.subr.bf16.mxu0 0
    %612 = vmatpush1.bf16.msra.mxu0 0
    %613 = vmatprep.subr.bf16.mxu0 0
    %614 = vmatpush1.bf16.msra.mxu0 0
    %615 = vmatprep.subr.bf16.mxu0 0
    %616 = vmatpush1.bf16.msra.mxu0 0
    %617 = vmatprep.subr.bf16.mxu0 0
    %618 = vmatpush1.bf16.msra.mxu0 0
    %619 = vmatprep.subr.bf16.mxu0 0
    %620 = vmatpush1.bf16.msra.mxu0 0
    %621 = vmatprep.subr.bf16.mxu0 0
    %622 = vmatpush1.bf16.msra.mxu0 0
    %623 = vmatprep.subr.bf16.mxu0 0
    %624 = vmatpush1.bf16.msra.mxu0 0
    %625 = vmatprep.subr.bf16.mxu0 0
    %626 = vmatpush1.bf16.msra.mxu0 0
    %627 = vmatprep.mubr.bf16.mxu0 0
    %628 = vmatmul.mubr.bf16.gmra.mrb[0].mxu0 %v593
    %v629 = vpop.f32.mrb[0].mxu0
    %v630 = vadd.f32 0.0, %v629
    %v631 = vpop.f32.mrb[0].mxu0
    %v632 = vpop.f32.mrb[0].mxu0
    %v633 = vadd.f32 0.0, %v632
    %v634 = vpop.f32.mrb[0].mxu0
    %635 = vdwg.mxu0
    %v637 = vsel %vm448, %v591, 0
    %639 = vmatprep.subr.bf16.mxu0 0
    %640 = vmatpush1.bf16.msra.mxu0 %v442
    %641 = vmatprep.subr.bf16.mxu0 0
    %642 = vmatpush1.bf16.msra.mxu0 0
    %643 = vmatprep.subr.bf16.mxu0 0
    %644 = vmatpush1.bf16.msra.mxu0 0
    %645 = vmatprep.subr.bf16.mxu0 0
    %646 = vmatpush1.bf16.msra.mxu0 0
    %647 = vmatprep.subr.bf16.mxu0 0
    %648 = vmatpush1.bf16.msra.mxu0 0
    %649 = vmatprep.subr.bf16.mxu0 0
    %650 = vmatpush1.bf16.msra.mxu0 0
    %651 = vmatprep.subr.bf16.mxu0 0
    %652 = vmatpush1.bf16.msra.mxu0 0
    %653 = vmatprep.subr.bf16.mxu0 0
    %654 = vmatpush1.bf16.msra.mxu0 0
    %655 = vmatprep.subr.bf16.mxu0 0
    %656 = vmatpush1.bf16.msra.mxu0 0
    %657 = vmatprep.subr.bf16.mxu0 0
    %658 = vmatpush1.bf16.msra.mxu0 0
    %659 = vmatprep.subr.bf16.mxu0 0
    %660 = vmatpush1.bf16.msra.mxu0 0
    %661 = vmatprep.subr.bf16.mxu0 0
    %662 = vmatpush1.bf16.msra.mxu0 0
    %663 = vmatprep.subr.bf16.mxu0 0
    %664 = vmatpush1.bf16.msra.mxu0 0
    %665 = vmatprep.subr.bf16.mxu0 0
    %666 = vmatpush1.bf16.msra.mxu0 0
    %667 = vmatprep.subr.bf16.mxu0 0
    %668 = vmatpush1.bf16.msra.mxu0 0
    %669 = vmatprep.subr.bf16.mxu0 0
    %670 = vmatpush1.bf16.msra.mxu0 0
    %671 = vmatprep.mubr.bf16.mxu0 0
    %672 = vmatmul.mubr.bf16.gmra.mrb[0].mxu0 %v637
    %v673 = vpop.f32.mrb[0].mxu0
    %v674 = vadd.f32 0.0, %v673
    %v675 = vpop.f32.mrb[0].mxu0
    %v676 = vpop.f32.mrb[0].mxu0
    %v677 = vadd.f32 0.0, %v676
    %v678 = vpop.f32.mrb[0].mxu0
    %679 = vdwg.mxu0
    %v680 = vpack.c.bf16 %v633, %v630
    %v681 = vpack.c.bf16 %v677, %v674
    %v682 = vld [vmem:[#allocation8] sm:$0xf]
    %v683 = vld [vmem:[#allocation8 + $0x4] sm:$0xf]
    %s684 = scalar_lea.vmem %s12, 16
    %v685 = vld [vmem:[%s684] sm:$0xff]
    %v686 = vld [vmem:[%s684 + $0x8] sm:$0xff]
    %687 = vrot.lane.b32.xlu0 %v439, 112
    %v688 = vpop.permute.xlu0 %687
    %689 = vrot.lane.b32.xlu0 %v439, 48
    %v690 = vpop.permute.xlu0 %689
    %v692 = vsel %vm448, %v688, 0
    %v695 = vsel %vm448, %v690, 0
    %697 = vmatprep.subr.bf16.mxu0 0
    %698 = vmatpush1.bf16.xpose.msra.mxu0 %v695
    %699 = vmatprep.subr.bf16.mxu0 0
    %700 = vmatpush1.bf16.xpose.msra.mxu0 0
    %701 = vmatprep.subr.bf16.mxu0 0
    %702 = vmatpush1.bf16.xpose.msra.mxu0 0
    %703 = vmatprep.subr.bf16.mxu0 0
    %704 = vmatpush1.bf16.xpose.msra.mxu0 0
    %705 = vmatprep.subr.bf16.mxu0 0
    %706 = vmatpush1.bf16.xpose.msra.mxu0 0
    %707 = vmatprep.subr.bf16.mxu0 0
    %708 = vmatpush1.bf16.xpose.msra.mxu0 0
    %709 = vmatprep.subr.bf16.mxu0 0
    %710 = vmatpush1.bf16.xpose.msra.mxu0 0
    %711 = vmatprep.subr.bf16.mxu0 0
    %712 = vmatpush1.bf16.xpose.msra.mxu0 0
    %713 = vmatprep.subr.bf16.mxu0 0
    %714 = vmatpush1.bf16.xpose.msra.mxu0 0
    %715 = vmatprep.subr.bf16.mxu0 0
    %716 = vmatpush1.bf16.xpose.msra.mxu0 0
    %717 = vmatprep.subr.bf16.mxu0 0
    %718 = vmatpush1.bf16.xpose.msra.mxu0 0
    %719 = vmatprep.subr.bf16.mxu0 0
    %720 = vmatpush1.bf16.xpose.msra.mxu0 0
    %721 = vmatprep.subr.bf16.mxu0 0
    %722 = vmatpush1.bf16.xpose.msra.mxu0 0
    %723 = vmatprep.subr.bf16.mxu0 0
    %724 = vmatpush1.bf16.xpose.msra.mxu0 0
    %725 = vmatprep.subr.bf16.mxu0 0
    %726 = vmatpush1.bf16.xpose.msra.mxu0 0
    %727 = vmatprep.subr.bf16.mxu0 0
    %728 = vmatpush1.bf16.xpose.msra.mxu0 0
    %729 = vmatprep.mubr.bf16.mxu0 0
    %730 = vmatmul.mubr.bf16.gmra.mrb[0].mxu0 %v692
    %v731 = vpop.f32.mrb[0].mxu0
    %v732 = vadd.f32 %v685, %v731
    %v733 = vpop.f32.mrb[0].mxu0
    %v734 = vpop.f32.mrb[0].mxu0
    %v735 = vadd.f32 %v686, %v734
    %v736 = vpop.f32.mrb[0].mxu0
    %737 = vdwg.mxu0
    %738 = vrot.lane.b32.xlu0 %v440, 112
    %v739 = vpop.permute.xlu0 %738
    %740 = vrot.lane.b32.xlu0 %v440, 48
    %v741 = vpop.permute.xlu0 %740
    %v743 = vsel %vm448, %v739, 0
    %v746 = vsel %vm448, %v741, 0
    %748 = vmatprep.subr.bf16.mxu0 0
    %749 = vmatpush1.bf16.xpose.msra.mxu0 %v746
    %750 = vmatprep.subr.bf16.mxu0 0
    %751 = vmatpush1.bf16.xpose.msra.mxu0 0
    %752 = vmatprep.subr.bf16.mxu0 0
    %753 = vmatpush1.bf16.xpose.msra.mxu0 0
    %754 = vmatprep.subr.bf16.mxu0 0
    %755 = vmatpush1.bf16.xpose.msra.mxu0 0
    %756 = vmatprep.subr.bf16.mxu0 0
    %757 = vmatpush1.bf16.xpose.msra.mxu0 0
    %758 = vmatprep.subr.bf16.mxu0 0
    %759 = vmatpush1.bf16.xpose.msra.mxu0 0
    %760 = vmatprep.subr.bf16.mxu0 0
    %761 = vmatpush1.bf16.xpose.msra.mxu0 0
    %762 = vmatprep.subr.bf16.mxu0 0
    %763 = vmatpush1.bf16.xpose.msra.mxu0 0
    %764 = vmatprep.subr.bf16.mxu0 0
    %765 = vmatpush1.bf16.xpose.msra.mxu0 0
    %766 = vmatprep.subr.bf16.mxu0 0
    %767 = vmatpush1.bf16.xpose.msra.mxu0 0
    %768 = vmatprep.subr.bf16.mxu0 0
    %769 = vmatpush1.bf16.xpose.msra.mxu0 0
    %770 = vmatprep.subr.bf16.mxu0 0
    %771 = vmatpush1.bf16.xpose.msra.mxu0 0
    %772 = vmatprep.subr.bf16.mxu0 0
    %773 = vmatpush1.bf16.xpose.msra.mxu0 0
    %774 = vmatprep.subr.bf16.mxu0 0
    %775 = vmatpush1.bf16.xpose.msra.mxu0 0
    %776 = vmatprep.subr.bf16.mxu0 0
    %777 = vmatpush1.bf16.xpose.msra.mxu0 0
    %778 = vmatprep.subr.bf16.mxu0 0
    %779 = vmatpush1.bf16.xpose.msra.mxu0 0
    %780 = vmatprep.mubr.bf16.mxu0 0
    %781 = vmatmul.mubr.bf16.gmra.mrb[0].mxu0 %v743
    %v782 = vpop.f32.mrb[0].mxu0
    %v783 = vadd.f32 %v685, %v782
    %v784 = vpop.f32.mrb[0].mxu0
    %v785 = vpop.f32.mrb[0].mxu0
    %v786 = vadd.f32 %v686, %v785
    %v787 = vpop.f32.mrb[0].mxu0
    %788 = vdwg.mxu0
    %v789 = vsel %vm448, %v732, -inf
    %790 = vmax.xlane.f32.xlu0 %v789
    %v791 = vpop.xlane.xlu0 %790
    %v792 = vsel %vm448, %v735, -inf
    %793 = vmax.xlane.f32.xlu0 %v792
    %v794 = vpop.xlane.xlu0 %793
    %v795 = vsel %vm448, %v783, -inf
    %796 = vmax.xlane.f32.xlu0 %v795
    %v797 = vpop.xlane.xlu0 %796
    %v798 = vsel %vm448, %v786, -inf
    %799 = vmax.xlane.f32.xlu0 %v798
    %v800 = vpop.xlane.xlu0 %799
    %v801 = vsub.f32 %v732, %v791
    %v802 = vsub.f32 %v735, %v794
    %v803 = vsub.f32 %v783, %v797
    %v804 = vsub.f32 %v786, %v800
    %v805 = vmul.f32 %v801, 1.442695
    %v806 = vpow.pop %v805
    %v807 = vmul.f32 %v802, 1.442695
    %v808 = vpow.pop %v807
    %v809 = vmul.f32 %v803, 1.442695
    %v810 = vpow.pop %v809
    %v811 = vmul.f32 %v804, 1.442695
    %v812 = vpow.pop %v811
    %v813 = vsel %vm448, %v806, 0.0
    %814 = vadd.xlane.f32.xlu0 %v813
    %v815 = vpop.xlane.xlu0 %814
    %v816 = vsel %vm448, %v808, 0.0
    %817 = vadd.xlane.f32.xlu0 %v816
    %v818 = vpop.xlane.xlu0 %817
    %v819 = vsel %vm448, %v810, 0.0
    %820 = vadd.xlane.f32.xlu0 %v819
    %v821 = vpop.xlane.xlu0 %820
    %v822 = vsel %vm448, %v812, 0.0
    %823 = vadd.xlane.f32.xlu0 %v822
    %v824 = vpop.xlane.xlu0 %823
    %v825 = vrcp.pop %v815
    %v826 = vrcp.pop %v818
    %v827 = vrcp.pop %v821
    %v828 = vrcp.pop %v824
    %v829 = vmul.f32 %v806, %v825
    %v830 = vmul.f32 %v808, %v826
    %v831 = vmul.f32 %v810, %v827
    %v832 = vmul.f32 %v812, %v828
    %v833 = vpack.c.bf16 %v830, %v829
    %v834 = vpack.c.bf16 %v832, %v831
    %836 = vrot.lane.b32.xlu0 %v441, 112
    %v837 = vpop.permute.xlu0 %836
    %v840 = vsel %vm448, %v833, 0
    %842 = vmatprep.subr.bf16.mxu0 0
    %843 = vmatpush1.bf16.msra.mxu0 %v837
    %844 = vmatprep.subr.bf16.mxu0 0
    %845 = vmatpush1.bf16.msra.mxu0 0
    %846 = vmatprep.subr.bf16.mxu0 0
    %847 = vmatpush1.bf16.msra.mxu0 0
    %848 = vmatprep.subr.bf16.mxu0 0
    %849 = vmatpush1.bf16.msra.mxu0 0
    %850 = vmatprep.subr.bf16.mxu0 0
    %851 = vmatpush1.bf16.msra.mxu0 0
    %852 = vmatprep.subr.bf16.mxu0 0
    %853 = vmatpush1.bf16.msra.mxu0 0
    %854 = vmatprep.subr.bf16.mxu0 0
    %855 = vmatpush1.bf16.msra.mxu0 0
    %856 = vmatprep.subr.bf16.mxu0 0
    %857 = vmatpush1.bf16.msra.mxu0 0
    %858 = vmatprep.subr.bf16.mxu0 0
    %859 = vmatpush1.bf16.msra.mxu0 0
    %860 = vmatprep.subr.bf16.mxu0 0
    %861 = vmatpush1.bf16.msra.mxu0 0
    %862 = vmatprep.subr.bf16.mxu0 0
    %863 = vmatpush1.bf16.msra.mxu0 0
    %864 = vmatprep.subr.bf16.mxu0 0
    %865 = vmatpush1.bf16.msra.mxu0 0
    %866 = vmatprep.subr.bf16.mxu0 0
    %867 = vmatpush1.bf16.msra.mxu0 0
    %868 = vmatprep.subr.bf16.mxu0 0
    %869 = vmatpush1.bf16.msra.mxu0 0
    %870 = vmatprep.subr.bf16.mxu0 0
    %871 = vmatpush1.bf16.msra.mxu0 0
    %872 = vmatprep.subr.bf16.mxu0 0
    %873 = vmatpush1.bf16.msra.mxu0 0
    %874 = vmatprep.mubr.bf16.mxu0 0
    %875 = vmatmul.mubr.bf16.gmra.mrb[0].mxu0 %v840
    %v876 = vpop.f32.mrb[0].mxu0
    %v877 = vadd.f32 0.0, %v876
    %v878 = vpop.f32.mrb[0].mxu0
    %v879 = vpop.f32.mrb[0].mxu0
    %v880 = vadd.f32 0.0, %v879
    %v881 = vpop.f32.mrb[0].mxu0
    %882 = vdwg.mxu0
    %884 = vrot.lane.b32.xlu0 %v442, 112
    %v885 = vpop.permute.xlu0 %884
    %v888 = vsel %vm448, %v834, 0
    %890 = vmatprep.subr.bf16.mxu0 0
    %891 = vmatpush1.bf16.msra.mxu0 %v885
    %892 = vmatprep.subr.bf16.mxu0 0
    %893 = vmatpush1.bf16.msra.mxu0 0
    %894 = vmatprep.subr.bf16.mxu0 0
    %895 = vmatpush1.bf16.msra.mxu0 0
    %896 = vmatprep.subr.bf16.mxu0 0
    %897 = vmatpush1.bf16.msra.mxu0 0
    %898 = vmatprep.subr.bf16.mxu0 0
    %899 = vmatpush1.bf16.msra.mxu0 0
    %900 = vmatprep.subr.bf16.mxu0 0
    %901 = vmatpush1.bf16.msra.mxu0 0
    %902 = vmatprep.subr.bf16.mxu0 0
    %903 = vmatpush1.bf16.msra.mxu0 0
    %904 = vmatprep.subr.bf16.mxu0 0
    %905 = vmatpush1.bf16.msra.mxu0 0
    %906 = vmatprep.subr.bf16.mxu0 0
    %907 = vmatpush1.bf16.msra.mxu0 0
    %908 = vmatprep.subr.bf16.mxu0 0
    %909 = vmatpush1.bf16.msra.mxu0 0
    %910 = vmatprep.subr.bf16.mxu0 0
    %911 = vmatpush1.bf16.msra.mxu0 0
    %912 = vmatprep.subr.bf16.mxu0 0
    %913 = vmatpush1.bf16.msra.mxu0 0
    %914 = vmatprep.subr.bf16.mxu0 0
    %915 = vmatpush1.bf16.msra.mxu0 0
    %916 = vmatprep.subr.bf16.mxu0 0
    %917 = vmatpush1.bf16.msra.mxu0 0
    %918 = vmatprep.subr.bf16.mxu0 0
    %919 = vmatpush1.bf16.msra.mxu0 0
    %920 = vmatprep.subr.bf16.mxu0 0
    %921 = vmatpush1.bf16.msra.mxu0 0
    %922 = vmatprep.mubr.bf16.mxu0 0
    %923 = vmatmul.mubr.bf16.gmra.mrb[0].mxu0 %v888
    %v924 = vpop.f32.mrb[0].mxu0
    %v925 = vadd.f32 0.0, %v924
    %v926 = vpop.f32.mrb[0].mxu0
    %v927 = vpop.f32.mrb[0].mxu0
    %v928 = vadd.f32 0.0, %v927
    %v929 = vpop.f32.mrb[0].mxu0
    %930 = vdwg.mxu0
    %v931 = vpack.c.bf16 %v880, %v877
    %v932 = vpack.c.bf16 %v928, %v925
    %v933 = vld [vmem:[#allocation8 + $0x8] sm:$0xf]
    %v934 = vld [vmem:[#allocation8 + $0xc] sm:$0xf]
    %v937 = vunpack.c.l.b16 %v933
    %v938 = vunpack.c.l.b16 %v934
    %v939 = vpack.c.b16 %v938, %v937
    %v942 = vsel %vm448, %v931, 0
    %v945 = vsel %vm448, %v932, 0
    %947 = vmatprep.subr.bf16.mxu0 0
    %948 = vmatpush1.bf16.msra.mxu0 %v939
    %949 = vmatprep.subr.bf16.mxu0 0
    %950 = vmatpush1.bf16.msra.mxu0 0
    %951 = vmatprep.subr.bf16.mxu0 0
    %952 = vmatpush1.bf16.msra.mxu0 0
    %953 = vmatprep.subr.bf16.mxu0 0
    %954 = vmatpush1.bf16.msra.mxu0 0
    %955 = vmatprep.subr.bf16.mxu0 0
    %956 = vmatpush1.bf16.msra.mxu0 0
    %957 = vmatprep.subr.bf16.mxu0 0
    %958 = vmatpush1.bf16.msra.mxu0 0
    %959 = vmatprep.subr.bf16.mxu0 0
    %960 = vmatpush1.bf16.msra.mxu0 0
    %961 = vmatprep.subr.bf16.mxu0 0
    %962 = vmatpush1.bf16.msra.mxu0 0
    %963 = vmatprep.subr.bf16.mxu0 0
    %964 = vmatpush1.bf16.msra.mxu0 0
    %965 = vmatprep.subr.bf16.mxu0 0
    %966 = vmatpush1.bf16.msra.mxu0 0
    %967 = vmatprep.subr.bf16.mxu0 0
    %968 = vmatpush1.bf16.msra.mxu0 0
    %969 = vmatprep.subr.bf16.mxu0 0
    %970 = vmatpush1.bf16.msra.mxu0 0
    %971 = vmatprep.subr.bf16.mxu0 0
    %972 = vmatpush1.bf16.msra.mxu0 0
    %973 = vmatprep.subr.bf16.mxu0 0
    %974 = vmatpush1.bf16.msra.mxu0 0
    %975 = vmatprep.subr.bf16.mxu0 0
    %976 = vmatpush1.bf16.msra.mxu0 0
    %977 = vmatprep.subr.bf16.mxu0 0
    %978 = vmatpush1.bf16.msra.mxu0 0
    %979 = vmatprep.mubr.bf16.mxu0 0
    %980 = vmatmul.mubr.bf16.gmra.mrb[0].mxu0 %v942
    %v981 = vpop.f32.mrb[0].mxu0
    %v982 = vadd.f32 0.0, %v981
    %v983 = vpop.f32.mrb[0].mxu0
    %v984 = vpop.f32.mrb[0].mxu0
    %v985 = vadd.f32 0.0, %v984
    %v986 = vpop.f32.mrb[0].mxu0
    %987 = vmatprep.mubr.bf16.mxu0 0
    %988 = vmatmul.mubr.bf16.gmra.mrb[0].mxu0 %v945
    %v989 = vpop.f32.mrb[0].mxu0
    %v990 = vadd.f32 0.0, %v989
    %v991 = vpop.f32.mrb[0].mxu0
    %v992 = vpop.f32.mrb[0].mxu0
    %v993 = vadd.f32 0.0, %v992
    %v994 = vpop.f32.mrb[0].mxu0
    %995 = vdwg.mxu0
    %v998 = vunpack.c.l.b16 %v682
    %v999 = vunpack.c.l.b16 %v683
    %v1000 = vpack.c.b16 %v999, %v998
    %v1003 = vsel %vm448, %v680, 0
    %v1006 = vsel %vm448, %v681, 0
    %1008 = vmatprep.subr.bf16.mxu0 0
    %1009 = vmatpush1.bf16.msra.mxu0 %v1000
    %1010 = vmatprep.subr.bf16.mxu0 0
    %1011 = vmatpush1.bf16.msra.mxu0 0
    %1012 = vmatprep.subr.bf16.mxu0 0
    %1013 = vmatpush1.bf16.msra.mxu0 0
    %1014 = vmatprep.subr.bf16.mxu0 0
    %1015 = vmatpush1.bf16.msra.mxu0 0
    %1016 = vmatprep.subr.bf16.mxu0 0
    %1017 = vmatpush1.bf16.msra.mxu0 0
    %1018 = vmatprep.subr.bf16.mxu0 0
    %1019 = vmatpush1.bf16.msra.mxu0 0
    %1020 = vmatprep.subr.bf16.mxu0 0
    %1021 = vmatpush1.bf16.msra.mxu0 0
    %1022 = vmatprep.subr.bf16.mxu0 0
    %1023 = vmatpush1.bf16.msra.mxu0 0
    %1024 = vmatprep.subr.bf16.mxu0 0
    %1025 = vmatpush1.bf16.msra.mxu0 0
    %1026 = vmatprep.subr.bf16.mxu0 0
    %1027 = vmatpush1.bf16.msra.mxu0 0
    %1028 = vmatprep.subr.bf16.mxu0 0
    %1029 = vmatpush1.bf16.msra.mxu0 0
    %1030 = vmatprep.subr.bf16.mxu0 0
    %1031 = vmatpush1.bf16.msra.mxu0 0
    %1032 = vmatprep.subr.bf16.mxu0 0
    %1033 = vmatpush1.bf16.msra.mxu0 0
    %1034 = vmatprep.subr.bf16.mxu0 0
    %1035 = vmatpush1.bf16.msra.mxu0 0
    %1036 = vmatprep.subr.bf16.mxu0 0
    %1037 = vmatpush1.bf16.msra.mxu0 0
    %1038 = vmatprep.subr.bf16.mxu0 0
    %1039 = vmatpush1.bf16.msra.mxu0 0
    %1040 = vmatprep.mubr.bf16.mxu0 0
    %1041 = vmatmul.mubr.bf16.gmra.mrb[0].mxu0 %v1003
    %v1042 = vpop.f32.mrb[0].mxu0
    %v1043 = vadd.f32 %v982, %v1042
    %v1044 = vpop.f32.mrb[0].mxu0
    %v1045 = vpop.f32.mrb[0].mxu0
    %v1046 = vadd.f32 %v985, %v1045
    %v1047 = vpop.f32.mrb[0].mxu0
    %1048 = vmatprep.mubr.bf16.mxu0 0
    %1049 = vmatmul.mubr.bf16.gmra.mrb[0].mxu0 %v1006
    %v1050 = vpop.f32.mrb[0].mxu0
    %v1051 = vadd.f32 %v990, %v1050
    %v1052 = vpop.f32.mrb[0].mxu0
    %v1053 = vpop.f32.mrb[0].mxu0
    %v1054 = vadd.f32 %v993, %v1053
    %v1055 = vpop.f32.mrb[0].mxu0
    %1056 = vdwg.mxu0
    %s1057 = scalar_lea.vmem %s12, 32
    %v1058 = vld [vmem:[%s1057] sm:$0xff]
    %v1059 = vld [vmem:[%s1057 + $0x8] sm:$0xff]
    %1060 = vrot.lane.b32.xlu0 %v439, 96
    %v1061 = vpop.permute.xlu0 %1060
    %1062 = vrot.lane.b32.xlu0 %v439, 32
    %v1063 = vpop.permute.xlu0 %1062
    %v1065 = vsel %vm448, %v1061, 0
    %v1068 = vsel %vm448, %v1063, 0
    %1070 = vmatprep.subr.bf16.mxu0 0
    %1071 = vmatpush1.bf16.xpose.msra.mxu0 %v1068
    %1072 = vmatprep.subr.bf16.mxu0 0
    %1073 = vmatpush1.bf16.xpose.msra.mxu0 0
    %1074 = vmatprep.subr.bf16.mxu0 0
    %1075 = vmatpush1.bf16.xpose.msra.mxu0 0
    %1076 = vmatprep.subr.bf16.mxu0 0
    %1077 = vmatpush1.bf16.xpose.msra.mxu0 0
    %1078 = vmatprep.subr.bf16.mxu0 0
    %1079 = vmatpush1.bf16.xpose.msra.mxu0 0
    %1080 = vmatprep.subr.bf16.mxu0 0
    %1081 = vmatpush1.bf16.xpose.msra.mxu0 0
    %1082 = vmatprep.subr.bf16.mxu0 0
    %1083 = vmatpush1.bf16.xpose.msra.mxu0 0
    %1084 = vmatprep.subr.bf16.mxu0 0
    %1085 = vmatpush1.bf16.xpose.msra.mxu0 0
    %1086 = vmatprep.subr.bf16.mxu0 0
    %1087 = vmatpush1.bf16.xpose.msra.mxu0 0
    %1088 = vmatprep.subr.bf16.mxu0 0
    %1089 = vmatpush1.bf16.xpose.msra.mxu0 0
    %1090 = vmatprep.subr.bf16.mxu0 0
    %1091 = vmatpush1.bf16.xpose.msra.mxu0 0
    %1092 = vmatprep.subr.bf16.mxu0 0
    %1093 = vmatpush1.bf16.xpose.msra.mxu0 0
    %1094 = vmatprep.subr.bf16.mxu0 0
    %1095 = vmatpush1.bf16.xpose.msra.mxu0 0
    %1096 = vmatprep.subr.bf16.mxu0 0
    %1097 = vmatpush1.bf16.xpose.msra.mxu0 0
    %1098 = vmatprep.subr.bf16.mxu0 0
    %1099 = vmatpush1.bf16.xpose.msra.mxu0 0
    %1100 = vmatprep.subr.bf16.mxu0 0
    %1101 = vmatpush1.bf16.xpose.msra.mxu0 0
    %1102 = vmatprep.mubr.bf16.mxu0 0
    %1103 = vmatmul.mubr.bf16.gmra.mrb[0].mxu0 %v1065
    %v1104 = vpop.f32.mrb[0].mxu0
    %v1105 = vadd.f32 %v1058, %v1104
    %v1106 = vpop.f32.mrb[0].mxu0
    %v1107 = vpop.f32.mrb[0].mxu0
    %v1108 = vadd.f32 %v1059, %v1107
    %v1109 = vpop.f32.mrb[0].mxu0
    %1110 = vdwg.mxu0
    %1111 = vrot.lane.b32.xlu0 %v440, 96
    %v1112 = vpop.permute.xlu0 %1111
    %1113 = vrot.lane.b32.xlu0 %v440, 32
    %v1114 = vpop.permute.xlu0 %1113
    %v1116 = vsel %vm448, %v1112, 0
    %v1119 = vsel %vm448, %v1114, 0
    %1121 = vmatprep.subr.bf16.mxu0 0
    %1122 = vmatpush1.bf16.xpose.msra.mxu0 %v1119
    %1123 = vmatprep.subr.bf16.mxu0 0
    %1124 = vmatpush1.bf16.xpose.msra.mxu0 0
    %1125 = vmatprep.subr.bf16.mxu0 0
    %1126 = vmatpush1.bf16.xpose.msra.mxu0 0
    %1127 = vmatprep.subr.bf16.mxu0 0
    %1128 = vmatpush1.bf16.xpose.msra.mxu0 0
    %1129 = vmatprep.subr.bf16.mxu0 0
    %1130 = vmatpush1.bf16.xpose.msra.mxu0 0
    %1131 = vmatprep.subr.bf16.mxu0 0
    %1132 = vmatpush1.bf16.xpose.msra.mxu0 0
    %1133 = vmatprep.subr.bf16.mxu0 0
    %1134 = vmatpush1.bf16.xpose.msra.mxu0 0
    %1135 = vmatprep.subr.bf16.mxu0 0
    %1136 = vmatpush1.bf16.xpose.msra.mxu0 0
    %1137 = vmatprep.subr.bf16.mxu0 0
    %1138 = vmatpush1.bf16.xpose.msra.mxu0 0
    %1139 = vmatprep.subr.bf16.mxu0 0
    %1140 = vmatpush1.bf16.xpose.msra.mxu0 0
    %1141 = vmatprep.subr.bf16.mxu0 0
    %1142 = vmatpush1.bf16.xpose.msra.mxu0 0
    %1143 = vmatprep.subr.bf16.mxu0 0
    %1144 = vmatpush1.bf16.xpose.msra.mxu0 0
    %1145 = vmatprep.subr.bf16.mxu0 0
    %1146 = vmatpush1.bf16.xpose.msra.mxu0 0
    %1147 = vmatprep.subr.bf16.mxu0 0
    %1148 = vmatpush1.bf16.xpose.msra.mxu0 0
    %1149 = vmatprep.subr.bf16.mxu0 0
    %1150 = vmatpush1.bf16.xpose.msra.mxu0 0
    %1151 = vmatprep.subr.bf16.mxu0 0
    %1152 = vmatpush1.bf16.xpose.msra.mxu0 0
    %1153 = vmatprep.mubr.bf16.mxu0 0
    %1154 = vmatmul.mubr.bf16.gmra.mrb[0].mxu0 %v1116
    %v1155 = vpop.f32.mrb[0].mxu0
    %v1156 = vadd.f32 %v1058, %v1155
    %v1157 = vpop.f32.mrb[0].mxu0
    %v1158 = vpop.f32.mrb[0].mxu0
    %v1159 = vadd.f32 %v1059, %v1158
    %v1160 = vpop.f32.mrb[0].mxu0
    %1161 = vdwg.mxu0
    %v1162 = vsel %vm448, %v1105, -inf
    %1163 = vmax.xlane.f32.xlu0 %v1162
    %v1164 = vpop.xlane.xlu0 %1163
    %v1165 = vsel %vm448, %v1108, -inf
    %1166 = vmax.xlane.f32.xlu0 %v1165
    %v1167 = vpop.xlane.xlu0 %1166
    %v1168 = vsel %vm448, %v1156, -inf
    %1169 = vmax.xlane.f32.xlu0 %v1168
    %v1170 = vpop.xlane.xlu0 %1169
    %v1171 = vsel %vm448, %v1159, -inf
    %1172 = vmax.xlane.f32.xlu0 %v1171
    %v1173 = vpop.xlane.xlu0 %1172
    %v1174 = vsub.f32 %v1105, %v1164
    %v1175 = vsub.f32 %v1108, %v1167
    %v1176 = vsub.f32 %v1156, %v1170
    %v1177 = vsub.f32 %v1159, %v1173
    %v1178 = vmul.f32 %v1174, 1.442695
    %v1179 = vpow.pop %v1178
    %v1180 = vmul.f32 %v1175, 1.442695
    %v1181 = vpow.pop %v1180
    %v1182 = vmul.f32 %v1176, 1.442695
    %v1183 = vpow.pop %v1182
    %v1184 = vmul.f32 %v1177, 1.442695
    %v1185 = vpow.pop %v1184
    %v1186 = vsel %vm448, %v1179, 0.0
    %1187 = vadd.xlane.f32.xlu0 %v1186
    %v1188 = vpop.xlane.xlu0 %1187
    %v1189 = vsel %vm448, %v1181, 0.0
    %1190 = vadd.xlane.f32.xlu0 %v1189
    %v1191 = vpop.xlane.xlu0 %1190
    %v1192 = vsel %vm448, %v1183, 0.0
    %1193 = vadd.xlane.f32.xlu0 %v1192
    %v1194 = vpop.xlane.xlu0 %1193
    %v1195 = vsel %vm448, %v1185, 0.0
    %1196 = vadd.xlane.f32.xlu0 %v1195
    %v1197 = vpop.xlane.xlu0 %1196
    %v1198 = vrcp.pop %v1188
    %v1199 = vrcp.pop %v1191
    %v1200 = vrcp.pop %v1194
    %v1201 = vrcp.pop %v1197
    %v1202 = vmul.f32 %v1179, %v1198
    %v1203 = vmul.f32 %v1181, %v1199
    %v1204 = vmul.f32 %v1183, %v1200
    %v1205 = vmul.f32 %v1185, %v1201
    %v1206 = vpack.c.bf16 %v1203, %v1202
    %v1207 = vpack.c.bf16 %v1205, %v1204
    %1208 = vrot.lane.b32.xlu0 %v441, 96
    %v1209 = vpop.permute.xlu0 %1208
    %v1212 = vsel %vm448, %v1206, 0
    %1214 = vmatprep.subr.bf16.mxu0 0
    %1215 = vmatpush1.bf16.msra.mxu0 %v1209
    %1216 = vmatprep.subr.bf16.mxu0 0
    %1217 = vmatpush1.bf16.msra.mxu0 0
    %1218 = vmatprep.subr.bf16.mxu0 0
    %1219 = vmatpush1.bf16.msra.mxu0 0
    %1220 = vmatprep.subr.bf16.mxu0 0
    %1221 = vmatpush1.bf16.msra.mxu0 0
    %1222 = vmatprep.subr.bf16.mxu0 0
    %1223 = vmatpush1.bf16.msra.mxu0 0
    %1224 = vmatprep.subr.bf16.mxu0 0
    %1225 = vmatpush1.bf16.msra.mxu0 0
    %1226 = vmatprep.subr.bf16.mxu0 0
    %1227 = vmatpush1.bf16.msra.mxu0 0
    %1228 = vmatprep.subr.bf16.mxu0 0
    %1229 = vmatpush1.bf16.msra.mxu0 0
    %1230 = vmatprep.subr.bf16.mxu0 0
    %1231 = vmatpush1.bf16.msra.mxu0 0
    %1232 = vmatprep.subr.bf16.mxu0 0
    %1233 = vmatpush1.bf16.msra.mxu0 0
    %1234 = vmatprep.subr.bf16.mxu0 0
    %1235 = vmatpush1.bf16.msra.mxu0 0
    %1236 = vmatprep.subr.bf16.mxu0 0
    %1237 = vmatpush1.bf16.msra.mxu0 0
    %1238 = vmatprep.subr.bf16.mxu0 0
    %1239 = vmatpush1.bf16.msra.mxu0 0
    %1240 = vmatprep.subr.bf16.mxu0 0
    %1241 = vmatpush1.bf16.msra.mxu0 0
    %1242 = vmatprep.subr.bf16.mxu0 0
    %1243 = vmatpush1.bf16.msra.mxu0 0
    %1244 = vmatprep.subr.bf16.mxu0 0
    %1245 = vmatpush1.bf16.msra.mxu0 0
    %1246 = vmatprep.mubr.bf16.mxu0 0
    %1247 = vmatmul.mubr.bf16.gmra.mrb[0].mxu0 %v1212
    %v1248 = vpop.f32.mrb[0].mxu0
    %v1249 = vadd.f32 0.0, %v1248
    %v1250 = vpop.f32.mrb[0].mxu0
    %v1251 = vpop.f32.mrb[0].mxu0
    %v1252 = vadd.f32 0.0, %v1251
    %v1253 = vpop.f32.mrb[0].mxu0
    %1254 = vdwg.mxu0
    %1255 = vrot.lane.b32.xlu0 %v442, 96
    %v1256 = vpop.permute.xlu0 %1255
    %v1259 = vsel %vm448, %v1207, 0
    %1261 = vmatprep.subr.bf16.mxu0 0
    %1262 = vmatpush1.bf16.msra.mxu0 %v1256
    %1263 = vmatprep.subr.bf16.mxu0 0
    %1264 = vmatpush1.bf16.msra.mxu0 0
    %1265 = vmatprep.subr.bf16.mxu0 0
    %1266 = vmatpush1.bf16.msra.mxu0 0
    %1267 = vmatprep.subr.bf16.mxu0 0
    %1268 = vmatpush1.bf16.msra.mxu0 0
    %1269 = vmatprep.subr.bf16.mxu0 0
    %1270 = vmatpush1.bf16.msra.mxu0 0
    %1271 = vmatprep.subr.bf16.mxu0 0
    %1272 = vmatpush1.bf16.msra.mxu0 0
    %1273 = vmatprep.subr.bf16.mxu0 0
    %1274 = vmatpush1.bf16.msra.mxu0 0
    %1275 = vmatprep.subr.bf16.mxu0 0
    %1276 = vmatpush1.bf16.msra.mxu0 0
    %1277 = vmatprep.subr.bf16.mxu0 0
    %1278 = vmatpush1.bf16.msra.mxu0 0
    %1279 = vmatprep.subr.bf16.mxu0 0
    %1280 = vmatpush1.bf16.msra.mxu0 0
    %1281 = vmatprep.subr.bf16.mxu0 0
    %1282 = vmatpush1.bf16.msra.mxu0 0
    %1283 = vmatprep.subr.bf16.mxu0 0
    %1284 = vmatpush1.bf16.msra.mxu0 0
    %1285 = vmatprep.subr.bf16.mxu0 0
    %1286 = vmatpush1.bf16.msra.mxu0 0
    %1287 = vmatprep.subr.bf16.mxu0 0
    %1288 = vmatpush1.bf16.msra.mxu0 0
    %1289 = vmatprep.subr.bf16.mxu0 0
    %1290 = vmatpush1.bf16.msra.mxu0 0
    %1291 = vmatprep.subr.bf16.mxu0 0
    %1292 = vmatpush1.bf16.msra.mxu0 0
    %1293 = vmatprep.mubr.bf16.mxu0 0
    %1294 = vmatmul.mubr.bf16.gmra.mrb[0].mxu0 %v1259
    %v1295 = vpop.f32.mrb[0].mxu0
    %v1296 = vadd.f32 0.0, %v1295
    %v1297 = vpop.f32.mrb[0].mxu0
    %v1298 = vpop.f32.mrb[0].mxu0
    %v1299 = vadd.f32 0.0, %v1298
    %v1300 = vpop.f32.mrb[0].mxu0
    %1301 = vdwg.mxu0
    %v1302 = vpack.c.bf16 %v1252, %v1249
    %v1303 = vpack.c.bf16 %v1299, %v1296
    %v1304 = vld [vmem:[#allocation8 + $0x10] sm:$0xf]
    %v1305 = vld [vmem:[#allocation8 + $0x14] sm:$0xf]
    %v1308 = vunpack.c.l.b16 %v1304
    %v1309 = vunpack.c.l.b16 %v1305
    %v1310 = vpack.c.b16 %v1309, %v1308
    %v1313 = vsel %vm448, %v1302, 0
    %v1316 = vsel %vm448, %v1303, 0
    %1318 = vmatprep.subr.bf16.mxu0 0
    %1319 = vmatpush1.bf16.msra.mxu0 %v1310
    %1320 = vmatprep.subr.bf16.mxu0 0
    %1321 = vmatpush1.bf16.msra.mxu0 0
    %1322 = vmatprep.subr.bf16.mxu0 0
    %1323 = vmatpush1.bf16.msra.mxu0 0
    %1324 = vmatprep.subr.bf16.mxu0 0
    %1325 = vmatpush1.bf16.msra.mxu0 0
    %1326 = vmatprep.subr.bf16.mxu0 0
    %1327 = vmatpush1.bf16.msra.mxu0 0
    %1328 = vmatprep.subr.bf16.mxu0 0
    %1329 = vmatpush1.bf16.msra.mxu0 0
    %1330 = vmatprep.subr.bf16.mxu0 0
    %1331 = vmatpush1.bf16.msra.mxu0 0
    %1332 = vmatprep.subr.bf16.mxu0 0
    %1333 = vmatpush1.bf16.msra.mxu0 0
    %1334 = vmatprep.subr.bf16.mxu0 0
    %1335 = vmatpush1.bf16.msra.mxu0 0
    %1336 = vmatprep.subr.bf16.mxu0 0
    %1337 = vmatpush1.bf16.msra.mxu0 0
    %1338 = vmatprep.subr.bf16.mxu0 0
    %1339 = vmatpush1.bf16.msra.mxu0 0
    %1340 = vmatprep.subr.bf16.mxu0 0
    %1341 = vmatpush1.bf16.msra.mxu0 0
    %1342 = vmatprep.subr.bf16.mxu0 0
    %1343 = vmatpush1.bf16.msra.mxu0 0
    %1344 = vmatprep.subr.bf16.mxu0 0
    %1345 = vmatpush1.bf16.msra.mxu0 0
    %1346 = vmatprep.subr.bf16.mxu0 0
    %1347 = vmatpush1.bf16.msra.mxu0 0
    %1348 = vmatprep.subr.bf16.mxu0 0
    %1349 = vmatpush1.bf16.msra.mxu0 0
    %1350 = vmatprep.mubr.bf16.mxu0 0
    %1351 = vmatmul.mubr.bf16.gmra.mrb[0].mxu0 %v1313
    %v1352 = vpop.f32.mrb[0].mxu0
    %v1353 = vadd.f32 0.0, %v1352
    %v1354 = vpop.f32.mrb[0].mxu0
    %v1355 = vpop.f32.mrb[0].mxu0
    %v1356 = vadd.f32 0.0, %v1355
    %v1357 = vpop.f32.mrb[0].mxu0
    %1358 = vmatprep.mubr.bf16.mxu0 0
    %1359 = vmatmul.mubr.bf16.gmra.mrb[0].mxu0 %v1316
    %v1360 = vpop.f32.mrb[0].mxu0
    %v1361 = vadd.f32 0.0, %v1360
    %v1362 = vpop.f32.mrb[0].mxu0
    %v1363 = vpop.f32.mrb[0].mxu0
    %v1364 = vadd.f32 0.0, %v1363
    %v1365 = vpop.f32.mrb[0].mxu0
    %1366 = vdwg.mxu0
    %v1367 = vadd.f32 %v1043, %v1353
    %v1368 = vadd.f32 %v1046, %v1356
    %v1369 = vadd.f32 %v1051, %v1361
    %v1370 = vadd.f32 %v1054, %v1364
    %s1371 = scalar_lea.vmem %s12, 48
    %v1372 = vld [vmem:[%s1371] sm:$0xff]
    %v1373 = vld [vmem:[%s1371 + $0x8] sm:$0xff]
    %1374 = vrot.lane.b32.xlu0 %v439, 80
    %v1375 = vpop.permute.xlu0 %1374
    %1376 = vrot.lane.b32.xlu0 %v439, 16
    %v1377 = vpop.permute.xlu0 %1376
    %v1379 = vsel %vm448, %v1375, 0
    %v1382 = vsel %vm448, %v1377, 0
    %1384 = vmatprep.subr.bf16.mxu0 0
    %1385 = vmatpush1.bf16.xpose.msra.mxu0 %v1382
    %1386 = vmatprep.subr.bf16.mxu0 0
    %1387 = vmatpush1.bf16.xpose.msra.mxu0 0
    %1388 = vmatprep.subr.bf16.mxu0 0
    %1389 = vmatpush1.bf16.xpose.msra.mxu0 0
    %1390 = vmatprep.subr.bf16.mxu0 0
    %1391 = vmatpush1.bf16.xpose.msra.mxu0 0
    %1392 = vmatprep.subr.bf16.mxu0 0
    %1393 = vmatpush1.bf16.xpose.msra.mxu0 0
    %1394 = vmatprep.subr.bf16.mxu0 0
    %1395 = vmatpush1.bf16.xpose.msra.mxu0 0
    %1396 = vmatprep.subr.bf16.mxu0 0
    %1397 = vmatpush1.bf16.xpose.msra.mxu0 0
    %1398 = vmatprep.subr.bf16.mxu0 0
    %1399 = vmatpush1.bf16.xpose.msra.mxu0 0
    %1400 = vmatprep.subr.bf16.mxu0 0
    %1401 = vmatpush1.bf16.xpose.msra.mxu0 0
    %1402 = vmatprep.subr.bf16.mxu0 0
    %1403 = vmatpush1.bf16.xpose.msra.mxu0 0
    %1404 = vmatprep.subr.bf16.mxu0 0
    %1405 = vmatpush1.bf16.xpose.msra.mxu0 0
    %1406 = vmatprep.subr.bf16.mxu0 0
    %1407 = vmatpush1.bf16.xpose.msra.mxu0 0
    %1408 = vmatprep.subr.bf16.mxu0 0
    %1409 = vmatpush1.bf16.xpose.msra.mxu0 0
    %1410 = vmatprep.subr.bf16.mxu0 0
    %1411 = vmatpush1.bf16.xpose.msra.mxu0 0
    %1412 = vmatprep.subr.bf16.mxu0 0
    %1413 = vmatpush1.bf16.xpose.msra.mxu0 0
    %1414 = vmatprep.subr.bf16.mxu0 0
    %1415 = vmatpush1.bf16.xpose.msra.mxu0 0
    %1416 = vmatprep.mubr.bf16.mxu0 0
    %1417 = vmatmul.mubr.bf16.gmra.mrb[0].mxu0 %v1379
    %v1418 = vpop.f32.mrb[0].mxu0
    %v1419 = vadd.f32 %v1372, %v1418
    %v1420 = vpop.f32.mrb[0].mxu0
    %v1421 = vpop.f32.mrb[0].mxu0
    %v1422 = vadd.f32 %v1373, %v1421
    %v1423 = vpop.f32.mrb[0].mxu0
    %1424 = vdwg.mxu0
    %1425 = vrot.lane.b32.xlu0 %v440, 80
    %v1426 = vpop.permute.xlu0 %1425
    %1427 = vrot.lane.b32.xlu0 %v440, 16
    %v1428 = vpop.permute.xlu0 %1427
    %v1430 = vsel %vm448, %v1426, 0
    %v1433 = vsel %vm448, %v1428, 0
    %1435 = vmatprep.subr.bf16.mxu0 0
    %1436 = vmatpush1.bf16.xpose.msra.mxu0 %v1433
    %1437 = vmatprep.subr.bf16.mxu0 0
    %1438 = vmatpush1.bf16.xpose.msra.mxu0 0
    %1439 = vmatprep.subr.bf16.mxu0 0
    %1440 = vmatpush1.bf16.xpose.msra.mxu0 0
    %1441 = vmatprep.subr.bf16.mxu0 0
    %1442 = vmatpush1.bf16.xpose.msra.mxu0 0
    %1443 = vmatprep.subr.bf16.mxu0 0
    %1444 = vmatpush1.bf16.xpose.msra.mxu0 0
    %1445 = vmatprep.subr.bf16.mxu0 0
    %1446 = vmatpush1.bf16.xpose.msra.mxu0 0
    %1447 = vmatprep.subr.bf16.mxu0 0
    %1448 = vmatpush1.bf16.xpose.msra.mxu0 0
    %1449 = vmatprep.subr.bf16.mxu0 0
    %1450 = vmatpush1.bf16.xpose.msra.mxu0 0
    %1451 = vmatprep.subr.bf16.mxu0 0
    %1452 = vmatpush1.bf16.xpose.msra.mxu0 0
    %1453 = vmatprep.subr.bf16.mxu0 0
    %1454 = vmatpush1.bf16.xpose.msra.mxu0 0
    %1455 = vmatprep.subr.bf16.mxu0 0
    %1456 = vmatpush1.bf16.xpose.msra.mxu0 0
    %1457 = vmatprep.subr.bf16.mxu0 0
    %1458 = vmatpush1.bf16.xpose.msra.mxu0 0
    %1459 = vmatprep.subr.bf16.mxu0 0
    %1460 = vmatpush1.bf16.xpose.msra.mxu0 0
    %1461 = vmatprep.subr.bf16.mxu0 0
    %1462 = vmatpush1.bf16.xpose.msra.mxu0 0
    %1463 = vmatprep.subr.bf16.mxu0 0
    %1464 = vmatpush1.bf16.xpose.msra.mxu0 0
    %1465 = vmatprep.subr.bf16.mxu0 0
    %1466 = vmatpush1.bf16.xpose.msra.mxu0 0
    %1467 = vmatprep.mubr.bf16.mxu0 0
    %1468 = vmatmul.mubr.bf16.gmra.mrb[0].mxu0 %v1430
    %v1469 = vpop.f32.mrb[0].mxu0
    %v1470 = vadd.f32 %v1372, %v1469
    %v1471 = vpop.f32.mrb[0].mxu0
    %v1472 = vpop.f32.mrb[0].mxu0
    %v1473 = vadd.f32 %v1373, %v1472
    %v1474 = vpop.f32.mrb[0].mxu0
    %1475 = vdwg.mxu0
    %v1476 = vsel %vm448, %v1419, -inf
    %1477 = vmax.xlane.f32.xlu0 %v1476
    %v1478 = vpop.xlane.xlu0 %1477
    %v1479 = vsel %vm448, %v1422, -inf
    %1480 = vmax.xlane.f32.xlu0 %v1479
    %v1481 = vpop.xlane.xlu0 %1480
    %v1482 = vsel %vm448, %v1470, -inf
    %1483 = vmax.xlane.f32.xlu0 %v1482
    %v1484 = vpop.xlane.xlu0 %1483
    %v1485 = vsel %vm448, %v1473, -inf
    %1486 = vmax.xlane.f32.xlu0 %v1485
    %v1487 = vpop.xlane.xlu0 %1486
    %v1488 = vsub.f32 %v1419, %v1478
    %v1489 = vsub.f32 %v1422, %v1481
    %v1490 = vsub.f32 %v1470, %v1484
    %v1491 = vsub.f32 %v1473, %v1487
    %v1492 = vmul.f32 %v1488, 1.442695
    %v1493 = vpow.pop %v1492
    %v1494 = vmul.f32 %v1489, 1.442695
    %v1495 = vpow.pop %v1494
    %v1496 = vmul.f32 %v1490, 1.442695
    %v1497 = vpow.pop %v1496
    %v1498 = vmul.f32 %v1491, 1.442695
    %v1499 = vpow.pop %v1498
    %v1500 = vsel %vm448, %v1493, 0.0
    %1501 = vadd.xlane.f32.xlu0 %v1500
    %v1502 = vpop.xlane.xlu0 %1501
    %v1503 = vsel %vm448, %v1495, 0.0
    %1504 = vadd.xlane.f32.xlu0 %v1503
    %v1505 = vpop.xlane.xlu0 %1504
    %v1506 = vsel %vm448, %v1497, 0.0
    %1507 = vadd.xlane.f32.xlu0 %v1506
    %v1508 = vpop.xlane.xlu0 %1507
    %v1509 = vsel %vm448, %v1499, 0.0
    %1510 = vadd.xlane.f32.xlu0 %v1509
    %v1511 = vpop.xlane.xlu0 %1510
    %v1512 = vrcp.pop %v1502
    %v1513 = vrcp.pop %v1505
    %v1514 = vrcp.pop %v1508
    %v1515 = vrcp.pop %v1511
    %v1516 = vmul.f32 %v1493, %v1512
    %v1517 = vmul.f32 %v1495, %v1513
    %v1518 = vmul.f32 %v1497, %v1514
    %v1519 = vmul.f32 %v1499, %v1515
    %v1520 = vpack.c.bf16 %v1517, %v1516
    %v1521 = vpack.c.bf16 %v1519, %v1518
    %1522 = vrot.lane.b32.xlu0 %v441, 80
    %v1523 = vpop.permute.xlu0 %1522
    %v1526 = vsel %vm448, %v1520, 0
    %1528 = vmatprep.subr.bf16.mxu0 0
    %1529 = vmatpush1.bf16.msra.mxu0 %v1523
    %1530 = vmatprep.subr.bf16.mxu0 0
    %1531 = vmatpush1.bf16.msra.mxu0 0
    %1532 = vmatprep.subr.bf16.mxu0 0
    %1533 = vmatpush1.bf16.msra.mxu0 0
    %1534 = vmatprep.subr.bf16.mxu0 0
    %1535 = vmatpush1.bf16.msra.mxu0 0
    %1536 = vmatprep.subr.bf16.mxu0 0
    %1537 = vmatpush1.bf16.msra.mxu0 0
    %1538 = vmatprep.subr.bf16.mxu0 0
    %1539 = vmatpush1.bf16.msra.mxu0 0
    %1540 = vmatprep.subr.bf16.mxu0 0
    %1541 = vmatpush1.bf16.msra.mxu0 0
    %1542 = vmatprep.subr.bf16.mxu0 0
    %1543 = vmatpush1.bf16.msra.mxu0 0
    %1544 = vmatprep.subr.bf16.mxu0 0
    %1545 = vmatpush1.bf16.msra.mxu0 0
    %1546 = vmatprep.subr.bf16.mxu0 0
    %1547 = vmatpush1.bf16.msra.mxu0 0
    %1548 = vmatprep.subr.bf16.mxu0 0
    %1549 = vmatpush1.bf16.msra.mxu0 0
    %1550 = vmatprep.subr.bf16.mxu0 0
    %1551 = vmatpush1.bf16.msra.mxu0 0
    %1552 = vmatprep.subr.bf16.mxu0 0
    %1553 = vmatpush1.bf16.msra.mxu0 0
    %1554 = vmatprep.subr.bf16.mxu0 0
    %1555 = vmatpush1.bf16.msra.mxu0 0
    %1556 = vmatprep.subr.bf16.mxu0 0
    %1557 = vmatpush1.bf16.msra.mxu0 0
    %1558 = vmatprep.subr.bf16.mxu0 0
    %1559 = vmatpush1.bf16.msra.mxu0 0
    %1560 = vmatprep.mubr.bf16.mxu0 0
    %1561 = vmatmul.mubr.bf16.gmra.mrb[0].mxu0 %v1526
    %v1562 = vpop.f32.mrb[0].mxu0
    %v1563 = vadd.f32 0.0, %v1562
    %v1564 = vpop.f32.mrb[0].mxu0
    %v1565 = vpop.f32.mrb[0].mxu0
    %v1566 = vadd.f32 0.0, %v1565
    %v1567 = vpop.f32.mrb[0].mxu0
    %1568 = vdwg.mxu0
    %1569 = vrot.lane.b32.xlu0 %v442, 80
    %v1570 = vpop.permute.xlu0 %1569
    %v1573 = vsel %vm448, %v1521, 0
    %1575 = vmatprep.subr.bf16.mxu0 0
    %1576 = vmatpush1.bf16.msra.mxu0 %v1570
    %1577 = vmatprep.subr.bf16.mxu0 0
    %1578 = vmatpush1.bf16.msra.mxu0 0
    %1579 = vmatprep.subr.bf16.mxu0 0
    %1580 = vmatpush1.bf16.msra.mxu0 0
    %1581 = vmatprep.subr.bf16.mxu0 0
    %1582 = vmatpush1.bf16.msra.mxu0 0
    %1583 = vmatprep.subr.bf16.mxu0 0
    %1584 = vmatpush1.bf16.msra.mxu0 0
    %1585 = vmatprep.subr.bf16.mxu0 0
    %1586 = vmatpush1.bf16.msra.mxu0 0
    %1587 = vmatprep.subr.bf16.mxu0 0
    %1588 = vmatpush1.bf16.msra.mxu0 0
    %1589 = vmatprep.subr.bf16.mxu0 0
    %1590 = vmatpush1.bf16.msra.mxu0 0
    %1591 = vmatprep.subr.bf16.mxu0 0
    %1592 = vmatpush1.bf16.msra.mxu0 0
    %1593 = vmatprep.subr.bf16.mxu0 0
    %1594 = vmatpush1.bf16.msra.mxu0 0
    %1595 = vmatprep.subr.bf16.mxu0 0
    %1596 = vmatpush1.bf16.msra.mxu0 0
    %1597 = vmatprep.subr.bf16.mxu0 0
    %1598 = vmatpush1.bf16.msra.mxu0 0
    %1599 = vmatprep.subr.bf16.mxu0 0
    %1600 = vmatpush1.bf16.msra.mxu0 0
    %1601 = vmatprep.subr.bf16.mxu0 0
    %1602 = vmatpush1.bf16.msra.mxu0 0
    %1603 = vmatprep.subr.bf16.mxu0 0
    %1604 = vmatpush1.bf16.msra.mxu0 0
    %1605 = vmatprep.subr.bf16.mxu0 0
    %1606 = vmatpush1.bf16.msra.mxu0 0
    %1607 = vmatprep.mubr.bf16.mxu0 0
    %1608 = vmatmul.mubr.bf16.gmra.mrb[0].mxu0 %v1573
    %v1609 = vpop.f32.mrb[0].mxu0
    %v1610 = vadd.f32 0.0, %v1609
    %v1611 = vpop.f32.mrb[0].mxu0
    %v1612 = vpop.f32.mrb[0].mxu0
    %v1613 = vadd.f32 0.0, %v1612
    %v1614 = vpop.f32.mrb[0].mxu0
    %1615 = vdwg.mxu0
    %v1616 = vpack.c.bf16 %v1566, %v1563
    %v1617 = vpack.c.bf16 %v1613, %v1610
    %v1618 = vld [vmem:[#allocation8 + $0x18] sm:$0xf]
    %v1619 = vld [vmem:[#allocation8 + $0x1c] sm:$0xf]
    %v1622 = vunpack.c.l.b16 %v1618
    %v1623 = vunpack.c.l.b16 %v1619
    %v1624 = vpack.c.b16 %v1623, %v1622
    %v1627 = vsel %vm448, %v1616, 0
    %v1630 = vsel %vm448, %v1617, 0
    %1632 = vmatprep.subr.bf16.mxu0 0
    %1633 = vmatpush1.bf16.msra.mxu0 %v1624
    %1634 = vmatprep.subr.bf16.mxu0 0
    %1635 = vmatpush1.bf16.msra.mxu0 0
    %1636 = vmatprep.subr.bf16.mxu0 0
    %1637 = vmatpush1.bf16.msra.mxu0 0
    %1638 = vmatprep.subr.bf16.mxu0 0
    %1639 = vmatpush1.bf16.msra.mxu0 0
    %1640 = vmatprep.subr.bf16.mxu0 0
    %1641 = vmatpush1.bf16.msra.mxu0 0
    %1642 = vmatprep.subr.bf16.mxu0 0
    %1643 = vmatpush1.bf16.msra.mxu0 0
    %1644 = vmatprep.subr.bf16.mxu0 0
    %1645 = vmatpush1.bf16.msra.mxu0 0
    %1646 = vmatprep.subr.bf16.mxu0 0
    %1647 = vmatpush1.bf16.msra.mxu0 0
    %1648 = vmatprep.subr.bf16.mxu0 0
    %1649 = vmatpush1.bf16.msra.mxu0 0
    %1650 = vmatprep.subr.bf16.mxu0 0
    %1651 = vmatpush1.bf16.msra.mxu0 0
    %1652 = vmatprep.subr.bf16.mxu0 0
    %1653 = vmatpush1.bf16.msra.mxu0 0
    %1654 = vmatprep.subr.bf16.mxu0 0
    %1655 = vmatpush1.bf16.msra.mxu0 0
    %1656 = vmatprep.subr.bf16.mxu0 0
    %1657 = vmatpush1.bf16.msra.mxu0 0
    %1658 = vmatprep.subr.bf16.mxu0 0
    %1659 = vmatpush1.bf16.msra.mxu0 0
    %1660 = vmatprep.subr.bf16.mxu0 0
    %1661 = vmatpush1.bf16.msra.mxu0 0
    %1662 = vmatprep.subr.bf16.mxu0 0
    %1663 = vmatpush1.bf16.msra.mxu0 0
    %1664 = vmatprep.mubr.bf16.mxu0 0
    %1665 = vmatmul.mubr.bf16.gmra.mrb[0].mxu0 %v1627
    %v1666 = vpop.f32.mrb[0].mxu0
    %v1667 = vadd.f32 0.0, %v1666
    %v1668 = vpop.f32.mrb[0].mxu0
    %v1669 = vpop.f32.mrb[0].mxu0
    %v1670 = vadd.f32 0.0, %v1669
    %v1671 = vpop.f32.mrb[0].mxu0
    %1672 = vmatprep.mubr.bf16.mxu0 0
    %1673 = vmatmul.mubr.bf16.gmra.mrb[0].mxu0 %v1630
    %v1674 = vpop.f32.mrb[0].mxu0
    %v1675 = vadd.f32 0.0, %v1674
    %v1676 = vpop.f32.mrb[0].mxu0
    %v1677 = vpop.f32.mrb[0].mxu0
    %v1678 = vadd.f32 0.0, %v1677
    %v1679 = vpop.f32.mrb[0].mxu0
    %1680 = vdwg.mxu0
    %v1681 = vadd.f32 %v1367, %v1667
    %v1682 = vadd.f32 %v1368, %v1670
    %v1683 = vadd.f32 %v1369, %v1675
    %v1684 = vadd.f32 %v1370, %v1678
    %v1685 = vadd.f32 %v250, %v1681
    %v1686 = vadd.f32 %v251, %v1682
    %v1687 = vadd.f32 %v252, %v1683
    %v1688 = vadd.f32 %v253, %v1684
    %v1689 = vld [vmem:[#allocation10] sm:$0x1]
    %v1691 = vlaneseq
    %v1692 = vshrl.u32 %v1691, 7
    %v1693 = vsub.s32 0, %v1692
    %v1694 = vrot.slane %v1689, %v1693
    %v1696 = vadd.f32 %v1685, %v1694
    %v1697 = vadd.f32 %v1686, %v1694
    %v1698 = vadd.f32 %v1687, %v1694
    %v1699 = vadd.f32 %v1688, %v1694
    %v1700 = vld [vmem:[#allocation11] sm:$0x1]
    %v1701 = vld [vmem:[#allocation13] sm:$0x1]
    %v1702 = vsel %vm256, %v1696, 0.0
    %1703 = vadd.xlane.f32.xlu0 %v1702
    %v1704 = vpop.xlane.xlu0 %1703
    %v1705 = vsel %vm256, %v1697, 0.0
    %1706 = vadd.xlane.f32.xlu0 %v1705
    %v1707 = vpop.xlane.xlu0 %1706
    %v1708 = vsel %vm256, %v1698, 0.0
    %1709 = vadd.xlane.f32.xlu0 %v1708
    %v1710 = vpop.xlane.xlu0 %1709
    %v1711 = vsel %vm256, %v1699, 0.0
    %1712 = vadd.xlane.f32.xlu0 %v1711
    %v1713 = vpop.xlane.xlu0 %1712
    %v1714 = vmul.f32 %v1704, %v269
    %v1715 = vmul.f32 %v1707, %v269
    %v1716 = vmul.f32 %v1710, %v269
    %v1717 = vmul.f32 %v1713, %v269
    %v1718 = vsub.f32 %v1696, %v1714
    %v1719 = vsub.f32 %v1697, %v1715
    %v1720 = vsub.f32 %v1698, %v1716
    %v1721 = vsub.f32 %v1699, %v1717
    %v1722 = vmul.f32 %v1718, %v1718
    %v1723 = vmul.f32 %v1719, %v1719
    %v1724 = vmul.f32 %v1720, %v1720
    %v1725 = vmul.f32 %v1721, %v1721
    %v1726 = vsel %vm256, %v1722, 0.0
    %1727 = vadd.xlane.f32.xlu0 %v1726
    %v1728 = vpop.xlane.xlu0 %1727
    %v1729 = vsel %vm256, %v1723, 0.0
    %1730 = vadd.xlane.f32.xlu0 %v1729
    %v1731 = vpop.xlane.xlu0 %1730
    %v1732 = vsel %vm256, %v1724, 0.0
    %1733 = vadd.xlane.f32.xlu0 %v1732
    %v1734 = vpop.xlane.xlu0 %1733
    %v1735 = vsel %vm256, %v1725, 0.0
    %1736 = vadd.xlane.f32.xlu0 %v1735
    %v1737 = vpop.xlane.xlu0 %1736
    %v1738 = vmul.f32 %v1728, %v269
    %v1739 = vmul.f32 %v1731, %v269
    %v1740 = vmul.f32 %v1734, %v269
    %v1741 = vmul.f32 %v1737, %v269
    %v1742 = vadd.f32 %v1738, 1e-05
    %v1743 = vadd.f32 %v1739, 1e-05
    %v1744 = vadd.f32 %v1740, 1e-05
    %v1745 = vadd.f32 %v1741, 1e-05
    %v1746 = vrsqrt.pop %v1742
    %v1747 = vrsqrt.pop %v1743
    %v1748 = vrsqrt.pop %v1744
    %v1749 = vrsqrt.pop %v1745
    %v1750 = vmul.f32 %v1718, %v1746
    %v1751 = vmul.f32 %v1719, %v1747
    %v1752 = vmul.f32 %v1720, %v1748
    %v1753 = vmul.f32 %v1721, %v1749
    %v1755 = vlaneseq
    %v1756 = vshrl.u32 %v1755, 7
    %v1757 = vsub.s32 0, %v1756
    %v1758 = vrot.slane %v1700, %v1757
    %v1760 = vmul.f32 %v1750, %v1758
    %v1761 = vmul.f32 %v1751, %v1758
    %v1762 = vmul.f32 %v1752, %v1758
    %v1763 = vmul.f32 %v1753, %v1758
    %v1765 = vlaneseq
    %v1766 = vshrl.u32 %v1765, 7
    %v1767 = vsub.s32 0, %v1766
    %v1768 = vrot.slane %v1701, %v1767
    %v1770 = vadd.f32 %v1760, %v1768
    %v1771 = vadd.f32 %v1761, %v1768
    %v1772 = vadd.f32 %v1762, %v1768
    %v1773 = vadd.f32 %v1763, %v1768
    %v1774 = vpack.c.bf16 %v1771, %v1770
    %v1775 = vpack.c.bf16 %v1773, %v1772
    %v1776 = vld [vmem:[%s8] sm:$0xff]
    %v1777 = vld [vmem:[%s8 + $0x8] sm:$0xff]
    %v1778 = vld [vmem:[%s8 + $0x10] sm:$0xff]
    %v1779 = vld [vmem:[%s8 + $0x18] sm:$0xff]
    %v1780 = vld [vmem:[%s8 + $0x20] sm:$0xff]
    %v1781 = vld [vmem:[%s8 + $0x28] sm:$0xff]
    %v1782 = vld [vmem:[%s8 + $0x30] sm:$0xff]
    %v1783 = vld [vmem:[%s8 + $0x38] sm:$0xff]
    %v1784 = vld [vmem:[%s9] sm:$0x3]
    %v1786 = vlaneseq
    %v1787 = vshrl.u32 %v1786, 7
    %v1788 = vsub.s32 0, %v1787
    %v1789 = vrot.slane %v1784, %v1788
    %v1790 = vlaneseq
    %v1791 = vshrl.u32 %v1790, 7
    %v1792 = vsub.s32 1, %v1791
    %v1793 = vrot.slane %v1784, %v1792
    %v1804 = vunpack.c.l.b16 %v1776
    %v1805 = vunpack.c.h.b16 %v1776
    %v1806 = vunpack.c.l.b16 %v1777
    %v1807 = vunpack.c.h.b16 %v1777
    %v1808 = vunpack.c.l.b16 %v1778
    %v1809 = vunpack.c.h.b16 %v1778
    %v1810 = vunpack.c.l.b16 %v1779
    %v1811 = vunpack.c.h.b16 %v1779
    %v1812 = vunpack.c.l.b16 %v1780
    %v1813 = vunpack.c.h.b16 %v1780
    %v1814 = vunpack.c.l.b16 %v1781
    %v1815 = vunpack.c.h.b16 %v1781
    %v1816 = vunpack.c.l.b16 %v1782
    %v1817 = vunpack.c.h.b16 %v1782
    %v1818 = vunpack.c.l.b16 %v1783
    %v1819 = vunpack.c.h.b16 %v1783
    %v1820 = vpack.c.b16 %v1806, %v1804
    %v1821 = vpack.c.b16 %v1807, %v1805
    %v1822 = vpack.c.b16 %v1810, %v1808
    %v1823 = vpack.c.b16 %v1811, %v1809
    %v1824 = vpack.c.b16 %v1814, %v1812
    %v1825 = vpack.c.b16 %v1815, %v1813
    %v1826 = vpack.c.b16 %v1818, %v1816
    %v1827 = vpack.c.b16 %v1819, %v1817
    %v1837 = vsel %vm256, %v1774, 0
    %v1840 = vsel %vm256, %v1775, 0
    %1842 = vmatprep.subr.bf16.mxu0 %v1821
    %1843 = vmatpush1.bf16.msra.mxu0 %v1820
    %1844 = vmatprep.subr.bf16.mxu0 %v1823
    %1845 = vmatpush1.bf16.msra.mxu0 %v1822
    %1846 = vmatprep.subr.bf16.mxu0 %v1825
    %1847 = vmatpush1.bf16.msra.mxu0 %v1824
    %1848 = vmatprep.subr.bf16.mxu0 %v1827
    %1849 = vmatpush1.bf16.msra.mxu0 %v1826
    %1850 = vmatprep.subr.bf16.mxu0 0
    %1851 = vmatpush1.bf16.msra.mxu0 0
    %1852 = vmatprep.subr.bf16.mxu0 0
    %1853 = vmatpush1.bf16.msra.mxu0 0
    %1854 = vmatprep.subr.bf16.mxu0 0
    %1855 = vmatpush1.bf16.msra.mxu0 0
    %1856 = vmatprep.subr.bf16.mxu0 0
    %1857 = vmatpush1.bf16.msra.mxu0 0
    %1858 = vmatprep.subr.bf16.mxu0 0
    %1859 = vmatpush1.bf16.msra.mxu0 0
    %1860 = vmatprep.subr.bf16.mxu0 0
    %1861 = vmatpush1.bf16.msra.mxu0 0
    %1862 = vmatprep.subr.bf16.mxu0 0
    %1863 = vmatpush1.bf16.msra.mxu0 0
    %1864 = vmatprep.subr.bf16.mxu0 0
    %1865 = vmatpush1.bf16.msra.mxu0 0
    %1866 = vmatprep.subr.bf16.mxu0 0
    %1867 = vmatpush1.bf16.msra.mxu0 0
    %1868 = vmatprep.subr.bf16.mxu0 0
    %1869 = vmatpush1.bf16.msra.mxu0 0
    %1870 = vmatprep.subr.bf16.mxu0 0
    %1871 = vmatpush1.bf16.msra.mxu0 0
    %1872 = vmatprep.subr.bf16.mxu0 0
    %1873 = vmatpush1.bf16.msra.mxu0 0
    %1874 = vmatprep.mubr.bf16.mxu0 0
    %1875 = vmatmul.mubr.bf16.gmra.mrb[0].mxu0 %v1837
    %v1876 = vpop.f32.mrb[0].mxu0
    %v1877 = vadd.f32 %v1789, %v1876
    %v1878 = vpop.f32.mrb[0].mxu0
    %v1879 = vadd.f32 %v1793, %v1878
    %v1880 = vpop.f32.mrb[0].mxu0
    %v1881 = vadd.f32 %v1789, %v1880
    %v1882 = vpop.f32.mrb[0].mxu0
    %v1883 = vadd.f32 %v1793, %v1882
    %1884 = vmatprep.mubr.bf16.mxu0 0
    %1885 = vmatmul.mubr.bf16.gmra.mrb[0].mxu0 %v1840
    %v1886 = vpop.f32.mrb[0].mxu0
    %v1887 = vadd.f32 %v1789, %v1886
    %v1888 = vpop.f32.mrb[0].mxu0
    %v1889 = vadd.f32 %v1793, %v1888
    %v1890 = vpop.f32.mrb[0].mxu0
    %v1891 = vadd.f32 %v1789, %v1890
    %v1892 = vpop.f32.mrb[0].mxu0
    %v1893 = vadd.f32 %v1793, %v1892
    %1894 = vdwg.mxu0
    %v1895 = vmul.f32 %v1877, 0.5
    %v1896 = vmul.f32 %v1879, 0.5
    %v1897 = vmul.f32 %v1881, 0.5
    %v1898 = vmul.f32 %v1883, 0.5
    %v1899 = vmul.f32 %v1887, 0.5
    %v1900 = vmul.f32 %v1889, 0.5
    %v1901 = vmul.f32 %v1891, 0.5
    %v1902 = vmul.f32 %v1893, 0.5
    %v1903 = vmul.f32 %v1877, 0.70710677
    %v1904 = vmul.f32 %v1879, 0.70710677
    %v1905 = vmul.f32 %v1881, 0.70710677
    %v1906 = vmul.f32 %v1883, 0.70710677
    %v1907 = vmul.f32 %v1887, 0.70710677
    %v1908 = vmul.f32 %v1889, 0.70710677
    %v1909 = vmul.f32 %v1891, 0.70710677
    %v1910 = vmul.f32 %v1893, 0.70710677
    %vm1911 = vcmp.ge.f32.partialorder %v1903, 0.0
    %vm1912 = vcmp.ge.f32.partialorder %v1904, 0.0
    %vm1913 = vcmp.ge.f32.partialorder %v1905, 0.0
    %vm1914 = vcmp.ge.f32.partialorder %v1906, 0.0
    %vm1915 = vcmp.ge.f32.partialorder %v1907, 0.0
    %vm1916 = vcmp.ge.f32.partialorder %v1908, 0.0
    %vm1917 = vcmp.ge.f32.partialorder %v1909, 0.0
    %vm1918 = vcmp.ge.f32.partialorder %v1910, 0.0
    %v1919 = vsel %vm1911, 1.0, -1.0
    %v1920 = vsel %vm1912, 1.0, -1.0
    %v1921 = vsel %vm1913, 1.0, -1.0
    %v1922 = vsel %vm1914, 1.0, -1.0
    %v1923 = vsel %vm1915, 1.0, -1.0
    %v1924 = vsel %vm1916, 1.0, -1.0
    %v1925 = vsel %vm1917, 1.0, -1.0
    %v1926 = vsel %vm1918, 1.0, -1.0
    %v1927 = vand.u32 2147483647, %v1903
    %v1928 = vand.u32 2147483647, %v1904
    %v1929 = vand.u32 2147483647, %v1905
    %v1930 = vand.u32 2147483647, %v1906
    %v1931 = vand.u32 2147483647, %v1907
    %v1932 = vand.u32 2147483647, %v1908
    %v1933 = vand.u32 2147483647, %v1909
    %v1934 = vand.u32 2147483647, %v1910
    %v1935 = vmul.f32 %v1927, 0.3275911
    %v1936 = vmul.f32 %v1928, 0.3275911
    %v1937 = vmul.f32 %v1929, 0.3275911
    %v1938 = vmul.f32 %v1930, 0.3275911
    %v1939 = vmul.f32 %v1931, 0.3275911
    %v1940 = vmul.f32 %v1932, 0.3275911
    %v1941 = vmul.f32 %v1933, 0.3275911
    %v1942 = vmul.f32 %v1934, 0.3275911
    %v1943 = vadd.f32 %v1935, 1.0
    %v1944 = vadd.f32 %v1936, 1.0
    %v1945 = vadd.f32 %v1937, 1.0
    %v1946 = vadd.f32 %v1938, 1.0
    %v1947 = vadd.f32 %v1939, 1.0
    %v1948 = vadd.f32 %v1940, 1.0
    %v1949 = vadd.f32 %v1941, 1.0
    %v1950 = vadd.f32 %v1942, 1.0
    %v1951 = vrcp.pop %v1943
    %v1952 = vmul.f32 1.0, %v1951
    %v1953 = vrcp.pop %v1944
    %v1954 = vmul.f32 1.0, %v1953
    %v1955 = vrcp.pop %v1945
    %v1956 = vmul.f32 1.0, %v1955
    %v1957 = vrcp.pop %v1946
    %v1958 = vmul.f32 1.0, %v1957
    %v1959 = vrcp.pop %v1947
    %v1960 = vmul.f32 1.0, %v1959
    %v1961 = vrcp.pop %v1948
    %v1962 = vmul.f32 1.0, %v1961
    %v1963 = vrcp.pop %v1949
    %v1964 = vmul.f32 1.0, %v1963
    %v1965 = vrcp.pop %v1950
    %v1966 = vmul.f32 1.0, %v1965
    %v1967 = vmul.f32 %v1952, 1.0614054
    %v1968 = vmul.f32 %v1954, 1.0614054
    %v1969 = vmul.f32 %v1956, 1.0614054
    %v1970 = vmul.f32 %v1958, 1.0614054
    %v1971 = vmul.f32 %v1960, 1.0614054
    %v1972 = vmul.f32 %v1962, 1.0614054
    %v1973 = vmul.f32 %v1964, 1.0614054
    %v1974 = vmul.f32 %v1966, 1.0614054
    %v1975 = vadd.f32 %v1967, -1.4531521
    %v1976 = vadd.f32 %v1968, -1.4531521
    %v1977 = vadd.f32 %v1969, -1.4531521
    %v1978 = vadd.f32 %v1970, -1.4531521
    %v1979 = vadd.f32 %v1971, -1.4531521
    %v1980 = vadd.f32 %v1972, -1.4531521
    %v1981 = vadd.f32 %v1973, -1.4531521
    %v1982 = vadd.f32 %v1974, -1.4531521
    %v1983 = vmul.f32 %v1975, %v1952
    %v1984 = vmul.f32 %v1976, %v1954
    %v1985 = vmul.f32 %v1977, %v1956
    %v1986 = vmul.f32 %v1978, %v1958
    %v1987 = vmul.f32 %v1979, %v1960
    %v1988 = vmul.f32 %v1980, %v1962
    %v1989 = vmul.f32 %v1981, %v1964
    %v1990 = vmul.f32 %v1982, %v1966
    %v1991 = vadd.f32 %v1983, 1.4214138
    %v1992 = vadd.f32 %v1984, 1.4214138
    %v1993 = vadd.f32 %v1985, 1.4214138
    %v1994 = vadd.f32 %v1986, 1.4214138
    %v1995 = vadd.f32 %v1987, 1.4214138
    %v1996 = vadd.f32 %v1988, 1.4214138
    %v1997 = vadd.f32 %v1989, 1.4214138
    %v1998 = vadd.f32 %v1990, 1.4214138
    %v1999 = vmul.f32 %v1991, %v1952
    %v2000 = vmul.f32 %v1992, %v1954
    %v2001 = vmul.f32 %v1993, %v1956
    %v2002 = vmul.f32 %v1994, %v1958
    %v2003 = vmul.f32 %v1995, %v1960
    %v2004 = vmul.f32 %v1996, %v1962
    %v2005 = vmul.f32 %v1997, %v1964
    %v2006 = vmul.f32 %v1998, %v1966
    %v2007 = vadd.f32 %v1999, -0.28449672
    %v2008 = vadd.f32 %v2000, -0.28449672
    %v2009 = vadd.f32 %v2001, -0.28449672
    %v2010 = vadd.f32 %v2002, -0.28449672
    %v2011 = vadd.f32 %v2003, -0.28449672
    %v2012 = vadd.f32 %v2004, -0.28449672
    %v2013 = vadd.f32 %v2005, -0.28449672
    %v2014 = vadd.f32 %v2006, -0.28449672
    %v2015 = vmul.f32 %v2007, %v1952
    %v2016 = vmul.f32 %v2008, %v1954
    %v2017 = vmul.f32 %v2009, %v1956
    %v2018 = vmul.f32 %v2010, %v1958
    %v2019 = vmul.f32 %v2011, %v1960
    %v2020 = vmul.f32 %v2012, %v1962
    %v2021 = vmul.f32 %v2013, %v1964
    %v2022 = vmul.f32 %v2014, %v1966
    %v2023 = vadd.f32 %v2015, 0.2548296
    %v2024 = vadd.f32 %v2016, 0.2548296
    %v2025 = vadd.f32 %v2017, 0.2548296
    %v2026 = vadd.f32 %v2018, 0.2548296
    %v2027 = vadd.f32 %v2019, 0.2548296
    %v2028 = vadd.f32 %v2020, 0.2548296
    %v2029 = vadd.f32 %v2021, 0.2548296
    %v2030 = vadd.f32 %v2022, 0.2548296
    %v2031 = vmul.f32 %v2023, %v1952
    %v2032 = vmul.f32 %v2024, %v1954
    %v2033 = vmul.f32 %v2025, %v1956
    %v2034 = vmul.f32 %v2026, %v1958
    %v2035 = vmul.f32 %v2027, %v1960
    %v2036 = vmul.f32 %v2028, %v1962
    %v2037 = vmul.f32 %v2029, %v1964
    %v2038 = vmul.f32 %v2030, %v1966
    %v2039 = vsub.f32 0.0, %v1927
    %v2040 = vsub.f32 0.0, %v1928
    %v2041 = vsub.f32 0.0, %v1929
    %v2042 = vsub.f32 0.0, %v1930
    %v2043 = vsub.f32 0.0, %v1931
    %v2044 = vsub.f32 0.0, %v1932
    %v2045 = vsub.f32 0.0, %v1933
    %v2046 = vsub.f32 0.0, %v1934
    %v2047 = vmul.f32 %v2039, %v1927
    %v2048 = vmul.f32 %v2040, %v1928
    %v2049 = vmul.f32 %v2041, %v1929
    %v2050 = vmul.f32 %v2042, %v1930
    %v2051 = vmul.f32 %v2043, %v1931
    %v2052 = vmul.f32 %v2044, %v1932
    %v2053 = vmul.f32 %v2045, %v1933
    %v2054 = vmul.f32 %v2046, %v1934
    %v2055 = vmul.f32 %v2047, 1.442695
    %v2056 = vpow.pop %v2055
    %v2057 = vmul.f32 %v2048, 1.442695
    %v2058 = vpow.pop %v2057
    %v2059 = vmul.f32 %v2049, 1.442695
    %v2060 = vpow.pop %v2059
    %v2061 = vmul.f32 %v2050, 1.442695
    %v2062 = vpow.pop %v2061
    %v2063 = vmul.f32 %v2051, 1.442695
    %v2064 = vpow.pop %v2063
    %v2065 = vmul.f32 %v2052, 1.442695
    %v2066 = vpow.pop %v2065
    %v2067 = vmul.f32 %v2053, 1.442695
    %v2068 = vpow.pop %v2067
    %v2069 = vmul.f32 %v2054, 1.442695
    %v2070 = vpow.pop %v2069
    %v2071 = vmul.f32 %v2031, %v2056
    %v2072 = vmul.f32 %v2032, %v2058
    %v2073 = vmul.f32 %v2033, %v2060
    %v2074 = vmul.f32 %v2034, %v2062
    %v2075 = vmul.f32 %v2035, %v2064
    %v2076 = vmul.f32 %v2036, %v2066
    %v2077 = vmul.f32 %v2037, %v2068
    %v2078 = vmul.f32 %v2038, %v2070
    %v2079 = vsub.f32 1.0, %v2071
    %v2080 = vsub.f32 1.0, %v2072
    %v2081 = vsub.f32 1.0, %v2073
    %v2082 = vsub.f32 1.0, %v2074
    %v2083 = vsub.f32 1.0, %v2075
    %v2084 = vsub.f32 1.0, %v2076
    %v2085 = vsub.f32 1.0, %v2077
    %v2086 = vsub.f32 1.0, %v2078
    %v2087 = vmul.f32 %v1919, %v2079
    %v2088 = vmul.f32 %v1920, %v2080
    %v2089 = vmul.f32 %v1921, %v2081
    %v2090 = vmul.f32 %v1922, %v2082
    %v2091 = vmul.f32 %v1923, %v2083
    %v2092 = vmul.f32 %v1924, %v2084
    %v2093 = vmul.f32 %v1925, %v2085
    %v2094 = vmul.f32 %v1926, %v2086
    %v2095 = vadd.f32 %v2087, 1.0
    %v2096 = vadd.f32 %v2088, 1.0
    %v2097 = vadd.f32 %v2089, 1.0
    %v2098 = vadd.f32 %v2090, 1.0
    %v2099 = vadd.f32 %v2091, 1.0
    %v2100 = vadd.f32 %v2092, 1.0
    %v2101 = vadd.f32 %v2093, 1.0
    %v2102 = vadd.f32 %v2094, 1.0
    %v2103 = vmul.f32 %v1895, %v2095
    %v2104 = vmul.f32 %v1896, %v2096
    %v2105 = vmul.f32 %v1897, %v2097
    %v2106 = vmul.f32 %v1898, %v2098
    %v2107 = vmul.f32 %v1899, %v2099
    %v2108 = vmul.f32 %v1900, %v2100
    %v2109 = vmul.f32 %v1901, %v2101
    %v2110 = vmul.f32 %v1902, %v2102
    %v2111 = vpack.c.bf16 %v2105, %v2103
    %v2112 = vpack.c.bf16 %v2106, %v2104
    %v2113 = vpack.c.bf16 %v2109, %v2107
    %v2114 = vpack.c.bf16 %v2110, %v2108
    %v2115 = vld [vmem:[%s10] sm:$0xf]
    %v2116 = vld [vmem:[%s10 + $0x4] sm:$0xf]
    %v2117 = vld [vmem:[%s10 + $0x8] sm:$0xf]
    %v2118 = vld [vmem:[%s10 + $0xc] sm:$0xf]
    %v2119 = vld [vmem:[%s10 + $0x10] sm:$0xf]
    %v2120 = vld [vmem:[%s10 + $0x14] sm:$0xf]
    %v2121 = vld [vmem:[%s10 + $0x18] sm:$0xf]
    %v2122 = vld [vmem:[%s10 + $0x1c] sm:$0xf]
    %v2123 = vld [vmem:[%s10 + $0x20] sm:$0xf]
    %v2124 = vld [vmem:[%s10 + $0x24] sm:$0xf]
    %v2125 = vld [vmem:[%s10 + $0x28] sm:$0xf]
    %v2126 = vld [vmem:[%s10 + $0x2c] sm:$0xf]
    %v2127 = vld [vmem:[%s10 + $0x30] sm:$0xf]
    %v2128 = vld [vmem:[%s10 + $0x34] sm:$0xf]
    %v2129 = vld [vmem:[%s10 + $0x38] sm:$0xf]
    %v2130 = vld [vmem:[%s10 + $0x3c] sm:$0xf]
    %v2131 = vld [vmem:[%s10 + $0x40] sm:$0xf]
    %v2132 = vld [vmem:[%s10 + $0x44] sm:$0xf]
    %v2133 = vld [vmem:[%s10 + $0x48] sm:$0xf]
    %v2134 = vld [vmem:[%s10 + $0x4c] sm:$0xf]
    %v2135 = vld [vmem:[%s10 + $0x50] sm:$0xf]
    %v2136 = vld [vmem:[%s10 + $0x54] sm:$0xf]
    %v2137 = vld [vmem:[%s10 + $0x58] sm:$0xf]
    %v2138 = vld [vmem:[%s10 + $0x5c] sm:$0xf]
    %v2139 = vld [vmem:[%s10 + $0x60] sm:$0xf]
    %v2140 = vld [vmem:[%s10 + $0x64] sm:$0xf]
    %v2141 = vld [vmem:[%s10 + $0x68] sm:$0xf]
    %v2142 = vld [vmem:[%s10 + $0x6c] sm:$0xf]
    %v2143 = vld [vmem:[%s10 + $0x70] sm:$0xf]
    %v2144 = vld [vmem:[%s10 + $0x74] sm:$0xf]
    %v2145 = vld [vmem:[%s10 + $0x78] sm:$0xf]
    %v2146 = vld [vmem:[%s10 + $0x7c] sm:$0xf]
    %v2147 = vld [vmem:[#allocation14] sm:$0x1]
    %v2149 = vlaneseq
    %v2150 = vshrl.u32 %v2149, 7
    %v2151 = vsub.s32 0, %v2150
    %v2152 = vrot.slane %v2147, %v2151
    %v2186 = vunpack.c.l.b16 %v2115
    %v2187 = vunpack.c.l.b16 %v2116
    %v2188 = vunpack.c.l.b16 %v2117
    %v2189 = vunpack.c.l.b16 %v2118
    %v2190 = vunpack.c.l.b16 %v2119
    %v2191 = vunpack.c.l.b16 %v2120
    %v2192 = vunpack.c.l.b16 %v2121
    %v2193 = vunpack.c.l.b16 %v2122
    %v2194 = vunpack.c.l.b16 %v2123
    %v2195 = vunpack.c.l.b16 %v2124
    %v2196 = vunpack.c.l.b16 %v2125
    %v2197 = vunpack.c.l.b16 %v2126
    %v2198 = vunpack.c.l.b16 %v2127
    %v2199 = vunpack.c.l.b16 %v2128
    %v2200 = vunpack.c.l.b16 %v2129
    %v2201 = vunpack.c.l.b16 %v2130
    %v2202 = vunpack.c.l.b16 %v2131
    %v2203 = vunpack.c.l.b16 %v2132
    %v2204 = vunpack.c.l.b16 %v2133
    %v2205 = vunpack.c.l.b16 %v2134
    %v2206 = vunpack.c.l.b16 %v2135
    %v2207 = vunpack.c.l.b16 %v2136
    %v2208 = vunpack.c.l.b16 %v2137
    %v2209 = vunpack.c.l.b16 %v2138
    %v2210 = vunpack.c.l.b16 %v2139
    %v2211 = vunpack.c.l.b16 %v2140
    %v2212 = vunpack.c.l.b16 %v2141
    %v2213 = vunpack.c.l.b16 %v2142
    %v2214 = vunpack.c.l.b16 %v2143
    %v2215 = vunpack.c.l.b16 %v2144
    %v2216 = vunpack.c.l.b16 %v2145
    %v2217 = vunpack.c.l.b16 %v2146
    %v2218 = vpack.c.b16 %v2187, %v2186
    %v2219 = vpack.c.b16 %v2189, %v2188
    %v2220 = vpack.c.b16 %v2191, %v2190
    %v2221 = vpack.c.b16 %v2193, %v2192
    %v2222 = vpack.c.b16 %v2195, %v2194
    %v2223 = vpack.c.b16 %v2197, %v2196
    %v2224 = vpack.c.b16 %v2199, %v2198
    %v2225 = vpack.c.b16 %v2201, %v2200
    %v2226 = vpack.c.b16 %v2203, %v2202
    %v2227 = vpack.c.b16 %v2205, %v2204
    %v2228 = vpack.c.b16 %v2207, %v2206
    %v2229 = vpack.c.b16 %v2209, %v2208
    %v2230 = vpack.c.b16 %v2211, %v2210
    %v2231 = vpack.c.b16 %v2213, %v2212
    %v2232 = vpack.c.b16 %v2215, %v2214
    %v2233 = vpack.c.b16 %v2217, %v2216
    %2250 = vmatprep.subr.bf16.mxu0 0
    %2251 = vmatpush1.bf16.msra.mxu0 %v2218
    %2252 = vmatprep.subr.bf16.mxu0 0
    %2253 = vmatpush1.bf16.msra.mxu0 %v2219
    %2254 = vmatprep.subr.bf16.mxu0 0
    %2255 = vmatpush1.bf16.msra.mxu0 %v2220
    %2256 = vmatprep.subr.bf16.mxu0 0
    %2257 = vmatpush1.bf16.msra.mxu0 %v2221
    %2258 = vmatprep.subr.bf16.mxu0 0
    %2259 = vmatpush1.bf16.msra.mxu0 %v2222
    %2260 = vmatprep.subr.bf16.mxu0 0
    %2261 = vmatpush1.bf16.msra.mxu0 %v2223
    %2262 = vmatprep.subr.bf16.mxu0 0
    %2263 = vmatpush1.bf16.msra.mxu0 %v2224
    %2264 = vmatprep.subr.bf16.mxu0 0
    %2265 = vmatpush1.bf16.msra.mxu0 %v2225
    %2266 = vmatprep.subr.bf16.mxu0 0
    %2267 = vmatpush1.bf16.msra.mxu0 %v2226
    %2268 = vmatprep.subr.bf16.mxu0 0
    %2269 = vmatpush1.bf16.msra.mxu0 %v2227
    %2270 = vmatprep.subr.bf16.mxu0 0
    %2271 = vmatpush1.bf16.msra.mxu0 %v2228
    %2272 = vmatprep.subr.bf16.mxu0 0
    %2273 = vmatpush1.bf16.msra.mxu0 %v2229
    %2274 = vmatprep.subr.bf16.mxu0 0
    %2275 = vmatpush1.bf16.msra.mxu0 %v2230
    %2276 = vmatprep.subr.bf16.mxu0 0
    %2277 = vmatpush1.bf16.msra.mxu0 %v2231
    %2278 = vmatprep.subr.bf16.mxu0 0
    %2279 = vmatpush1.bf16.msra.mxu0 %v2232
    %2280 = vmatprep.subr.bf16.mxu0 0
    %2281 = vmatpush1.bf16.msra.mxu0 %v2233
    %2282 = vmatprep.mubr.bf16.mxu0 %v2112
    %2283 = vmatmul.mubr.bf16.gmra.mrb[0].mxu0 %v2111
    %v2284 = vpop.f32.mrb[0].mxu0
    %v2285 = vadd.f32 %v2152, %v2284
    %v2286 = vpop.f32.mrb[0].mxu0
    %v2287 = vpop.f32.mrb[0].mxu0
    %v2288 = vadd.f32 %v2152, %v2287
    %v2289 = vpop.f32.mrb[0].mxu0
    %2290 = vmatprep.mubr.bf16.mxu0 %v2114
    %2291 = vmatmul.mubr.bf16.gmra.mrb[0].mxu0 %v2113
    %v2292 = vpop.f32.mrb[0].mxu0
    %v2293 = vadd.f32 %v2152, %v2292
    %v2294 = vpop.f32.mrb[0].mxu0
    %v2295 = vpop.f32.mrb[0].mxu0
    %v2296 = vadd.f32 %v2152, %v2295
    %v2297 = vpop.f32.mrb[0].mxu0
    %2298 = vdwg.mxu0
    %v2299 = vadd.f32 %v1696, %v2285
    %v2300 = vadd.f32 %v1697, %v2288
    %v2301 = vadd.f32 %v1698, %v2293
    %v2302 = vadd.f32 %v1699, %v2296
    %v2303 = vld [vmem:[#allocation16] sm:$0x1]
    %v2304 = vld [vmem:[#allocation17] sm:$0x1]
    %v2305 = vsel %vm256, %v2299, 0.0
    %2306 = vadd.xlane.f32.xlu0 %v2305
    %v2307 = vpop.xlane.xlu0 %2306
    %v2308 = vsel %vm256, %v2300, 0.0
    %2309 = vadd.xlane.f32.xlu0 %v2308
    %v2310 = vpop.xlane.xlu0 %2309
    %v2311 = vsel %vm256, %v2301, 0.0
    %2312 = vadd.xlane.f32.xlu0 %v2311
    %v2313 = vpop.xlane.xlu0 %2312
    %v2314 = vsel %vm256, %v2302, 0.0
    %2315 = vadd.xlane.f32.xlu0 %v2314
    %v2316 = vpop.xlane.xlu0 %2315
    %v2317 = vmul.f32 %v2307, %v269
    %v2318 = vmul.f32 %v2310, %v269
    %v2319 = vmul.f32 %v2313, %v269
    %v2320 = vmul.f32 %v2316, %v269
    %v2321 = vsub.f32 %v2299, %v2317
    %v2322 = vsub.f32 %v2300, %v2318
    %v2323 = vsub.f32 %v2301, %v2319
    %v2324 = vsub.f32 %v2302, %v2320
    %v2325 = vmul.f32 %v2321, %v2321
    %v2326 = vmul.f32 %v2322, %v2322
    %v2327 = vmul.f32 %v2323, %v2323
    %v2328 = vmul.f32 %v2324, %v2324
    %v2329 = vsel %vm256, %v2325, 0.0
    %2330 = vadd.xlane.f32.xlu0 %v2329
    %v2331 = vpop.xlane.xlu0 %2330
    %v2332 = vsel %vm256, %v2326, 0.0
    %2333 = vadd.xlane.f32.xlu0 %v2332
    %v2334 = vpop.xlane.xlu0 %2333
    %v2335 = vsel %vm256, %v2327, 0.0
    %2336 = vadd.xlane.f32.xlu0 %v2335
    %v2337 = vpop.xlane.xlu0 %2336
    %v2338 = vsel %vm256, %v2328, 0.0
    %2339 = vadd.xlane.f32.xlu0 %v2338
    %v2340 = vpop.xlane.xlu0 %2339
    %v2341 = vmul.f32 %v2331, %v269
    %v2342 = vmul.f32 %v2334, %v269
    %v2343 = vmul.f32 %v2337, %v269
    %v2344 = vmul.f32 %v2340, %v269
    %v2345 = vadd.f32 %v2341, 1e-05
    %v2346 = vadd.f32 %v2342, 1e-05
    %v2347 = vadd.f32 %v2343, 1e-05
    %v2348 = vadd.f32 %v2344, 1e-05
    %v2349 = vrsqrt.pop %v2345
    %v2350 = vrsqrt.pop %v2346
    %v2351 = vrsqrt.pop %v2347
    %v2352 = vrsqrt.pop %v2348
    %v2353 = vmul.f32 %v2321, %v2349
    %v2354 = vmul.f32 %v2322, %v2350
    %v2355 = vmul.f32 %v2323, %v2351
    %v2356 = vmul.f32 %v2324, %v2352
    %v2358 = vlaneseq
    %v2359 = vshrl.u32 %v2358, 7
    %v2360 = vsub.s32 0, %v2359
    %v2361 = vrot.slane %v2303, %v2360
    %v2363 = vmul.f32 %v2353, %v2361
    %v2364 = vmul.f32 %v2354, %v2361
    %v2365 = vmul.f32 %v2355, %v2361
    %v2366 = vmul.f32 %v2356, %v2361
    %v2368 = vlaneseq
    %v2369 = vshrl.u32 %v2368, 7
    %v2370 = vsub.s32 0, %v2369
    %v2371 = vrot.slane %v2304, %v2370
    %v2373 = vadd.f32 %v2363, %v2371
    %v2374 = vadd.f32 %v2364, %v2371
    %v2375 = vadd.f32 %v2365, %v2371
    %v2376 = vadd.f32 %v2366, %v2371
    %v2377 = vpack.c.bf16 %v2374, %v2373
    %v2378 = vpack.c.bf16 %v2376, %v2375
    %v2379 = vld [vmem:[%s15] sm:$0xff]
    %v2380 = vld [vmem:[%s15 + $0x8] sm:$0xff]
    %v2381 = vld [vmem:[%s15 + $0x10] sm:$0xff]
    %v2382 = vld [vmem:[%s15 + $0x18] sm:$0xff]
    %v2383 = vld [vmem:[%s15 + $0x20] sm:$0xff]
    %v2384 = vld [vmem:[%s15 + $0x28] sm:$0xff]
    %v2385 = vld [vmem:[%s15 + $0x30] sm:$0xff]
    %v2386 = vld [vmem:[%s15 + $0x38] sm:$0xff]
    %v2395 = vunpack.c.l.b16 %v2379
    %v2396 = vunpack.c.h.b16 %v2379
    %v2397 = vunpack.c.l.b16 %v2380
    %v2398 = vunpack.c.h.b16 %v2380
    %v2399 = vunpack.c.l.b16 %v2381
    %v2400 = vunpack.c.h.b16 %v2381
    %v2401 = vunpack.c.l.b16 %v2382
    %v2402 = vunpack.c.h.b16 %v2382
    %v2403 = vunpack.c.l.b16 %v2383
    %v2404 = vunpack.c.h.b16 %v2383
    %v2405 = vunpack.c.l.b16 %v2384
    %v2406 = vunpack.c.h.b16 %v2384
    %v2407 = vunpack.c.l.b16 %v2385
    %v2408 = vunpack.c.h.b16 %v2385
    %v2409 = vunpack.c.l.b16 %v2386
    %v2410 = vunpack.c.h.b16 %v2386
    %v2411 = vpack.c.b16 %v2397, %v2395
    %v2412 = vpack.c.b16 %v2398, %v2396
    %v2413 = vpack.c.b16 %v2401, %v2399
    %v2414 = vpack.c.b16 %v2402, %v2400
    %v2415 = vpack.c.b16 %v2405, %v2403
    %v2416 = vpack.c.b16 %v2406, %v2404
    %v2417 = vpack.c.b16 %v2409, %v2407
    %v2418 = vpack.c.b16 %v2410, %v2408
    %v2428 = vsel %vm256, %v2377, 0
    %v2431 = vsel %vm256, %v2378, 0
    %2433 = vmatprep.subr.bf16.mxu0 %v2412
    %2434 = vmatpush1.bf16.msra.mxu0 %v2411
    %2435 = vmatprep.subr.bf16.mxu0 %v2414
    %2436 = vmatpush1.bf16.msra.mxu0 %v2413
    %2437 = vmatprep.subr.bf16.mxu0 %v2416
    %2438 = vmatpush1.bf16.msra.mxu0 %v2415
    %2439 = vmatprep.subr.bf16.mxu0 %v2418
    %2440 = vmatpush1.bf16.msra.mxu0 %v2417
    %2441 = vmatprep.subr.bf16.mxu0 0
    %2442 = vmatpush1.bf16.msra.mxu0 0
    %2443 = vmatprep.subr.bf16.mxu0 0
    %2444 = vmatpush1.bf16.msra.mxu0 0
    %2445 = vmatprep.subr.bf16.mxu0 0
    %2446 = vmatpush1.bf16.msra.mxu0 0
    %2447 = vmatprep.subr.bf16.mxu0 0
    %2448 = vmatpush1.bf16.msra.mxu0 0
    %2449 = vmatprep.subr.bf16.mxu0 0
    %2450 = vmatpush1.bf16.msra.mxu0 0
    %2451 = vmatprep.subr.bf16.mxu0 0
    %2452 = vmatpush1.bf16.msra.mxu0 0
    %2453 = vmatprep.subr.bf16.mxu0 0
    %2454 = vmatpush1.bf16.msra.mxu0 0
    %2455 = vmatprep.subr.bf16.mxu0 0
    %2456 = vmatpush1.bf16.msra.mxu0 0
    %2457 = vmatprep.subr.bf16.mxu0 0
    %2458 = vmatpush1.bf16.msra.mxu0 0
    %2459 = vmatprep.subr.bf16.mxu0 0
    %2460 = vmatpush1.bf16.msra.mxu0 0
    %2461 = vmatprep.subr.bf16.mxu0 0
    %2462 = vmatpush1.bf16.msra.mxu0 0
    %2463 = vmatprep.subr.bf16.mxu0 0
    %2464 = vmatpush1.bf16.msra.mxu0 0
    %2465 = vmatprep.mubr.bf16.mxu0 0
    %2466 = vmatmul.mubr.bf16.gmra.mrb[0].mxu0 %v2428
    %v2467 = vpop.f32.mrb[0].mxu0
    %v2468 = vadd.f32 0.0, %v2467
    %v2469 = vpop.f32.mrb[0].mxu0
    %v2470 = vadd.f32 0.0, %v2469
    %v2471 = vpop.f32.mrb[0].mxu0
    %v2472 = vadd.f32 0.0, %v2471
    %v2473 = vpop.f32.mrb[0].mxu0
    %v2474 = vadd.f32 0.0, %v2473
    %2475 = vmatprep.mubr.bf16.mxu0 0
    %2476 = vmatmul.mubr.bf16.gmra.mrb[0].mxu0 %v2431
    %v2477 = vpop.f32.mrb[0].mxu0
    %v2478 = vadd.f32 0.0, %v2477
    %v2479 = vpop.f32.mrb[0].mxu0
    %v2480 = vadd.f32 0.0, %v2479
    %v2481 = vpop.f32.mrb[0].mxu0
    %v2482 = vadd.f32 0.0, %v2481
    %v2483 = vpop.f32.mrb[0].mxu0
    %v2484 = vadd.f32 0.0, %v2483
    %2485 = vdwg.mxu0
    %v2486 = vpack.c.bf16 %v2472, %v2468
    %v2487 = vpack.c.bf16 %v2482, %v2478
    %v2488 = vpack.c.bf16 %v2474, %v2470
    %v2489 = vpack.c.bf16 %v2484, %v2480
    %v2490 = vld [vmem:[%s24] sm:$0xff]
    %v2491 = vld [vmem:[%s24 + $0x8] sm:$0xff]
    %2493 = vrot.lane.b32.xlu0 %v2486, 64
    %v2494 = vpop.permute.xlu0 %2493
    %v2496 = vsel %vm448, %v2486, 0
    %v2499 = vsel %vm448, %v2494, 0
    %2501 = vmatprep.subr.bf16.mxu0 0
    %2502 = vmatpush1.bf16.xpose.msra.mxu0 %v2499
    %2503 = vmatprep.subr.bf16.mxu0 0
    %2504 = vmatpush1.bf16.xpose.msra.mxu0 0
    %2505 = vmatprep.subr.bf16.mxu0 0
    %2506 = vmatpush1.bf16.xpose.msra.mxu0 0
    %2507 = vmatprep.subr.bf16.mxu0 0
    %2508 = vmatpush1.bf16.xpose.msra.mxu0 0
    %2509 = vmatprep.subr.bf16.mxu0 0
    %2510 = vmatpush1.bf16.xpose.msra.mxu0 0
    %2511 = vmatprep.subr.bf16.mxu0 0
    %2512 = vmatpush1.bf16.xpose.msra.mxu0 0
    %2513 = vmatprep.subr.bf16.mxu0 0
    %2514 = vmatpush1.bf16.xpose.msra.mxu0 0
    %2515 = vmatprep.subr.bf16.mxu0 0
    %2516 = vmatpush1.bf16.xpose.msra.mxu0 0
    %2517 = vmatprep.subr.bf16.mxu0 0
    %2518 = vmatpush1.bf16.xpose.msra.mxu0 0
    %2519 = vmatprep.subr.bf16.mxu0 0
    %2520 = vmatpush1.bf16.xpose.msra.mxu0 0
    %2521 = vmatprep.subr.bf16.mxu0 0
    %2522 = vmatpush1.bf16.xpose.msra.mxu0 0
    %2523 = vmatprep.subr.bf16.mxu0 0
    %2524 = vmatpush1.bf16.xpose.msra.mxu0 0
    %2525 = vmatprep.subr.bf16.mxu0 0
    %2526 = vmatpush1.bf16.xpose.msra.mxu0 0
    %2527 = vmatprep.subr.bf16.mxu0 0
    %2528 = vmatpush1.bf16.xpose.msra.mxu0 0
    %2529 = vmatprep.subr.bf16.mxu0 0
    %2530 = vmatpush1.bf16.xpose.msra.mxu0 0
    %2531 = vmatprep.subr.bf16.mxu0 0
    %2532 = vmatpush1.bf16.xpose.msra.mxu0 0
    %2533 = vmatprep.mubr.bf16.mxu0 0
    %2534 = vmatmul.mubr.bf16.gmra.mrb[0].mxu0 %v2496
    %v2535 = vpop.f32.mrb[0].mxu0
    %v2536 = vadd.f32 %v2490, %v2535
    %v2537 = vpop.f32.mrb[0].mxu0
    %v2538 = vpop.f32.mrb[0].mxu0
    %v2539 = vadd.f32 %v2491, %v2538
    %v2540 = vpop.f32.mrb[0].mxu0
    %2541 = vdwg.mxu0
    %2543 = vrot.lane.b32.xlu0 %v2487, 64
    %v2544 = vpop.permute.xlu0 %2543
    %v2546 = vsel %vm448, %v2487, 0
    %v2549 = vsel %vm448, %v2544, 0
    %2551 = vmatprep.subr.bf16.mxu0 0
    %2552 = vmatpush1.bf16.xpose.msra.mxu0 %v2549
    %2553 = vmatprep.subr.bf16.mxu0 0
    %2554 = vmatpush1.bf16.xpose.msra.mxu0 0
    %2555 = vmatprep.subr.bf16.mxu0 0
    %2556 = vmatpush1.bf16.xpose.msra.mxu0 0
    %2557 = vmatprep.subr.bf16.mxu0 0
    %2558 = vmatpush1.bf16.xpose.msra.mxu0 0
    %2559 = vmatprep.subr.bf16.mxu0 0
    %2560 = vmatpush1.bf16.xpose.msra.mxu0 0
    %2561 = vmatprep.subr.bf16.mxu0 0
    %2562 = vmatpush1.bf16.xpose.msra.mxu0 0
    %2563 = vmatprep.subr.bf16.mxu0 0
    %2564 = vmatpush1.bf16.xpose.msra.mxu0 0
    %2565 = vmatprep.subr.bf16.mxu0 0
    %2566 = vmatpush1.bf16.xpose.msra.mxu0 0
    %2567 = vmatprep.subr.bf16.mxu0 0
    %2568 = vmatpush1.bf16.xpose.msra.mxu0 0
    %2569 = vmatprep.subr.bf16.mxu0 0
    %2570 = vmatpush1.bf16.xpose.msra.mxu0 0
    %2571 = vmatprep.subr.bf16.mxu0 0
    %2572 = vmatpush1.bf16.xpose.msra.mxu0 0
    %2573 = vmatprep.subr.bf16.mxu0 0
    %2574 = vmatpush1.bf16.xpose.msra.mxu0 0
    %2575 = vmatprep.subr.bf16.mxu0 0
    %2576 = vmatpush1.bf16.xpose.msra.mxu0 0
    %2577 = vmatprep.subr.bf16.mxu0 0
    %2578 = vmatpush1.bf16.xpose.msra.mxu0 0
    %2579 = vmatprep.subr.bf16.mxu0 0
    %2580 = vmatpush1.bf16.xpose.msra.mxu0 0
    %2581 = vmatprep.subr.bf16.mxu0 0
    %2582 = vmatpush1.bf16.xpose.msra.mxu0 0
    %2583 = vmatprep.mubr.bf16.mxu0 0
    %2584 = vmatmul.mubr.bf16.gmra.mrb[0].mxu0 %v2546
    %v2585 = vpop.f32.mrb[0].mxu0
    %v2586 = vadd.f32 %v2490, %v2585
    %v2587 = vpop.f32.mrb[0].mxu0
    %v2588 = vpop.f32.mrb[0].mxu0
    %v2589 = vadd.f32 %v2491, %v2588
    %v2590 = vpop.f32.mrb[0].mxu0
    %2591 = vdwg.mxu0
    %v2592 = vsel %vm448, %v2536, -inf
    %2593 = vmax.xlane.f32.xlu0 %v2592
    %v2594 = vpop.xlane.xlu0 %2593
    %v2595 = vsel %vm448, %v2539, -inf
    %2596 = vmax.xlane.f32.xlu0 %v2595
    %v2597 = vpop.xlane.xlu0 %2596
    %v2598 = vsel %vm448, %v2586, -inf
    %2599 = vmax.xlane.f32.xlu0 %v2598
    %v2600 = vpop.xlane.xlu0 %2599
    %v2601 = vsel %vm448, %v2589, -inf
    %2602 = vmax.xlane.f32.xlu0 %v2601
    %v2603 = vpop.xlane.xlu0 %2602
    %v2604 = vsub.f32 %v2536, %v2594
    %v2605 = vsub.f32 %v2539, %v2597
    %v2606 = vsub.f32 %v2586, %v2600
    %v2607 = vsub.f32 %v2589, %v2603
    %v2608 = vmul.f32 %v2604, 1.442695
    %v2609 = vpow.pop %v2608
    %v2610 = vmul.f32 %v2605, 1.442695
    %v2611 = vpow.pop %v2610
    %v2612 = vmul.f32 %v2606, 1.442695
    %v2613 = vpow.pop %v2612
    %v2614 = vmul.f32 %v2607, 1.442695
    %v2615 = vpow.pop %v2614
    %v2616 = vsel %vm448, %v2609, 0.0
    %2617 = vadd.xlane.f32.xlu0 %v2616
    %v2618 = vpop.xlane.xlu0 %2617
    %v2619 = vsel %vm448, %v2611, 0.0
    %2620 = vadd.xlane.f32.xlu0 %v2619
    %v2621 = vpop.xlane.xlu0 %2620
    %v2622 = vsel %vm448, %v2613, 0.0
    %2623 = vadd.xlane.f32.xlu0 %v2622
    %v2624 = vpop.xlane.xlu0 %2623
    %v2625 = vsel %vm448, %v2615, 0.0
    %2626 = vadd.xlane.f32.xlu0 %v2625
    %v2627 = vpop.xlane.xlu0 %2626
    %v2628 = vrcp.pop %v2618
    %v2629 = vrcp.pop %v2621
    %v2630 = vrcp.pop %v2624
    %v2631 = vrcp.pop %v2627
    %v2632 = vmul.f32 %v2609, %v2628
    %v2633 = vmul.f32 %v2611, %v2629
    %v2634 = vmul.f32 %v2613, %v2630
    %v2635 = vmul.f32 %v2615, %v2631
    %v2636 = vpack.c.bf16 %v2633, %v2632
    %v2637 = vpack.c.bf16 %v2635, %v2634
    %v2639 = vsel %vm448, %v2636, 0
    %2641 = vmatprep.subr.bf16.mxu0 0
    %2642 = vmatpush1.bf16.msra.mxu0 %v2488
    %2643 = vmatprep.subr.bf16.mxu0 0
    %2644 = vmatpush1.bf16.msra.mxu0 0
    %2645 = vmatprep.subr.bf16.mxu0 0
    %2646 = vmatpush1.bf16.msra.mxu0 0
    %2647 = vmatprep.subr.bf16.mxu0 0
    %2648 = vmatpush1.bf16.msra.mxu0 0
    %2649 = vmatprep.subr.bf16.mxu0 0
    %2650 = vmatpush1.bf16.msra.mxu0 0
    %2651 = vmatprep.subr.bf16.mxu0 0
    %2652 = vmatpush1.bf16.msra.mxu0 0
    %2653 = vmatprep.subr.bf16.mxu0 0
    %2654 = vmatpush1.bf16.msra.mxu0 0
    %2655 = vmatprep.subr.bf16.mxu0 0
    %2656 = vmatpush1.bf16.msra.mxu0 0
    %2657 = vmatprep.subr.bf16.mxu0 0
    %2658 = vmatpush1.bf16.msra.mxu0 0
    %2659 = vmatprep.subr.bf16.mxu0 0
    %2660 = vmatpush1.bf16.msra.mxu0 0
    %2661 = vmatprep.subr.bf16.mxu0 0
    %2662 = vmatpush1.bf16.msra.mxu0 0
    %2663 = vmatprep.subr.bf16.mxu0 0
    %2664 = vmatpush1.bf16.msra.mxu0 0
    %2665 = vmatprep.subr.bf16.mxu0 0
    %2666 = vmatpush1.bf16.msra.mxu0 0
    %2667 = vmatprep.subr.bf16.mxu0 0
    %2668 = vmatpush1.bf16.msra.mxu0 0
    %2669 = vmatprep.subr.bf16.mxu0 0
    %2670 = vmatpush1.bf16.msra.mxu0 0
    %2671 = vmatprep.subr.bf16.mxu0 0
    %2672 = vmatpush1.bf16.msra.mxu0 0
    %2673 = vmatprep.mubr.bf16.mxu0 0
    %2674 = vmatmul.mubr.bf16.gmra.mrb[0].mxu0 %v2639
    %v2675 = vpop.f32.mrb[0].mxu0
    %v2676 = vadd.f32 0.0, %v2675
    %v2677 = vpop.f32.mrb[0].mxu0
    %v2678 = vpop.f32.mrb[0].mxu0
    %v2679 = vadd.f32 0.0, %v2678
    %v2680 = vpop.f32.mrb[0].mxu0
    %2681 = vdwg.mxu0
    %v2683 = vsel %vm448, %v2637, 0
    %2685 = vmatprep.subr.bf16.mxu0 0
    %2686 = vmatpush1.bf16.msra.mxu0 %v2489
    %2687 = vmatprep.subr.bf16.mxu0 0
    %2688 = vmatpush1.bf16.msra.mxu0 0
    %2689 = vmatprep.subr.bf16.mxu0 0
    %2690 = vmatpush1.bf16.msra.mxu0 0
    %2691 = vmatprep.subr.bf16.mxu0 0
    %2692 = vmatpush1.bf16.msra.mxu0 0
    %2693 = vmatprep.subr.bf16.mxu0 0
    %2694 = vmatpush1.bf16.msra.mxu0 0
    %2695 = vmatprep.subr.bf16.mxu0 0
    %2696 = vmatpush1.bf16.msra.mxu0 0
    %2697 = vmatprep.subr.bf16.mxu0 0
    %2698 = vmatpush1.bf16.msra.mxu0 0
    %2699 = vmatprep.subr.bf16.mxu0 0
    %2700 = vmatpush1.bf16.msra.mxu0 0
    %2701 = vmatprep.subr.bf16.mxu0 0
    %2702 = vmatpush1.bf16.msra.mxu0 0
    %2703 = vmatprep.subr.bf16.mxu0 0
    %2704 = vmatpush1.bf16.msra.mxu0 0
    %2705 = vmatprep.subr.bf16.mxu0 0
    %2706 = vmatpush1.bf16.msra.mxu0 0
    %2707 = vmatprep.subr.bf16.mxu0 0
    %2708 = vmatpush1.bf16.msra.mxu0 0
    %2709 = vmatprep.subr.bf16.mxu0 0
    %2710 = vmatpush1.bf16.msra.mxu0 0
    %2711 = vmatprep.subr.bf16.mxu0 0
    %2712 = vmatpush1.bf16.msra.mxu0 0
    %2713 = vmatprep.subr.bf16.mxu0 0
    %2714 = vmatpush1.bf16.msra.mxu0 0
    %2715 = vmatprep.subr.bf16.mxu0 0
    %2716 = vmatpush1.bf16.msra.mxu0 0
    %2717 = vmatprep.mubr.bf16.mxu0 0
    %2718 = vmatmul.mubr.bf16.gmra.mrb[0].mxu0 %v2683
    %v2719 = vpop.f32.mrb[0].mxu0
    %v2720 = vadd.f32 0.0, %v2719
    %v2721 = vpop.f32.mrb[0].mxu0
    %v2722 = vpop.f32.mrb[0].mxu0
    %v2723 = vadd.f32 0.0, %v2722
    %v2724 = vpop.f32.mrb[0].mxu0
    %2725 = vdwg.mxu0
    %v2726 = vpack.c.bf16 %v2679, %v2676
    %v2727 = vpack.c.bf16 %v2723, %v2720
    %v2728 = vld [vmem:[#allocation19] sm:$0xf]
    %v2729 = vld [vmem:[#allocation19 + $0x4] sm:$0xf]
    %s2730 = scalar_lea.vmem %s24, 16
    %v2731 = vld [vmem:[%s2730] sm:$0xff]
    %v2732 = vld [vmem:[%s2730 + $0x8] sm:$0xff]
    %2733 = vrot.lane.b32.xlu0 %v2486, 112
    %v2734 = vpop.permute.xlu0 %2733
    %2735 = vrot.lane.b32.xlu0 %v2486, 48
    %v2736 = vpop.permute.xlu0 %2735
    %v2738 = vsel %vm448, %v2734, 0
    %v2741 = vsel %vm448, %v2736, 0
    %2743 = vmatprep.subr.bf16.mxu0 0
    %2744 = vmatpush1.bf16.xpose.msra.mxu0 %v2741
    %2745 = vmatprep.subr.bf16.mxu0 0
    %2746 = vmatpush1.bf16.xpose.msra.mxu0 0
    %2747 = vmatprep.subr.bf16.mxu0 0
    %2748 = vmatpush1.bf16.xpose.msra.mxu0 0
    %2749 = vmatprep.subr.bf16.mxu0 0
    %2750 = vmatpush1.bf16.xpose.msra.mxu0 0
    %2751 = vmatprep.subr.bf16.mxu0 0
    %2752 = vmatpush1.bf16.xpose.msra.mxu0 0
    %2753 = vmatprep.subr.bf16.mxu0 0
    %2754 = vmatpush1.bf16.xpose.msra.mxu0 0
    %2755 = vmatprep.subr.bf16.mxu0 0
    %2756 = vmatpush1.bf16.xpose.msra.mxu0 0
    %2757 = vmatprep.subr.bf16.mxu0 0
    %2758 = vmatpush1.bf16.xpose.msra.mxu0 0
    %2759 = vmatprep.subr.bf16.mxu0 0
    %2760 = vmatpush1.bf16.xpose.msra.mxu0 0
    %2761 = vmatprep.subr.bf16.mxu0 0
    %2762 = vmatpush1.bf16.xpose.msra.mxu0 0
    %2763 = vmatprep.subr.bf16.mxu0 0
    %2764 = vmatpush1.bf16.xpose.msra.mxu0 0
    %2765 = vmatprep.subr.bf16.mxu0 0
    %2766 = vmatpush1.bf16.xpose.msra.mxu0 0
    %2767 = vmatprep.subr.bf16.mxu0 0
    %2768 = vmatpush1.bf16.xpose.msra.mxu0 0
    %2769 = vmatprep.subr.bf16.mxu0 0
    %2770 = vmatpush1.bf16.xpose.msra.mxu0 0
    %2771 = vmatprep.subr.bf16.mxu0 0
    %2772 = vmatpush1.bf16.xpose.msra.mxu0 0
    %2773 = vmatprep.subr.bf16.mxu0 0
    %2774 = vmatpush1.bf16.xpose.msra.mxu0 0
    %2775 = vmatprep.mubr.bf16.mxu0 0
    %2776 = vmatmul.mubr.bf16.gmra.mrb[0].mxu0 %v2738
    %v2777 = vpop.f32.mrb[0].mxu0
    %v2778 = vadd.f32 %v2731, %v2777
    %v2779 = vpop.f32.mrb[0].mxu0
    %v2780 = vpop.f32.mrb[0].mxu0
    %v2781 = vadd.f32 %v2732, %v2780
    %v2782 = vpop.f32.mrb[0].mxu0
    %2783 = vdwg.mxu0
    %2784 = vrot.lane.b32.xlu0 %v2487, 112
    %v2785 = vpop.permute.xlu0 %2784
    %2786 = vrot.lane.b32.xlu0 %v2487, 48
    %v2787 = vpop.permute.xlu0 %2786
    %v2789 = vsel %vm448, %v2785, 0
    %v2792 = vsel %vm448, %v2787, 0
    %2794 = vmatprep.subr.bf16.mxu0 0
    %2795 = vmatpush1.bf16.xpose.msra.mxu0 %v2792
    %2796 = vmatprep.subr.bf16.mxu0 0
    %2797 = vmatpush1.bf16.xpose.msra.mxu0 0
    %2798 = vmatprep.subr.bf16.mxu0 0
    %2799 = vmatpush1.bf16.xpose.msra.mxu0 0
    %2800 = vmatprep.subr.bf16.mxu0 0
    %2801 = vmatpush1.bf16.xpose.msra.mxu0 0
    %2802 = vmatprep.subr.bf16.mxu0 0
    %2803 = vmatpush1.bf16.xpose.msra.mxu0 0
    %2804 = vmatprep.subr.bf16.mxu0 0
    %2805 = vmatpush1.bf16.xpose.msra.mxu0 0
    %2806 = vmatprep.subr.bf16.mxu0 0
    %2807 = vmatpush1.bf16.xpose.msra.mxu0 0
    %2808 = vmatprep.subr.bf16.mxu0 0
    %2809 = vmatpush1.bf16.xpose.msra.mxu0 0
    %2810 = vmatprep.subr.bf16.mxu0 0
    %2811 = vmatpush1.bf16.xpose.msra.mxu0 0
    %2812 = vmatprep.subr.bf16.mxu0 0
    %2813 = vmatpush1.bf16.xpose.msra.mxu0 0
    %2814 = vmatprep.subr.bf16.mxu0 0
    %2815 = vmatpush1.bf16.xpose.msra.mxu0 0
    %2816 = vmatprep.subr.bf16.mxu0 0
    %2817 = vmatpush1.bf16.xpose.msra.mxu0 0
    %2818 = vmatprep.subr.bf16.mxu0 0
    %2819 = vmatpush1.bf16.xpose.msra.mxu0 0
    %2820 = vmatprep.subr.bf16.mxu0 0
    %2821 = vmatpush1.bf16.xpose.msra.mxu0 0
    %2822 = vmatprep.subr.bf16.mxu0 0
    %2823 = vmatpush1.bf16.xpose.msra.mxu0 0
    %2824 = vmatprep.subr.bf16.mxu0 0
    %2825 = vmatpush1.bf16.xpose.msra.mxu0 0
    %2826 = vmatprep.mubr.bf16.mxu0 0
    %2827 = vmatmul.mubr.bf16.gmra.mrb[0].mxu0 %v2789
    %v2828 = vpop.f32.mrb[0].mxu0
    %v2829 = vadd.f32 %v2731, %v2828
    %v2830 = vpop.f32.mrb[0].mxu0
    %v2831 = vpop.f32.mrb[0].mxu0
    %v2832 = vadd.f32 %v2732, %v2831
    %v2833 = vpop.f32.mrb[0].mxu0
    %2834 = vdwg.mxu0
    %v2835 = vsel %vm448, %v2778, -inf
    %2836 = vmax.xlane.f32.xlu0 %v2835
    %v2837 = vpop.xlane.xlu0 %2836
    %v2838 = vsel %vm448, %v2781, -inf
    %2839 = vmax.xlane.f32.xlu0 %v2838
    %v2840 = vpop.xlane.xlu0 %2839
    %v2841 = vsel %vm448, %v2829, -inf
    %2842 = vmax.xlane.f32.xlu0 %v2841
    %v2843 = vpop.xlane.xlu0 %2842
    %v2844 = vsel %vm448, %v2832, -inf
    %2845 = vmax.xlane.f32.xlu0 %v2844
    %v2846 = vpop.xlane.xlu0 %2845
    %v2847 = vsub.f32 %v2778, %v2837
    %v2848 = vsub.f32 %v2781, %v2840
    %v2849 = vsub.f32 %v2829, %v2843
    %v2850 = vsub.f32 %v2832, %v2846
    %v2851 = vmul.f32 %v2847, 1.442695
    %v2852 = vpow.pop %v2851
    %v2853 = vmul.f32 %v2848, 1.442695
    %v2854 = vpow.pop %v2853
    %v2855 = vmul.f32 %v2849, 1.442695
    %v2856 = vpow.pop %v2855
    %v2857 = vmul.f32 %v2850, 1.442695
    %v2858 = vpow.pop %v2857
    %v2859 = vsel %vm448, %v2852, 0.0
    %2860 = vadd.xlane.f32.xlu0 %v2859
    %v2861 = vpop.xlane.xlu0 %2860
    %v2862 = vsel %vm448, %v2854, 0.0
    %2863 = vadd.xlane.f32.xlu0 %v2862
    %v2864 = vpop.xlane.xlu0 %2863
    %v2865 = vsel %vm448, %v2856, 0.0
    %2866 = vadd.xlane.f32.xlu0 %v2865
    %v2867 = vpop.xlane.xlu0 %2866
    %v2868 = vsel %vm448, %v2858, 0.0
    %2869 = vadd.xlane.f32.xlu0 %v2868
    %v2870 = vpop.xlane.xlu0 %2869
    %v2871 = vrcp.pop %v2861
    %v2872 = vrcp.pop %v2864
    %v2873 = vrcp.pop %v2867
    %v2874 = vrcp.pop %v2870
    %v2875 = vmul.f32 %v2852, %v2871
    %v2876 = vmul.f32 %v2854, %v2872
    %v2877 = vmul.f32 %v2856, %v2873
    %v2878 = vmul.f32 %v2858, %v2874
    %v2879 = vpack.c.bf16 %v2876, %v2875
    %v2880 = vpack.c.bf16 %v2878, %v2877
    %2882 = vrot.lane.b32.xlu0 %v2488, 112
    %v2883 = vpop.permute.xlu0 %2882
    %v2886 = vsel %vm448, %v2879, 0
    %2888 = vmatprep.subr.bf16.mxu0 0
    %2889 = vmatpush1.bf16.msra.mxu0 %v2883
    %2890 = vmatprep.subr.bf16.mxu0 0
    %2891 = vmatpush1.bf16.msra.mxu0 0
    %2892 = vmatprep.subr.bf16.mxu0 0
    %2893 = vmatpush1.bf16.msra.mxu0 0
    %2894 = vmatprep.subr.bf16.mxu0 0
    %2895 = vmatpush1.bf16.msra.mxu0 0
    %2896 = vmatprep.subr.bf16.mxu0 0
    %2897 = vmatpush1.bf16.msra.mxu0 0
    %2898 = vmatprep.subr.bf16.mxu0 0
    %2899 = vmatpush1.bf16.msra.mxu0 0
    %2900 = vmatprep.subr.bf16.mxu0 0
    %2901 = vmatpush1.bf16.msra.mxu0 0
    %2902 = vmatprep.subr.bf16.mxu0 0
    %2903 = vmatpush1.bf16.msra.mxu0 0
    %2904 = vmatprep.subr.bf16.mxu0 0
    %2905 = vmatpush1.bf16.msra.mxu0 0
    %2906 = vmatprep.subr.bf16.mxu0 0
    %2907 = vmatpush1.bf16.msra.mxu0 0
    %2908 = vmatprep.subr.bf16.mxu0 0
    %2909 = vmatpush1.bf16.msra.mxu0 0
    %2910 = vmatprep.subr.bf16.mxu0 0
    %2911 = vmatpush1.bf16.msra.mxu0 0
    %2912 = vmatprep.subr.bf16.mxu0 0
    %2913 = vmatpush1.bf16.msra.mxu0 0
    %2914 = vmatprep.subr.bf16.mxu0 0
    %2915 = vmatpush1.bf16.msra.mxu0 0
    %2916 = vmatprep.subr.bf16.mxu0 0
    %2917 = vmatpush1.bf16.msra.mxu0 0
    %2918 = vmatprep.subr.bf16.mxu0 0
    %2919 = vmatpush1.bf16.msra.mxu0 0
    %2920 = vmatprep.mubr.bf16.mxu0 0
    %2921 = vmatmul.mubr.bf16.gmra.mrb[0].mxu0 %v2886
    %v2922 = vpop.f32.mrb[0].mxu0
    %v2923 = vadd.f32 0.0, %v2922
    %v2924 = vpop.f32.mrb[0].mxu0
    %v2925 = vpop.f32.mrb[0].mxu0
    %v2926 = vadd.f32 0.0, %v2925
    %v2927 = vpop.f32.mrb[0].mxu0
    %2928 = vdwg.mxu0
    %2930 = vrot.lane.b32.xlu0 %v2489, 112
    %v2931 = vpop.permute.xlu0 %2930
    %v2934 = vsel %vm448, %v2880, 0
    %2936 = vmatprep.subr.bf16.mxu0 0
    %2937 = vmatpush1.bf16.msra.mxu0 %v2931
    %2938 = vmatprep.subr.bf16.mxu0 0
    %2939 = vmatpush1.bf16.msra.mxu0 0
    %2940 = vmatprep.subr.bf16.mxu0 0
    %2941 = vmatpush1.bf16.msra.mxu0 0
    %2942 = vmatprep.subr.bf16.mxu0 0
    %2943 = vmatpush1.bf16.msra.mxu0 0
    %2944 = vmatprep.subr.bf16.mxu0 0
    %2945 = vmatpush1.bf16.msra.mxu0 0
    %2946 = vmatprep.subr.bf16.mxu0 0
    %2947 = vmatpush1.bf16.msra.mxu0 0
    %2948 = vmatprep.subr.bf16.mxu0 0
    %2949 = vmatpush1.bf16.msra.mxu0 0
    %2950 = vmatprep.subr.bf16.mxu0 0
    %2951 = vmatpush1.bf16.msra.mxu0 0
    %2952 = vmatprep.subr.bf16.mxu0 0
    %2953 = vmatpush1.bf16.msra.mxu0 0
    %2954 = vmatprep.subr.bf16.mxu0 0
    %2955 = vmatpush1.bf16.msra.mxu0 0
    %2956 = vmatprep.subr.bf16.mxu0 0
    %2957 = vmatpush1.bf16.msra.mxu0 0
    %2958 = vmatprep.subr.bf16.mxu0 0
    %2959 = vmatpush1.bf16.msra.mxu0 0
    %2960 = vmatprep.subr.bf16.mxu0 0
    %2961 = vmatpush1.bf16.msra.mxu0 0
    %2962 = vmatprep.subr.bf16.mxu0 0
    %2963 = vmatpush1.bf16.msra.mxu0 0
    %2964 = vmatprep.subr.bf16.mxu0 0
    %2965 = vmatpush1.bf16.msra.mxu0 0
    %2966 = vmatprep.subr.bf16.mxu0 0
    %2967 = vmatpush1.bf16.msra.mxu0 0
    %2968 = vmatprep.mubr.bf16.mxu0 0
    %2969 = vmatmul.mubr.bf16.gmra.mrb[0].mxu0 %v2934
    %v2970 = vpop.f32.mrb[0].mxu0
    %v2971 = vadd.f32 0.0, %v2970
    %v2972 = vpop.f32.mrb[0].mxu0
    %v2973 = vpop.f32.mrb[0].mxu0
    %v2974 = vadd.f32 0.0, %v2973
    %v2975 = vpop.f32.mrb[0].mxu0
    %2976 = vdwg.mxu0
    %v2977 = vpack.c.bf16 %v2926, %v2923
    %v2978 = vpack.c.bf16 %v2974, %v2971
    %v2979 = vld [vmem:[#allocation19 + $0x8] sm:$0xf]
    %v2980 = vld [vmem:[#allocation19 + $0xc] sm:$0xf]
    %v2983 = vunpack.c.l.b16 %v2979
    %v2984 = vunpack.c.l.b16 %v2980
    %v2985 = vpack.c.b16 %v2984, %v2983
    %v2988 = vsel %vm448, %v2977, 0
    %v2991 = vsel %vm448, %v2978, 0
    %2993 = vmatprep.subr.bf16.mxu0 0
    %2994 = vmatpush1.bf16.msra.mxu0 %v2985
    %2995 = vmatprep.subr.bf16.mxu0 0
    %2996 = vmatpush1.bf16.msra.mxu0 0
    %2997 = vmatprep.subr.bf16.mxu0 0
    %2998 = vmatpush1.bf16.msra.mxu0 0
    %2999 = vmatprep.subr.bf16.mxu0 0
    %3000 = vmatpush1.bf16.msra.mxu0 0
    %3001 = vmatprep.subr.bf16.mxu0 0
    %3002 = vmatpush1.bf16.msra.mxu0 0
    %3003 = vmatprep.subr.bf16.mxu0 0
    %3004 = vmatpush1.bf16.msra.mxu0 0
    %3005 = vmatprep.subr.bf16.mxu0 0
    %3006 = vmatpush1.bf16.msra.mxu0 0
    %3007 = vmatprep.subr.bf16.mxu0 0
    %3008 = vmatpush1.bf16.msra.mxu0 0
    %3009 = vmatprep.subr.bf16.mxu0 0
    %3010 = vmatpush1.bf16.msra.mxu0 0
    %3011 = vmatprep.subr.bf16.mxu0 0
    %3012 = vmatpush1.bf16.msra.mxu0 0
    %3013 = vmatprep.subr.bf16.mxu0 0
    %3014 = vmatpush1.bf16.msra.mxu0 0
    %3015 = vmatprep.subr.bf16.mxu0 0
    %3016 = vmatpush1.bf16.msra.mxu0 0
    %3017 = vmatprep.subr.bf16.mxu0 0
    %3018 = vmatpush1.bf16.msra.mxu0 0
    %3019 = vmatprep.subr.bf16.mxu0 0
    %3020 = vmatpush1.bf16.msra.mxu0 0
    %3021 = vmatprep.subr.bf16.mxu0 0
    %3022 = vmatpush1.bf16.msra.mxu0 0
    %3023 = vmatprep.subr.bf16.mxu0 0
    %3024 = vmatpush1.bf16.msra.mxu0 0
    %3025 = vmatprep.mubr.bf16.mxu0 0
    %3026 = vmatmul.mubr.bf16.gmra.mrb[0].mxu0 %v2988
    %v3027 = vpop.f32.mrb[0].mxu0
    %v3028 = vadd.f32 0.0, %v3027
    %v3029 = vpop.f32.mrb[0].mxu0
    %v3030 = vpop.f32.mrb[0].mxu0
    %v3031 = vadd.f32 0.0, %v3030
    %v3032 = vpop.f32.mrb[0].mxu0
    %3033 = vmatprep.mubr.bf16.mxu0 0
    %3034 = vmatmul.mubr.bf16.gmra.mrb[0].mxu0 %v2991
    %v3035 = vpop.f32.mrb[0].mxu0
    %v3036 = vadd.f32 0.0, %v3035
    %v3037 = vpop.f32.mrb[0].mxu0
    %v3038 = vpop.f32.mrb[0].mxu0
    %v3039 = vadd.f32 0.0, %v3038
    %v3040 = vpop.f32.mrb[0].mxu0
    %3041 = vdwg.mxu0
    %v3044 = vunpack.c.l.b16 %v2728
    %v3045 = vunpack.c.l.b16 %v2729
    %v3046 = vpack.c.b16 %v3045, %v3044
    %v3049 = vsel %vm448, %v2726, 0
    %v3052 = vsel %vm448, %v2727, 0
    %3054 = vmatprep.subr.bf16.mxu0 0
    %3055 = vmatpush1.bf16.msra.mxu0 %v3046
    %3056 = vmatprep.subr.bf16.mxu0 0
    %3057 = vmatpush1.bf16.msra.mxu0 0
    %3058 = vmatprep.subr.bf16.mxu0 0
    %3059 = vmatpush1.bf16.msra.mxu0 0
    %3060 = vmatprep.subr.bf16.mxu0 0
    %3061 = vmatpush1.bf16.msra.mxu0 0
    %3062 = vmatprep.subr.bf16.mxu0 0
    %3063 = vmatpush1.bf16.msra.mxu0 0
    %3064 = vmatprep.subr.bf16.mxu0 0
    %3065 = vmatpush1.bf16.msra.mxu0 0
    %3066 = vmatprep.subr.bf16.mxu0 0
    %3067 = vmatpush1.bf16.msra.mxu0 0
    %3068 = vmatprep.subr.bf16.mxu0 0
    %3069 = vmatpush1.bf16.msra.mxu0 0
    %3070 = vmatprep.subr.bf16.mxu0 0
    %3071 = vmatpush1.bf16.msra.mxu0 0
    %3072 = vmatprep.subr.bf16.mxu0 0
    %3073 = vmatpush1.bf16.msra.mxu0 0
    %3074 = vmatprep.subr.bf16.mxu0 0
    %3075 = vmatpush1.bf16.msra.mxu0 0
    %3076 = vmatprep.subr.bf16.mxu0 0
    %3077 = vmatpush1.bf16.msra.mxu0 0
    %3078 = vmatprep.subr.bf16.mxu0 0
    %3079 = vmatpush1.bf16.msra.mxu0 0
    %3080 = vmatprep.subr.bf16.mxu0 0
    %3081 = vmatpush1.bf16.msra.mxu0 0
    %3082 = vmatprep.subr.bf16.mxu0 0
    %3083 = vmatpush1.bf16.msra.mxu0 0
    %3084 = vmatprep.subr.bf16.mxu0 0
    %3085 = vmatpush1.bf16.msra.mxu0 0
    %3086 = vmatprep.mubr.bf16.mxu0 0
    %3087 = vmatmul.mubr.bf16.gmra.mrb[0].mxu0 %v3049
    %v3088 = vpop.f32.mrb[0].mxu0
    %v3089 = vadd.f32 %v3028, %v3088
    %v3090 = vpop.f32.mrb[0].mxu0
    %v3091 = vpop.f32.mrb[0].mxu0
    %v3092 = vadd.f32 %v3031, %v3091
    %v3093 = vpop.f32.mrb[0].mxu0
    %3094 = vmatprep.mubr.bf16.mxu0 0
    %3095 = vmatmul.mubr.bf16.gmra.mrb[0].mxu0 %v3052
    %v3096 = vpop.f32.mrb[0].mxu0
    %v3097 = vadd.f32 %v3036, %v3096
    %v3098 = vpop.f32.mrb[0].mxu0
    %v3099 = vpop.f32.mrb[0].mxu0
    %v3100 = vadd.f32 %v3039, %v3099
    %v3101 = vpop.f32.mrb[0].mxu0
    %3102 = vdwg.mxu0
    %s3103 = scalar_lea.vmem %s24, 32
    %v3104 = vld [vmem:[%s3103] sm:$0xff]
    %v3105 = vld [vmem:[%s3103 + $0x8] sm:$0xff]
    %3106 = vrot.lane.b32.xlu0 %v2486, 96
    %v3107 = vpop.permute.xlu0 %3106
    %3108 = vrot.lane.b32.xlu0 %v2486, 32
    %v3109 = vpop.permute.xlu0 %3108
    %v3111 = vsel %vm448, %v3107, 0
    %v3114 = vsel %vm448, %v3109, 0
    %3116 = vmatprep.subr.bf16.mxu0 0
    %3117 = vmatpush1.bf16.xpose.msra.mxu0 %v3114
    %3118 = vmatprep.subr.bf16.mxu0 0
    %3119 = vmatpush1.bf16.xpose.msra.mxu0 0
    %3120 = vmatprep.subr.bf16.mxu0 0
    %3121 = vmatpush1.bf16.xpose.msra.mxu0 0
    %3122 = vmatprep.subr.bf16.mxu0 0
    %3123 = vmatpush1.bf16.xpose.msra.mxu0 0
    %3124 = vmatprep.subr.bf16.mxu0 0
    %3125 = vmatpush1.bf16.xpose.msra.mxu0 0
    %3126 = vmatprep.subr.bf16.mxu0 0
    %3127 = vmatpush1.bf16.xpose.msra.mxu0 0
    %3128 = vmatprep.subr.bf16.mxu0 0
    %3129 = vmatpush1.bf16.xpose.msra.mxu0 0
    %3130 = vmatprep.subr.bf16.mxu0 0
    %3131 = vmatpush1.bf16.xpose.msra.mxu0 0
    %3132 = vmatprep.subr.bf16.mxu0 0
    %3133 = vmatpush1.bf16.xpose.msra.mxu0 0
    %3134 = vmatprep.subr.bf16.mxu0 0
    %3135 = vmatpush1.bf16.xpose.msra.mxu0 0
    %3136 = vmatprep.subr.bf16.mxu0 0
    %3137 = vmatpush1.bf16.xpose.msra.mxu0 0
    %3138 = vmatprep.subr.bf16.mxu0 0
    %3139 = vmatpush1.bf16.xpose.msra.mxu0 0
    %3140 = vmatprep.subr.bf16.mxu0 0
    %3141 = vmatpush1.bf16.xpose.msra.mxu0 0
    %3142 = vmatprep.subr.bf16.mxu0 0
    %3143 = vmatpush1.bf16.xpose.msra.mxu0 0
    %3144 = vmatprep.subr.bf16.mxu0 0
    %3145 = vmatpush1.bf16.xpose.msra.mxu0 0
    %3146 = vmatprep.subr.bf16.mxu0 0
    %3147 = vmatpush1.bf16.xpose.msra.mxu0 0
    %3148 = vmatprep.mubr.bf16.mxu0 0
    %3149 = vmatmul.mubr.bf16.gmra.mrb[0].mxu0 %v3111
    %v3150 = vpop.f32.mrb[0].mxu0
    %v3151 = vadd.f32 %v3104, %v3150
    %v3152 = vpop.f32.mrb[0].mxu0
    %v3153 = vpop.f32.mrb[0].mxu0
    %v3154 = vadd.f32 %v3105, %v3153
    %v3155 = vpop.f32.mrb[0].mxu0
    %3156 = vdwg.mxu0
    %3157 = vrot.lane.b32.xlu0 %v2487, 96
    %v3158 = vpop.permute.xlu0 %3157
    %3159 = vrot.lane.b32.xlu0 %v2487, 32
    %v3160 = vpop.permute.xlu0 %3159
    %v3162 = vsel %vm448, %v3158, 0
    %v3165 = vsel %vm448, %v3160, 0
    %3167 = vmatprep.subr.bf16.mxu0 0
    %3168 = vmatpush1.bf16.xpose.msra.mxu0 %v3165
    %3169 = vmatprep.subr.bf16.mxu0 0
    %3170 = vmatpush1.bf16.xpose.msra.mxu0 0
    %3171 = vmatprep.subr.bf16.mxu0 0
    %3172 = vmatpush1.bf16.xpose.msra.mxu0 0
    %3173 = vmatprep.subr.bf16.mxu0 0
    %3174 = vmatpush1.bf16.xpose.msra.mxu0 0
    %3175 = vmatprep.subr.bf16.mxu0 0
    %3176 = vmatpush1.bf16.xpose.msra.mxu0 0
    %3177 = vmatprep.subr.bf16.mxu0 0
    %3178 = vmatpush1.bf16.xpose.msra.mxu0 0
    %3179 = vmatprep.subr.bf16.mxu0 0
    %3180 = vmatpush1.bf16.xpose.msra.mxu0 0
    %3181 = vmatprep.subr.bf16.mxu0 0
    %3182 = vmatpush1.bf16.xpose.msra.mxu0 0
    %3183 = vmatprep.subr.bf16.mxu0 0
    %3184 = vmatpush1.bf16.xpose.msra.mxu0 0
    %3185 = vmatprep.subr.bf16.mxu0 0
    %3186 = vmatpush1.bf16.xpose.msra.mxu0 0
    %3187 = vmatprep.subr.bf16.mxu0 0
    %3188 = vmatpush1.bf16.xpose.msra.mxu0 0
    %3189 = vmatprep.subr.bf16.mxu0 0
    %3190 = vmatpush1.bf16.xpose.msra.mxu0 0
    %3191 = vmatprep.subr.bf16.mxu0 0
    %3192 = vmatpush1.bf16.xpose.msra.mxu0 0
    %3193 = vmatprep.subr.bf16.mxu0 0
    %3194 = vmatpush1.bf16.xpose.msra.mxu0 0
    %3195 = vmatprep.subr.bf16.mxu0 0
    %3196 = vmatpush1.bf16.xpose.msra.mxu0 0
    %3197 = vmatprep.subr.bf16.mxu0 0
    %3198 = vmatpush1.bf16.xpose.msra.mxu0 0
    %3199 = vmatprep.mubr.bf16.mxu0 0
    %3200 = vmatmul.mubr.bf16.gmra.mrb[0].mxu0 %v3162
    %v3201 = vpop.f32.mrb[0].mxu0
    %v3202 = vadd.f32 %v3104, %v3201
    %v3203 = vpop.f32.mrb[0].mxu0
    %v3204 = vpop.f32.mrb[0].mxu0
    %v3205 = vadd.f32 %v3105, %v3204
    %v3206 = vpop.f32.mrb[0].mxu0
    %3207 = vdwg.mxu0
    %v3208 = vsel %vm448, %v3151, -inf
    %3209 = vmax.xlane.f32.xlu0 %v3208
    %v3210 = vpop.xlane.xlu0 %3209
    %v3211 = vsel %vm448, %v3154, -inf
    %3212 = vmax.xlane.f32.xlu0 %v3211
    %v3213 = vpop.xlane.xlu0 %3212
    %v3214 = vsel %vm448, %v3202, -inf
    %3215 = vmax.xlane.f32.xlu0 %v3214
    %v3216 = vpop.xlane.xlu0 %3215
    %v3217 = vsel %vm448, %v3205, -inf
    %3218 = vmax.xlane.f32.xlu0 %v3217
    %v3219 = vpop.xlane.xlu0 %3218
    %v3220 = vsub.f32 %v3151, %v3210
    %v3221 = vsub.f32 %v3154, %v3213
    %v3222 = vsub.f32 %v3202, %v3216
    %v3223 = vsub.f32 %v3205, %v3219
    %v3224 = vmul.f32 %v3220, 1.442695
    %v3225 = vpow.pop %v3224
    %v3226 = vmul.f32 %v3221, 1.442695
    %v3227 = vpow.pop %v3226
    %v3228 = vmul.f32 %v3222, 1.442695
    %v3229 = vpow.pop %v3228
    %v3230 = vmul.f32 %v3223, 1.442695
    %v3231 = vpow.pop %v3230
    %v3232 = vsel %vm448, %v3225, 0.0
    %3233 = vadd.xlane.f32.xlu0 %v3232
    %v3234 = vpop.xlane.xlu0 %3233
    %v3235 = vsel %vm448, %v3227, 0.0
    %3236 = vadd.xlane.f32.xlu0 %v3235
    %v3237 = vpop.xlane.xlu0 %3236
    %v3238 = vsel %vm448, %v3229, 0.0
    %3239 = vadd.xlane.f32.xlu0 %v3238
    %v3240 = vpop.xlane.xlu0 %3239
    %v3241 = vsel %vm448, %v3231, 0.0
    %3242 = vadd.xlane.f32.xlu0 %v3241
    %v3243 = vpop.xlane.xlu0 %3242
    %v3244 = vrcp.pop %v3234
    %v3245 = vrcp.pop %v3237
    %v3246 = vrcp.pop %v3240
    %v3247 = vrcp.pop %v3243
    %v3248 = vmul.f32 %v3225, %v3244
    %v3249 = vmul.f32 %v3227, %v3245
    %v3250 = vmul.f32 %v3229, %v3246
    %v3251 = vmul.f32 %v3231, %v3247
    %v3252 = vpack.c.bf16 %v3249, %v3248
    %v3253 = vpack.c.bf16 %v3251, %v3250
    %3254 = vrot.lane.b32.xlu0 %v2488, 96
    %v3255 = vpop.permute.xlu0 %3254
    %v3258 = vsel %vm448, %v3252, 0
    %3260 = vmatprep.subr.bf16.mxu0 0
    %3261 = vmatpush1.bf16.msra.mxu0 %v3255
    %3262 = vmatprep.subr.bf16.mxu0 0
    %3263 = vmatpush1.bf16.msra.mxu0 0
    %3264 = vmatprep.subr.bf16.mxu0 0
    %3265 = vmatpush1.bf16.msra.mxu0 0
    %3266 = vmatprep.subr.bf16.mxu0 0
    %3267 = vmatpush1.bf16.msra.mxu0 0
    %3268 = vmatprep.subr.bf16.mxu0 0
    %3269 = vmatpush1.bf16.msra.mxu0 0
    %3270 = vmatprep.subr.bf16.mxu0 0
    %3271 = vmatpush1.bf16.msra.mxu0 0
    %3272 = vmatprep.subr.bf16.mxu0 0
    %3273 = vmatpush1.bf16.msra.mxu0 0
    %3274 = vmatprep.subr.bf16.mxu0 0
    %3275 = vmatpush1.bf16.msra.mxu0 0
    %3276 = vmatprep.subr.bf16.mxu0 0
    %3277 = vmatpush1.bf16.msra.mxu0 0
    %3278 = vmatprep.subr.bf16.mxu0 0
    %3279 = vmatpush1.bf16.msra.mxu0 0
    %3280 = vmatprep.subr.bf16.mxu0 0
    %3281 = vmatpush1.bf16.msra.mxu0 0
    %3282 = vmatprep.subr.bf16.mxu0 0
    %3283 = vmatpush1.bf16.msra.mxu0 0
    %3284 = vmatprep.subr.bf16.mxu0 0
    %3285 = vmatpush1.bf16.msra.mxu0 0
    %3286 = vmatprep.subr.bf16.mxu0 0
    %3287 = vmatpush1.bf16.msra.mxu0 0
    %3288 = vmatprep.subr.bf16.mxu0 0
    %3289 = vmatpush1.bf16.msra.mxu0 0
    %3290 = vmatprep.subr.bf16.mxu0 0
    %3291 = vmatpush1.bf16.msra.mxu0 0
    %3292 = vmatprep.mubr.bf16.mxu0 0
    %3293 = vmatmul.mubr.bf16.gmra.mrb[0].mxu0 %v3258
    %v3294 = vpop.f32.mrb[0].mxu0
    %v3295 = vadd.f32 0.0, %v3294
    %v3296 = vpop.f32.mrb[0].mxu0
    %v3297 = vpop.f32.mrb[0].mxu0
    %v3298 = vadd.f32 0.0, %v3297
    %v3299 = vpop.f32.mrb[0].mxu0
    %3300 = vdwg.mxu0
    %3301 = vrot.lane.b32.xlu0 %v2489, 96
    %v3302 = vpop.permute.xlu0 %3301
    %v3305 = vsel %vm448, %v3253, 0
    %3307 = vmatprep.subr.bf16.mxu0 0
    %3308 = vmatpush1.bf16.msra.mxu0 %v3302
    %3309 = vmatprep.subr.bf16.mxu0 0
    %3310 = vmatpush1.bf16.msra.mxu0 0
    %3311 = vmatprep.subr.bf16.mxu0 0
    %3312 = vmatpush1.bf16.msra.mxu0 0
    %3313 = vmatprep.subr.bf16.mxu0 0
    %3314 = vmatpush1.bf16.msra.mxu0 0
    %3315 = vmatprep.subr.bf16.mxu0 0
    %3316 = vmatpush1.bf16.msra.mxu0 0
    %3317 = vmatprep.subr.bf16.mxu0 0
    %3318 = vmatpush1.bf16.msra.mxu0 0
    %3319 = vmatprep.subr.bf16.mxu0 0
    %3320 = vmatpush1.bf16.msra.mxu0 0
    %3321 = vmatprep.subr.bf16.mxu0 0
    %3322 = vmatpush1.bf16.msra.mxu0 0
    %3323 = vmatprep.subr.bf16.mxu0 0
    %3324 = vmatpush1.bf16.msra.mxu0 0
    %3325 = vmatprep.subr.bf16.mxu0 0
    %3326 = vmatpush1.bf16.msra.mxu0 0
    %3327 = vmatprep.subr.bf16.mxu0 0
    %3328 = vmatpush1.bf16.msra.mxu0 0
    %3329 = vmatprep.subr.bf16.mxu0 0
    %3330 = vmatpush1.bf16.msra.mxu0 0
    %3331 = vmatprep.subr.bf16.mxu0 0
    %3332 = vmatpush1.bf16.msra.mxu0 0
    %3333 = vmatprep.subr.bf16.mxu0 0
    %3334 = vmatpush1.bf16.msra.mxu0 0
    %3335 = vmatprep.subr.bf16.mxu0 0
    %3336 = vmatpush1.bf16.msra.mxu0 0
    %3337 = vmatprep.subr.bf16.mxu0 0
    %3338 = vmatpush1.bf16.msra.mxu0 0
    %3339 = vmatprep.mubr.bf16.mxu0 0
    %3340 = vmatmul.mubr.bf16.gmra.mrb[0].mxu0 %v3305
    %v3341 = vpop.f32.mrb[0].mxu0
    %v3342 = vadd.f32 0.0, %v3341
    %v3343 = vpop.f32.mrb[0].mxu0
    %v3344 = vpop.f32.mrb[0].mxu0
    %v3345 = vadd.f32 0.0, %v3344
    %v3346 = vpop.f32.mrb[0].mxu0
    %3347 = vdwg.mxu0
    %v3348 = vpack.c.bf16 %v3298, %v3295
    %v3349 = vpack.c.bf16 %v3345, %v3342
    %v3350 = vld [vmem:[#allocation19 + $0x10] sm:$0xf]
    %v3351 = vld [vmem:[#allocation19 + $0x14] sm:$0xf]
    %v3354 = vunpack.c.l.b16 %v3350
    %v3355 = vunpack.c.l.b16 %v3351
    %v3356 = vpack.c.b16 %v3355, %v3354
    %v3359 = vsel %vm448, %v3348, 0
    %v3362 = vsel %vm448, %v3349, 0
    %3364 = vmatprep.subr.bf16.mxu0 0
    %3365 = vmatpush1.bf16.msra.mxu0 %v3356
    %3366 = vmatprep.subr.bf16.mxu0 0
    %3367 = vmatpush1.bf16.msra.mxu0 0
    %3368 = vmatprep.subr.bf16.mxu0 0
    %3369 = vmatpush1.bf16.msra.mxu0 0
    %3370 = vmatprep.subr.bf16.mxu0 0
    %3371 = vmatpush1.bf16.msra.mxu0 0
    %3372 = vmatprep.subr.bf16.mxu0 0
    %3373 = vmatpush1.bf16.msra.mxu0 0
    %3374 = vmatprep.subr.bf16.mxu0 0
    %3375 = vmatpush1.bf16.msra.mxu0 0
    %3376 = vmatprep.subr.bf16.mxu0 0
    %3377 = vmatpush1.bf16.msra.mxu0 0
    %3378 = vmatprep.subr.bf16.mxu0 0
    %3379 = vmatpush1.bf16.msra.mxu0 0
    %3380 = vmatprep.subr.bf16.mxu0 0
    %3381 = vmatpush1.bf16.msra.mxu0 0
    %3382 = vmatprep.subr.bf16.mxu0 0
    %3383 = vmatpush1.bf16.msra.mxu0 0
    %3384 = vmatprep.subr.bf16.mxu0 0
    %3385 = vmatpush1.bf16.msra.mxu0 0
    %3386 = vmatprep.subr.bf16.mxu0 0
    %3387 = vmatpush1.bf16.msra.mxu0 0
    %3388 = vmatprep.subr.bf16.mxu0 0
    %3389 = vmatpush1.bf16.msra.mxu0 0
    %3390 = vmatprep.subr.bf16.mxu0 0
    %3391 = vmatpush1.bf16.msra.mxu0 0
    %3392 = vmatprep.subr.bf16.mxu0 0
    %3393 = vmatpush1.bf16.msra.mxu0 0
    %3394 = vmatprep.subr.bf16.mxu0 0
    %3395 = vmatpush1.bf16.msra.mxu0 0
    %3396 = vmatprep.mubr.bf16.mxu0 0
    %3397 = vmatmul.mubr.bf16.gmra.mrb[0].mxu0 %v3359
    %v3398 = vpop.f32.mrb[0].mxu0
    %v3399 = vadd.f32 0.0, %v3398
    %v3400 = vpop.f32.mrb[0].mxu0
    %v3401 = vpop.f32.mrb[0].mxu0
    %v3402 = vadd.f32 0.0, %v3401
    %v3403 = vpop.f32.mrb[0].mxu0
    %3404 = vmatprep.mubr.bf16.mxu0 0
    %3405 = vmatmul.mubr.bf16.gmra.mrb[0].mxu0 %v3362
    %v3406 = vpop.f32.mrb[0].mxu0
    %v3407 = vadd.f32 0.0, %v3406
    %v3408 = vpop.f32.mrb[0].mxu0
    %v3409 = vpop.f32.mrb[0].mxu0
    %v3410 = vadd.f32 0.0, %v3409
    %v3411 = vpop.f32.mrb[0].mxu0
    %3412 = vdwg.mxu0
    %v3413 = vadd.f32 %v3089, %v3399
    %v3414 = vadd.f32 %v3092, %v3402
    %v3415 = vadd.f32 %v3097, %v3407
    %v3416 = vadd.f32 %v3100, %v3410
    %s3417 = scalar_lea.vmem %s24, 48
    %v3418 = vld [vmem:[%s3417] sm:$0xff]
    %v3419 = vld [vmem:[%s3417 + $0x8] sm:$0xff]
    %3420 = vrot.lane.b32.xlu0 %v2486, 80
    %v3421 = vpop.permute.xlu0 %3420
    %3422 = vrot.lane.b32.xlu0 %v2486, 16
    %v3423 = vpop.permute.xlu0 %3422
    %v3425 = vsel %vm448, %v3421, 0
    %v3428 = vsel %vm448, %v3423, 0
    %3430 = vmatprep.subr.bf16.mxu0 0
    %3431 = vmatpush1.bf16.xpose.msra.mxu0 %v3428
    %3432 = vmatprep.subr.bf16.mxu0 0
    %3433 = vmatpush1.bf16.xpose.msra.mxu0 0
    %3434 = vmatprep.subr.bf16.mxu0 0
    %3435 = vmatpush1.bf16.xpose.msra.mxu0 0
    %3436 = vmatprep.subr.bf16.mxu0 0
    %3437 = vmatpush1.bf16.xpose.msra.mxu0 0
    %3438 = vmatprep.subr.bf16.mxu0 0
    %3439 = vmatpush1.bf16.xpose.msra.mxu0 0
    %3440 = vmatprep.subr.bf16.mxu0 0
    %3441 = vmatpush1.bf16.xpose.msra.mxu0 0
    %3442 = vmatprep.subr.bf16.mxu0 0
    %3443 = vmatpush1.bf16.xpose.msra.mxu0 0
    %3444 = vmatprep.subr.bf16.mxu0 0
    %3445 = vmatpush1.bf16.xpose.msra.mxu0 0
    %3446 = vmatprep.subr.bf16.mxu0 0
    %3447 = vmatpush1.bf16.xpose.msra.mxu0 0
    %3448 = vmatprep.subr.bf16.mxu0 0
    %3449 = vmatpush1.bf16.xpose.msra.mxu0 0
    %3450 = vmatprep.subr.bf16.mxu0 0
    %3451 = vmatpush1.bf16.xpose.msra.mxu0 0
    %3452 = vmatprep.subr.bf16.mxu0 0
    %3453 = vmatpush1.bf16.xpose.msra.mxu0 0
    %3454 = vmatprep.subr.bf16.mxu0 0
    %3455 = vmatpush1.bf16.xpose.msra.mxu0 0
    %3456 = vmatprep.subr.bf16.mxu0 0
    %3457 = vmatpush1.bf16.xpose.msra.mxu0 0
    %3458 = vmatprep.subr.bf16.mxu0 0
    %3459 = vmatpush1.bf16.xpose.msra.mxu0 0
    %3460 = vmatprep.subr.bf16.mxu0 0
    %3461 = vmatpush1.bf16.xpose.msra.mxu0 0
    %3462 = vmatprep.mubr.bf16.mxu0 0
    %3463 = vmatmul.mubr.bf16.gmra.mrb[0].mxu0 %v3425
    %v3464 = vpop.f32.mrb[0].mxu0
    %v3465 = vadd.f32 %v3418, %v3464
    %v3466 = vpop.f32.mrb[0].mxu0
    %v3467 = vpop.f32.mrb[0].mxu0
    %v3468 = vadd.f32 %v3419, %v3467
    %v3469 = vpop.f32.mrb[0].mxu0
    %3470 = vdwg.mxu0
    %3471 = vrot.lane.b32.xlu0 %v2487, 80
    %v3472 = vpop.permute.xlu0 %3471
    %3473 = vrot.lane.b32.xlu0 %v2487, 16
    %v3474 = vpop.permute.xlu0 %3473
    %v3476 = vsel %vm448, %v3472, 0
    %v3479 = vsel %vm448, %v3474, 0
    %3481 = vmatprep.subr.bf16.mxu0 0
    %3482 = vmatpush1.bf16.xpose.msra.mxu0 %v3479
    %3483 = vmatprep.subr.bf16.mxu0 0
    %3484 = vmatpush1.bf16.xpose.msra.mxu0 0
    %3485 = vmatprep.subr.bf16.mxu0 0
    %3486 = vmatpush1.bf16.xpose.msra.mxu0 0
    %3487 = vmatprep.subr.bf16.mxu0 0
    %3488 = vmatpush1.bf16.xpose.msra.mxu0 0
    %3489 = vmatprep.subr.bf16.mxu0 0
    %3490 = vmatpush1.bf16.xpose.msra.mxu0 0
    %3491 = vmatprep.subr.bf16.mxu0 0
    %3492 = vmatpush1.bf16.xpose.msra.mxu0 0
    %3493 = vmatprep.subr.bf16.mxu0 0
    %3494 = vmatpush1.bf16.xpose.msra.mxu0 0
    %3495 = vmatprep.subr.bf16.mxu0 0
    %3496 = vmatpush1.bf16.xpose.msra.mxu0 0
    %3497 = vmatprep.subr.bf16.mxu0 0
    %3498 = vmatpush1.bf16.xpose.msra.mxu0 0
    %3499 = vmatprep.subr.bf16.mxu0 0
    %3500 = vmatpush1.bf16.xpose.msra.mxu0 0
    %3501 = vmatprep.subr.bf16.mxu0 0
    %3502 = vmatpush1.bf16.xpose.msra.mxu0 0
    %3503 = vmatprep.subr.bf16.mxu0 0
    %3504 = vmatpush1.bf16.xpose.msra.mxu0 0
    %3505 = vmatprep.subr.bf16.mxu0 0
    %3506 = vmatpush1.bf16.xpose.msra.mxu0 0
    %3507 = vmatprep.subr.bf16.mxu0 0
    %3508 = vmatpush1.bf16.xpose.msra.mxu0 0
    %3509 = vmatprep.subr.bf16.mxu0 0
    %3510 = vmatpush1.bf16.xpose.msra.mxu0 0
    %3511 = vmatprep.subr.bf16.mxu0 0
    %3512 = vmatpush1.bf16.xpose.msra.mxu0 0
    %3513 = vmatprep.mubr.bf16.mxu0 0
    %3514 = vmatmul.mubr.bf16.gmra.mrb[0].mxu0 %v3476
    %v3515 = vpop.f32.mrb[0].mxu0
    %v3516 = vadd.f32 %v3418, %v3515
    %v3517 = vpop.f32.mrb[0].mxu0
    %v3518 = vpop.f32.mrb[0].mxu0
    %v3519 = vadd.f32 %v3419, %v3518
    %v3520 = vpop.f32.mrb[0].mxu0
    %3521 = vdwg.mxu0
    %v3522 = vsel %vm448, %v3465, -inf
    %3523 = vmax.xlane.f32.xlu0 %v3522
    %v3524 = vpop.xlane.xlu0 %3523
    %v3525 = vsel %vm448, %v3468, -inf
    %3526 = vmax.xlane.f32.xlu0 %v3525
    %v3527 = vpop.xlane.xlu0 %3526
    %v3528 = vsel %vm448, %v3516, -inf
    %3529 = vmax.xlane.f32.xlu0 %v3528
    %v3530 = vpop.xlane.xlu0 %3529
    %v3531 = vsel %vm448, %v3519, -inf
    %3532 = vmax.xlane.f32.xlu0 %v3531
    %v3533 = vpop.xlane.xlu0 %3532
    %v3534 = vsub.f32 %v3465, %v3524
    %v3535 = vsub.f32 %v3468, %v3527
    %v3536 = vsub.f32 %v3516, %v3530
    %v3537 = vsub.f32 %v3519, %v3533
    %v3538 = vmul.f32 %v3534, 1.442695
    %v3539 = vpow.pop %v3538
    %v3540 = vmul.f32 %v3535, 1.442695
    %v3541 = vpow.pop %v3540
    %v3542 = vmul.f32 %v3536, 1.442695
    %v3543 = vpow.pop %v3542
    %v3544 = vmul.f32 %v3537, 1.442695
    %v3545 = vpow.pop %v3544
    %v3546 = vsel %vm448, %v3539, 0.0
    %3547 = vadd.xlane.f32.xlu0 %v3546
    %v3548 = vpop.xlane.xlu0 %3547
    %v3549 = vsel %vm448, %v3541, 0.0
    %3550 = vadd.xlane.f32.xlu0 %v3549
    %v3551 = vpop.xlane.xlu0 %3550
    %v3552 = vsel %vm448, %v3543, 0.0
    %3553 = vadd.xlane.f32.xlu0 %v3552
    %v3554 = vpop.xlane.xlu0 %3553
    %v3555 = vsel %vm448, %v3545, 0.0
    %3556 = vadd.xlane.f32.xlu0 %v3555
    %v3557 = vpop.xlane.xlu0 %3556
    %v3558 = vrcp.pop %v3548
    %v3559 = vrcp.pop %v3551
    %v3560 = vrcp.pop %v3554
    %v3561 = vrcp.pop %v3557
    %v3562 = vmul.f32 %v3539, %v3558
    %v3563 = vmul.f32 %v3541, %v3559
    %v3564 = vmul.f32 %v3543, %v3560
    %v3565 = vmul.f32 %v3545, %v3561
    %v3566 = vpack.c.bf16 %v3563, %v3562
    %v3567 = vpack.c.bf16 %v3565, %v3564
    %3568 = vrot.lane.b32.xlu0 %v2488, 80
    %v3569 = vpop.permute.xlu0 %3568
    %v3572 = vsel %vm448, %v3566, 0
    %3574 = vmatprep.subr.bf16.mxu0 0
    %3575 = vmatpush1.bf16.msra.mxu0 %v3569
    %3576 = vmatprep.subr.bf16.mxu0 0
    %3577 = vmatpush1.bf16.msra.mxu0 0
    %3578 = vmatprep.subr.bf16.mxu0 0
    %3579 = vmatpush1.bf16.msra.mxu0 0
    %3580 = vmatprep.subr.bf16.mxu0 0
    %3581 = vmatpush1.bf16.msra.mxu0 0
    %3582 = vmatprep.subr.bf16.mxu0 0
    %3583 = vmatpush1.bf16.msra.mxu0 0
    %3584 = vmatprep.subr.bf16.mxu0 0
    %3585 = vmatpush1.bf16.msra.mxu0 0
    %3586 = vmatprep.subr.bf16.mxu0 0
    %3587 = vmatpush1.bf16.msra.mxu0 0
    %3588 = vmatprep.subr.bf16.mxu0 0
    %3589 = vmatpush1.bf16.msra.mxu0 0
    %3590 = vmatprep.subr.bf16.mxu0 0
    %3591 = vmatpush1.bf16.msra.mxu0 0
    %3592 = vmatprep.subr.bf16.mxu0 0
    %3593 = vmatpush1.bf16.msra.mxu0 0
    %3594 = vmatprep.subr.bf16.mxu0 0
    %3595 = vmatpush1.bf16.msra.mxu0 0
    %3596 = vmatprep.subr.bf16.mxu0 0
    %3597 = vmatpush1.bf16.msra.mxu0 0
    %3598 = vmatprep.subr.bf16.mxu0 0
    %3599 = vmatpush1.bf16.msra.mxu0 0
    %3600 = vmatprep.subr.bf16.mxu0 0
    %3601 = vmatpush1.bf16.msra.mxu0 0
    %3602 = vmatprep.subr.bf16.mxu0 0
    %3603 = vmatpush1.bf16.msra.mxu0 0
    %3604 = vmatprep.subr.bf16.mxu0 0
    %3605 = vmatpush1.bf16.msra.mxu0 0
    %3606 = vmatprep.mubr.bf16.mxu0 0
    %3607 = vmatmul.mubr.bf16.gmra.mrb[0].mxu0 %v3572
    %v3608 = vpop.f32.mrb[0].mxu0
    %v3609 = vadd.f32 0.0, %v3608
    %v3610 = vpop.f32.mrb[0].mxu0
    %v3611 = vpop.f32.mrb[0].mxu0
    %v3612 = vadd.f32 0.0, %v3611
    %v3613 = vpop.f32.mrb[0].mxu0
    %3614 = vdwg.mxu0
    %3615 = vrot.lane.b32.xlu0 %v2489, 80
    %v3616 = vpop.permute.xlu0 %3615
    %v3619 = vsel %vm448, %v3567, 0
    %3621 = vmatprep.subr.bf16.mxu0 0
    %3622 = vmatpush1.bf16.msra.mxu0 %v3616
    %3623 = vmatprep.subr.bf16.mxu0 0
    %3624 = vmatpush1.bf16.msra.mxu0 0
    %3625 = vmatprep.subr.bf16.mxu0 0
    %3626 = vmatpush1.bf16.msra.mxu0 0
    %3627 = vmatprep.subr.bf16.mxu0 0
    %3628 = vmatpush1.bf16.msra.mxu0 0
    %3629 = vmatprep.subr.bf16.mxu0 0
    %3630 = vmatpush1.bf16.msra.mxu0 0
    %3631 = vmatprep.subr.bf16.mxu0 0
    %3632 = vmatpush1.bf16.msra.mxu0 0
    %3633 = vmatprep.subr.bf16.mxu0 0
    %3634 = vmatpush1.bf16.msra.mxu0 0
    %3635 = vmatprep.subr.bf16.mxu0 0
    %3636 = vmatpush1.bf16.msra.mxu0 0
    %3637 = vmatprep.subr.bf16.mxu0 0
    %3638 = vmatpush1.bf16.msra.mxu0 0
    %3639 = vmatprep.subr.bf16.mxu0 0
    %3640 = vmatpush1.bf16.msra.mxu0 0
    %3641 = vmatprep.subr.bf16.mxu0 0
    %3642 = vmatpush1.bf16.msra.mxu0 0
    %3643 = vmatprep.subr.bf16.mxu0 0
    %3644 = vmatpush1.bf16.msra.mxu0 0
    %3645 = vmatprep.subr.bf16.mxu0 0
    %3646 = vmatpush1.bf16.msra.mxu0 0
    %3647 = vmatprep.subr.bf16.mxu0 0
    %3648 = vmatpush1.bf16.msra.mxu0 0
    %3649 = vmatprep.subr.bf16.mxu0 0
    %3650 = vmatpush1.bf16.msra.mxu0 0
    %3651 = vmatprep.subr.bf16.mxu0 0
    %3652 = vmatpush1.bf16.msra.mxu0 0
    %3653 = vmatprep.mubr.bf16.mxu0 0
    %3654 = vmatmul.mubr.bf16.gmra.mrb[0].mxu0 %v3619
    %v3655 = vpop.f32.mrb[0].mxu0
    %v3656 = vadd.f32 0.0, %v3655
    %v3657 = vpop.f32.mrb[0].mxu0
    %v3658 = vpop.f32.mrb[0].mxu0
    %v3659 = vadd.f32 0.0, %v3658
    %v3660 = vpop.f32.mrb[0].mxu0
    %3661 = vdwg.mxu0
    %v3662 = vpack.c.bf16 %v3612, %v3609
    %v3663 = vpack.c.bf16 %v3659, %v3656
    %v3664 = vld [vmem:[#allocation19 + $0x18] sm:$0xf]
    %v3665 = vld [vmem:[#allocation19 + $0x1c] sm:$0xf]
    %v3668 = vunpack.c.l.b16 %v3664
    %v3669 = vunpack.c.l.b16 %v3665
    %v3670 = vpack.c.b16 %v3669, %v3668
    %v3673 = vsel %vm448, %v3662, 0
    %v3676 = vsel %vm448, %v3663, 0
    %3678 = vmatprep.subr.bf16.mxu0 0
    %3679 = vmatpush1.bf16.msra.mxu0 %v3670
    %3680 = vmatprep.subr.bf16.mxu0 0
    %3681 = vmatpush1.bf16.msra.mxu0 0
    %3682 = vmatprep.subr.bf16.mxu0 0
    %3683 = vmatpush1.bf16.msra.mxu0 0
    %3684 = vmatprep.subr.bf16.mxu0 0
    %3685 = vmatpush1.bf16.msra.mxu0 0
    %3686 = vmatprep.subr.bf16.mxu0 0
    %3687 = vmatpush1.bf16.msra.mxu0 0
    %3688 = vmatprep.subr.bf16.mxu0 0
    %3689 = vmatpush1.bf16.msra.mxu0 0
    %3690 = vmatprep.subr.bf16.mxu0 0
    %3691 = vmatpush1.bf16.msra.mxu0 0
    %3692 = vmatprep.subr.bf16.mxu0 0
    %3693 = vmatpush1.bf16.msra.mxu0 0
    %3694 = vmatprep.subr.bf16.mxu0 0
    %3695 = vmatpush1.bf16.msra.mxu0 0
    %3696 = vmatprep.subr.bf16.mxu0 0
    %3697 = vmatpush1.bf16.msra.mxu0 0
    %3698 = vmatprep.subr.bf16.mxu0 0
    %3699 = vmatpush1.bf16.msra.mxu0 0
    %3700 = vmatprep.subr.bf16.mxu0 0
    %3701 = vmatpush1.bf16.msra.mxu0 0
    %3702 = vmatprep.subr.bf16.mxu0 0
    %3703 = vmatpush1.bf16.msra.mxu0 0
    %3704 = vmatprep.subr.bf16.mxu0 0
    %3705 = vmatpush1.bf16.msra.mxu0 0
    %3706 = vmatprep.subr.bf16.mxu0 0
    %3707 = vmatpush1.bf16.msra.mxu0 0
    %3708 = vmatprep.subr.bf16.mxu0 0
    %3709 = vmatpush1.bf16.msra.mxu0 0
    %3710 = vmatprep.mubr.bf16.mxu0 0
    %3711 = vmatmul.mubr.bf16.gmra.mrb[0].mxu0 %v3673
    %v3712 = vpop.f32.mrb[0].mxu0
    %v3713 = vadd.f32 0.0, %v3712
    %v3714 = vpop.f32.mrb[0].mxu0
    %v3715 = vpop.f32.mrb[0].mxu0
    %v3716 = vadd.f32 0.0, %v3715
    %v3717 = vpop.f32.mrb[0].mxu0
    %3718 = vmatprep.mubr.bf16.mxu0 0
    %3719 = vmatmul.mubr.bf16.gmra.mrb[0].mxu0 %v3676
    %v3720 = vpop.f32.mrb[0].mxu0
    %v3721 = vadd.f32 0.0, %v3720
    %v3722 = vpop.f32.mrb[0].mxu0
    %v3723 = vpop.f32.mrb[0].mxu0
    %v3724 = vadd.f32 0.0, %v3723
    %v3725 = vpop.f32.mrb[0].mxu0
    %3726 = vdwg.mxu0
    %v3727 = vadd.f32 %v3413, %v3713
    %v3728 = vadd.f32 %v3414, %v3716
    %v3729 = vadd.f32 %v3415, %v3721
    %v3730 = vadd.f32 %v3416, %v3724
    %v3731 = vadd.f32 %v2299, %v3727
    %v3732 = vadd.f32 %v2300, %v3728
    %v3733 = vadd.f32 %v2301, %v3729
    %v3734 = vadd.f32 %v2302, %v3730
    %v3735 = vld [vmem:[#allocation20] sm:$0x1]
    %v3737 = vlaneseq
    %v3738 = vshrl.u32 %v3737, 7
    %v3739 = vsub.s32 0, %v3738
    %v3740 = vrot.slane %v3735, %v3739
    %v3742 = vadd.f32 %v3731, %v3740
    %v3743 = vadd.f32 %v3732, %v3740
    %v3744 = vadd.f32 %v3733, %v3740
    %v3745 = vadd.f32 %v3734, %v3740
    %v3746 = vld [vmem:[#allocation22] sm:$0x1]
    %v3747 = vld [vmem:[#allocation23] sm:$0x1]
    %v3748 = vsel %vm256, %v3742, 0.0
    %3749 = vadd.xlane.f32.xlu0 %v3748
    %v3750 = vpop.xlane.xlu0 %3749
    %v3751 = vsel %vm256, %v3743, 0.0
    %3752 = vadd.xlane.f32.xlu0 %v3751
    %v3753 = vpop.xlane.xlu0 %3752
    %v3754 = vsel %vm256, %v3744, 0.0
    %3755 = vadd.xlane.f32.xlu0 %v3754
    %v3756 = vpop.xlane.xlu0 %3755
    %v3757 = vsel %vm256, %v3745, 0.0
    %3758 = vadd.xlane.f32.xlu0 %v3757
    %v3759 = vpop.xlane.xlu0 %3758
    %v3760 = vmul.f32 %v3750, %v269
    %v3761 = vmul.f32 %v3753, %v269
    %v3762 = vmul.f32 %v3756, %v269
    %v3763 = vmul.f32 %v3759, %v269
    %v3764 = vsub.f32 %v3742, %v3760
    %v3765 = vsub.f32 %v3743, %v3761
    %v3766 = vsub.f32 %v3744, %v3762
    %v3767 = vsub.f32 %v3745, %v3763
    %v3768 = vmul.f32 %v3764, %v3764
    %v3769 = vmul.f32 %v3765, %v3765
    %v3770 = vmul.f32 %v3766, %v3766
    %v3771 = vmul.f32 %v3767, %v3767
    %v3772 = vsel %vm256, %v3768, 0.0
    %3773 = vadd.xlane.f32.xlu0 %v3772
    %v3774 = vpop.xlane.xlu0 %3773
    %v3775 = vsel %vm256, %v3769, 0.0
    %3776 = vadd.xlane.f32.xlu0 %v3775
    %v3777 = vpop.xlane.xlu0 %3776
    %v3778 = vsel %vm256, %v3770, 0.0
    %3779 = vadd.xlane.f32.xlu0 %v3778
    %v3780 = vpop.xlane.xlu0 %3779
    %v3781 = vsel %vm256, %v3771, 0.0
    %3782 = vadd.xlane.f32.xlu0 %v3781
    %v3783 = vpop.xlane.xlu0 %3782
    %v3784 = vmul.f32 %v3774, %v269
    %v3785 = vmul.f32 %v3777, %v269
    %v3786 = vmul.f32 %v3780, %v269
    %v3787 = vmul.f32 %v3783, %v269
    %v3788 = vadd.f32 %v3784, 1e-05
    %v3789 = vadd.f32 %v3785, 1e-05
    %v3790 = vadd.f32 %v3786, 1e-05
    %v3791 = vadd.f32 %v3787, 1e-05
    %v3792 = vrsqrt.pop %v3788
    %v3793 = vrsqrt.pop %v3789
    %v3794 = vrsqrt.pop %v3790
    %v3795 = vrsqrt.pop %v3791
    %v3796 = vmul.f32 %v3764, %v3792
    %v3797 = vmul.f32 %v3765, %v3793
    %v3798 = vmul.f32 %v3766, %v3794
    %v3799 = vmul.f32 %v3767, %v3795
    %v3801 = vlaneseq
    %v3802 = vshrl.u32 %v3801, 7
    %v3803 = vsub.s32 0, %v3802
    %v3804 = vrot.slane %v3746, %v3803
    %v3806 = vmul.f32 %v3796, %v3804
    %v3807 = vmul.f32 %v3797, %v3804
    %v3808 = vmul.f32 %v3798, %v3804
    %v3809 = vmul.f32 %v3799, %v3804
    %v3811 = vlaneseq
    %v3812 = vshrl.u32 %v3811, 7
    %v3813 = vsub.s32 0, %v3812
    %v3814 = vrot.slane %v3747, %v3813
    %v3816 = vadd.f32 %v3806, %v3814
    %v3817 = vadd.f32 %v3807, %v3814
    %v3818 = vadd.f32 %v3808, %v3814
    %v3819 = vadd.f32 %v3809, %v3814
    %v3820 = vpack.c.bf16 %v3817, %v3816
    %v3821 = vpack.c.bf16 %v3819, %v3818
    %v3822 = vld [vmem:[%s20] sm:$0xff]
    %v3823 = vld [vmem:[%s20 + $0x8] sm:$0xff]
    %v3824 = vld [vmem:[%s20 + $0x10] sm:$0xff]
    %v3825 = vld [vmem:[%s20 + $0x18] sm:$0xff]
    %v3826 = vld [vmem:[%s20 + $0x20] sm:$0xff]
    %v3827 = vld [vmem:[%s20 + $0x28] sm:$0xff]
    %v3828 = vld [vmem:[%s20 + $0x30] sm:$0xff]
    %v3829 = vld [vmem:[%s20 + $0x38] sm:$0xff]
    %v3830 = vld [vmem:[%s21] sm:$0x3]
    %v3832 = vlaneseq
    %v3833 = vshrl.u32 %v3832, 7
    %v3834 = vsub.s32 0, %v3833
    %v3835 = vrot.slane %v3830, %v3834
    %v3836 = vlaneseq
    %v3837 = vshrl.u32 %v3836, 7
    %v3838 = vsub.s32 1, %v3837
    %v3839 = vrot.slane %v3830, %v3838
    %v3850 = vunpack.c.l.b16 %v3822
    %v3851 = vunpack.c.h.b16 %v3822
    %v3852 = vunpack.c.l.b16 %v3823
    %v3853 = vunpack.c.h.b16 %v3823
    %v3854 = vunpack.c.l.b16 %v3824
    %v3855 = vunpack.c.h.b16 %v3824
    %v3856 = vunpack.c.l.b16 %v3825
    %v3857 = vunpack.c.h.b16 %v3825
    %v3858 = vunpack.c.l.b16 %v3826
    %v3859 = vunpack.c.h.b16 %v3826
    %v3860 = vunpack.c.l.b16 %v3827
    %v3861 = vunpack.c.h.b16 %v3827
    %v3862 = vunpack.c.l.b16 %v3828
    %v3863 = vunpack.c.h.b16 %v3828
    %v3864 = vunpack.c.l.b16 %v3829
    %v3865 = vunpack.c.h.b16 %v3829
    %v3866 = vpack.c.b16 %v3852, %v3850
    %v3867 = vpack.c.b16 %v3853, %v3851
    %v3868 = vpack.c.b16 %v3856, %v3854
    %v3869 = vpack.c.b16 %v3857, %v3855
    %v3870 = vpack.c.b16 %v3860, %v3858
    %v3871 = vpack.c.b16 %v3861, %v3859
    %v3872 = vpack.c.b16 %v3864, %v3862
    %v3873 = vpack.c.b16 %v3865, %v3863
    %v3883 = vsel %vm256, %v3820, 0
    %v3886 = vsel %vm256, %v3821, 0
    %3888 = vmatprep.subr.bf16.mxu0 %v3867
    %3889 = vmatpush1.bf16.msra.mxu0 %v3866
    %3890 = vmatprep.subr.bf16.mxu0 %v3869
    %3891 = vmatpush1.bf16.msra.mxu0 %v3868
    %3892 = vmatprep.subr.bf16.mxu0 %v3871
    %3893 = vmatpush1.bf16.msra.mxu0 %v3870
    %3894 = vmatprep.subr.bf16.mxu0 %v3873
    %3895 = vmatpush1.bf16.msra.mxu0 %v3872
    %3896 = vmatprep.subr.bf16.mxu0 0
    %3897 = vmatpush1.bf16.msra.mxu0 0
    %3898 = vmatprep.subr.bf16.mxu0 0
    %3899 = vmatpush1.bf16.msra.mxu0 0
    %3900 = vmatprep.subr.bf16.mxu0 0
    %3901 = vmatpush1.bf16.msra.mxu0 0
    %3902 = vmatprep.subr.bf16.mxu0 0
    %3903 = vmatpush1.bf16.msra.mxu0 0
    %3904 = vmatprep.subr.bf16.mxu0 0
    %3905 = vmatpush1.bf16.msra.mxu0 0
    %3906 = vmatprep.subr.bf16.mxu0 0
    %3907 = vmatpush1.bf16.msra.mxu0 0
    %3908 = vmatprep.subr.bf16.mxu0 0
    %3909 = vmatpush1.bf16.msra.mxu0 0
    %3910 = vmatprep.subr.bf16.mxu0 0
    %3911 = vmatpush1.bf16.msra.mxu0 0
    %3912 = vmatprep.subr.bf16.mxu0 0
    %3913 = vmatpush1.bf16.msra.mxu0 0
    %3914 = vmatprep.subr.bf16.mxu0 0
    %3915 = vmatpush1.bf16.msra.mxu0 0
    %3916 = vmatprep.subr.bf16.mxu0 0
    %3917 = vmatpush1.bf16.msra.mxu0 0
    %3918 = vmatprep.subr.bf16.mxu0 0
    %3919 = vmatpush1.bf16.msra.mxu0 0
    %3920 = vmatprep.mubr.bf16.mxu0 0
    %3921 = vmatmul.mubr.bf16.gmra.mrb[0].mxu0 %v3883
    %v3922 = vpop.f32.mrb[0].mxu0
    %v3923 = vadd.f32 %v3835, %v3922
    %v3924 = vpop.f32.mrb[0].mxu0
    %v3925 = vadd.f32 %v3839, %v3924
    %v3926 = vpop.f32.mrb[0].mxu0
    %v3927 = vadd.f32 %v3835, %v3926
    %v3928 = vpop.f32.mrb[0].mxu0
    %v3929 = vadd.f32 %v3839, %v3928
    %3930 = vmatprep.mubr.bf16.mxu0 0
    %3931 = vmatmul.mubr.bf16.gmra.mrb[0].mxu0 %v3886
    %v3932 = vpop.f32.mrb[0].mxu0
    %v3933 = vadd.f32 %v3835, %v3932
    %v3934 = vpop.f32.mrb[0].mxu0
    %v3935 = vadd.f32 %v3839, %v3934
    %v3936 = vpop.f32.mrb[0].mxu0
    %v3937 = vadd.f32 %v3835, %v3936
    %v3938 = vpop.f32.mrb[0].mxu0
    %v3939 = vadd.f32 %v3839, %v3938
    %3940 = vdwg.mxu0
    %v3941 = vmul.f32 %v3923, 0.5
    %v3942 = vmul.f32 %v3925, 0.5
    %v3943 = vmul.f32 %v3927, 0.5
    %v3944 = vmul.f32 %v3929, 0.5
    %v3945 = vmul.f32 %v3933, 0.5
    %v3946 = vmul.f32 %v3935, 0.5
    %v3947 = vmul.f32 %v3937, 0.5
    %v3948 = vmul.f32 %v3939, 0.5
    %v3949 = vmul.f32 %v3923, 0.70710677
    %v3950 = vmul.f32 %v3925, 0.70710677
    %v3951 = vmul.f32 %v3927, 0.70710677
    %v3952 = vmul.f32 %v3929, 0.70710677
    %v3953 = vmul.f32 %v3933, 0.70710677
    %v3954 = vmul.f32 %v3935, 0.70710677
    %v3955 = vmul.f32 %v3937, 0.70710677
    %v3956 = vmul.f32 %v3939, 0.70710677
    %vm3957 = vcmp.ge.f32.partialorder %v3949, 0.0
    %vm3958 = vcmp.ge.f32.partialorder %v3950, 0.0
    %vm3959 = vcmp.ge.f32.partialorder %v3951, 0.0
    %vm3960 = vcmp.ge.f32.partialorder %v3952, 0.0
    %vm3961 = vcmp.ge.f32.partialorder %v3953, 0.0
    %vm3962 = vcmp.ge.f32.partialorder %v3954, 0.0
    %vm3963 = vcmp.ge.f32.partialorder %v3955, 0.0
    %vm3964 = vcmp.ge.f32.partialorder %v3956, 0.0
    %v3965 = vsel %vm3957, 1.0, -1.0
    %v3966 = vsel %vm3958, 1.0, -1.0
    %v3967 = vsel %vm3959, 1.0, -1.0
    %v3968 = vsel %vm3960, 1.0, -1.0
    %v3969 = vsel %vm3961, 1.0, -1.0
    %v3970 = vsel %vm3962, 1.0, -1.0
    %v3971 = vsel %vm3963, 1.0, -1.0
    %v3972 = vsel %vm3964, 1.0, -1.0
    %v3973 = vand.u32 2147483647, %v3949
    %v3974 = vand.u32 2147483647, %v3950
    %v3975 = vand.u32 2147483647, %v3951
    %v3976 = vand.u32 2147483647, %v3952
    %v3977 = vand.u32 2147483647, %v3953
    %v3978 = vand.u32 2147483647, %v3954
    %v3979 = vand.u32 2147483647, %v3955
    %v3980 = vand.u32 2147483647, %v3956
    %v3981 = vmul.f32 %v3973, 0.3275911
    %v3982 = vmul.f32 %v3974, 0.3275911
    %v3983 = vmul.f32 %v3975, 0.3275911
    %v3984 = vmul.f32 %v3976, 0.3275911
    %v3985 = vmul.f32 %v3977, 0.3275911
    %v3986 = vmul.f32 %v3978, 0.3275911
    %v3987 = vmul.f32 %v3979, 0.3275911
    %v3988 = vmul.f32 %v3980, 0.3275911
    %v3989 = vadd.f32 %v3981, 1.0
    %v3990 = vadd.f32 %v3982, 1.0
    %v3991 = vadd.f32 %v3983, 1.0
    %v3992 = vadd.f32 %v3984, 1.0
    %v3993 = vadd.f32 %v3985, 1.0
    %v3994 = vadd.f32 %v3986, 1.0
    %v3995 = vadd.f32 %v3987, 1.0
    %v3996 = vadd.f32 %v3988, 1.0
    %v3997 = vrcp.pop %v3989
    %v3998 = vmul.f32 1.0, %v3997
    %v3999 = vrcp.pop %v3990
    %v4000 = vmul.f32 1.0, %v3999
    %v4001 = vrcp.pop %v3991
    %v4002 = vmul.f32 1.0, %v4001
    %v4003 = vrcp.pop %v3992
    %v4004 = vmul.f32 1.0, %v4003
    %v4005 = vrcp.pop %v3993
    %v4006 = vmul.f32 1.0, %v4005
    %v4007 = vrcp.pop %v3994
    %v4008 = vmul.f32 1.0, %v4007
    %v4009 = vrcp.pop %v3995
    %v4010 = vmul.f32 1.0, %v4009
    %v4011 = vrcp.pop %v3996
    %v4012 = vmul.f32 1.0, %v4011
    %v4013 = vmul.f32 %v3998, 1.0614054
    %v4014 = vmul.f32 %v4000, 1.0614054
    %v4015 = vmul.f32 %v4002, 1.0614054
    %v4016 = vmul.f32 %v4004, 1.0614054
    %v4017 = vmul.f32 %v4006, 1.0614054
    %v4018 = vmul.f32 %v4008, 1.0614054
    %v4019 = vmul.f32 %v4010, 1.0614054
    %v4020 = vmul.f32 %v4012, 1.0614054
    %v4021 = vadd.f32 %v4013, -1.4531521
    %v4022 = vadd.f32 %v4014, -1.4531521
    %v4023 = vadd.f32 %v4015, -1.4531521
    %v4024 = vadd.f32 %v4016, -1.4531521
    %v4025 = vadd.f32 %v4017, -1.4531521
    %v4026 = vadd.f32 %v4018, -1.4531521
    %v4027 = vadd.f32 %v4019, -1.4531521
    %v4028 = vadd.f32 %v4020, -1.4531521
    %v4029 = vmul.f32 %v4021, %v3998
    %v4030 = vmul.f32 %v4022, %v4000
    %v4031 = vmul.f32 %v4023, %v4002
    %v4032 = vmul.f32 %v4024, %v4004
    %v4033 = vmul.f32 %v4025, %v4006
    %v4034 = vmul.f32 %v4026, %v4008
    %v4035 = vmul.f32 %v4027, %v4010
    %v4036 = vmul.f32 %v4028, %v4012
    %v4037 = vadd.f32 %v4029, 1.4214138
    %v4038 = vadd.f32 %v4030, 1.4214138
    %v4039 = vadd.f32 %v4031, 1.4214138
    %v4040 = vadd.f32 %v4032, 1.4214138
    %v4041 = vadd.f32 %v4033, 1.4214138
    %v4042 = vadd.f32 %v4034, 1.4214138
    %v4043 = vadd.f32 %v4035, 1.4214138
    %v4044 = vadd.f32 %v4036, 1.4214138
    %v4045 = vmul.f32 %v4037, %v3998
    %v4046 = vmul.f32 %v4038, %v4000
    %v4047 = vmul.f32 %v4039, %v4002
    %v4048 = vmul.f32 %v4040, %v4004
    %v4049 = vmul.f32 %v4041, %v4006
    %v4050 = vmul.f32 %v4042, %v4008
    %v4051 = vmul.f32 %v4043, %v4010
    %v4052 = vmul.f32 %v4044, %v4012
    %v4053 = vadd.f32 %v4045, -0.28449672
    %v4054 = vadd.f32 %v4046, -0.28449672
    %v4055 = vadd.f32 %v4047, -0.28449672
    %v4056 = vadd.f32 %v4048, -0.28449672
    %v4057 = vadd.f32 %v4049, -0.28449672
    %v4058 = vadd.f32 %v4050, -0.28449672
    %v4059 = vadd.f32 %v4051, -0.28449672
    %v4060 = vadd.f32 %v4052, -0.28449672
    %v4061 = vmul.f32 %v4053, %v3998
    %v4062 = vmul.f32 %v4054, %v4000
    %v4063 = vmul.f32 %v4055, %v4002
    %v4064 = vmul.f32 %v4056, %v4004
    %v4065 = vmul.f32 %v4057, %v4006
    %v4066 = vmul.f32 %v4058, %v4008
    %v4067 = vmul.f32 %v4059, %v4010
    %v4068 = vmul.f32 %v4060, %v4012
    %v4069 = vadd.f32 %v4061, 0.2548296
    %v4070 = vadd.f32 %v4062, 0.2548296
    %v4071 = vadd.f32 %v4063, 0.2548296
    %v4072 = vadd.f32 %v4064, 0.2548296
    %v4073 = vadd.f32 %v4065, 0.2548296
    %v4074 = vadd.f32 %v4066, 0.2548296
    %v4075 = vadd.f32 %v4067, 0.2548296
    %v4076 = vadd.f32 %v4068, 0.2548296
    %v4077 = vmul.f32 %v4069, %v3998
    %v4078 = vmul.f32 %v4070, %v4000
    %v4079 = vmul.f32 %v4071, %v4002
    %v4080 = vmul.f32 %v4072, %v4004
    %v4081 = vmul.f32 %v4073, %v4006
    %v4082 = vmul.f32 %v4074, %v4008
    %v4083 = vmul.f32 %v4075, %v4010
    %v4084 = vmul.f32 %v4076, %v4012
    %v4085 = vsub.f32 0.0, %v3973
    %v4086 = vsub.f32 0.0, %v3974
    %v4087 = vsub.f32 0.0, %v3975
    %v4088 = vsub.f32 0.0, %v3976
    %v4089 = vsub.f32 0.0, %v3977
    %v4090 = vsub.f32 0.0, %v3978
    %v4091 = vsub.f32 0.0, %v3979
    %v4092 = vsub.f32 0.0, %v3980
    %v4093 = vmul.f32 %v4085, %v3973
    %v4094 = vmul.f32 %v4086, %v3974
    %v4095 = vmul.f32 %v4087, %v3975
    %v4096 = vmul.f32 %v4088, %v3976
    %v4097 = vmul.f32 %v4089, %v3977
    %v4098 = vmul.f32 %v4090, %v3978
    %v4099 = vmul.f32 %v4091, %v3979
    %v4100 = vmul.f32 %v4092, %v3980
    %v4101 = vmul.f32 %v4093, 1.442695
    %v4102 = vpow.pop %v4101
    %v4103 = vmul.f32 %v4094, 1.442695
    %v4104 = vpow.pop %v4103
    %v4105 = vmul.f32 %v4095, 1.442695
    %v4106 = vpow.pop %v4105
    %v4107 = vmul.f32 %v4096, 1.442695
    %v4108 = vpow.pop %v4107
    %v4109 = vmul.f32 %v4097, 1.442695
    %v4110 = vpow.pop %v4109
    %v4111 = vmul.f32 %v4098, 1.442695
    %v4112 = vpow.pop %v4111
    %v4113 = vmul.f32 %v4099, 1.442695
    %v4114 = vpow.pop %v4113
    %v4115 = vmul.f32 %v4100, 1.442695
    %v4116 = vpow.pop %v4115
    %v4117 = vmul.f32 %v4077, %v4102
    %v4118 = vmul.f32 %v4078, %v4104
    %v4119 = vmul.f32 %v4079, %v4106
    %v4120 = vmul.f32 %v4080, %v4108
    %v4121 = vmul.f32 %v4081, %v4110
    %v4122 = vmul.f32 %v4082, %v4112
    %v4123 = vmul.f32 %v4083, %v4114
    %v4124 = vmul.f32 %v4084, %v4116
    %v4125 = vsub.f32 1.0, %v4117
    %v4126 = vsub.f32 1.0, %v4118
    %v4127 = vsub.f32 1.0, %v4119
    %v4128 = vsub.f32 1.0, %v4120
    %v4129 = vsub.f32 1.0, %v4121
    %v4130 = vsub.f32 1.0, %v4122
    %v4131 = vsub.f32 1.0, %v4123
    %v4132 = vsub.f32 1.0, %v4124
    %v4133 = vmul.f32 %v3965, %v4125
    %v4134 = vmul.f32 %v3966, %v4126
    %v4135 = vmul.f32 %v3967, %v4127
    %v4136 = vmul.f32 %v3968, %v4128
    %v4137 = vmul.f32 %v3969, %v4129
    %v4138 = vmul.f32 %v3970, %v4130
    %v4139 = vmul.f32 %v3971, %v4131
    %v4140 = vmul.f32 %v3972, %v4132
    %v4141 = vadd.f32 %v4133, 1.0
    %v4142 = vadd.f32 %v4134, 1.0
    %v4143 = vadd.f32 %v4135, 1.0
    %v4144 = vadd.f32 %v4136, 1.0
    %v4145 = vadd.f32 %v4137, 1.0
    %v4146 = vadd.f32 %v4138, 1.0
    %v4147 = vadd.f32 %v4139, 1.0
    %v4148 = vadd.f32 %v4140, 1.0
    %v4149 = vmul.f32 %v3941, %v4141
    %v4150 = vmul.f32 %v3942, %v4142
    %v4151 = vmul.f32 %v3943, %v4143
    %v4152 = vmul.f32 %v3944, %v4144
    %v4153 = vmul.f32 %v3945, %v4145
    %v4154 = vmul.f32 %v3946, %v4146
    %v4155 = vmul.f32 %v3947, %v4147
    %v4156 = vmul.f32 %v3948, %v4148
    %v4157 = vpack.c.bf16 %v4151, %v4149
    %v4158 = vpack.c.bf16 %v4152, %v4150
    %v4159 = vpack.c.bf16 %v4155, %v4153
    %v4160 = vpack.c.bf16 %v4156, %v4154
    %v4161 = vld [vmem:[%s22] sm:$0xf]
    %v4162 = vld [vmem:[%s22 + $0x4] sm:$0xf]
    %v4163 = vld [vmem:[%s22 + $0x8] sm:$0xf]
    %v4164 = vld [vmem:[%s22 + $0xc] sm:$0xf]
    %v4165 = vld [vmem:[%s22 + $0x10] sm:$0xf]
    %v4166 = vld [vmem:[%s22 + $0x14] sm:$0xf]
    %v4167 = vld [vmem:[%s22 + $0x18] sm:$0xf]
    %v4168 = vld [vmem:[%s22 + $0x1c] sm:$0xf]
    %v4169 = vld [vmem:[%s22 + $0x20] sm:$0xf]
    %v4170 = vld [vmem:[%s22 + $0x24] sm:$0xf]
    %v4171 = vld [vmem:[%s22 + $0x28] sm:$0xf]
    %v4172 = vld [vmem:[%s22 + $0x2c] sm:$0xf]
    %v4173 = vld [vmem:[%s22 + $0x30] sm:$0xf]
    %v4174 = vld [vmem:[%s22 + $0x34] sm:$0xf]
    %v4175 = vld [vmem:[%s22 + $0x38] sm:$0xf]
    %v4176 = vld [vmem:[%s22 + $0x3c] sm:$0xf]
    %v4177 = vld [vmem:[%s22 + $0x40] sm:$0xf]
    %v4178 = vld [vmem:[%s22 + $0x44] sm:$0xf]
    %v4179 = vld [vmem:[%s22 + $0x48] sm:$0xf]
    %v4180 = vld [vmem:[%s22 + $0x4c] sm:$0xf]
    %v4181 = vld [vmem:[%s22 + $0x50] sm:$0xf]
    %v4182 = vld [vmem:[%s22 + $0x54] sm:$0xf]
    %v4183 = vld [vmem:[%s22 + $0x58] sm:$0xf]
    %v4184 = vld [vmem:[%s22 + $0x5c] sm:$0xf]
    %v4185 = vld [vmem:[%s22 + $0x60] sm:$0xf]
    %v4186 = vld [vmem:[%s22 + $0x64] sm:$0xf]
    %v4187 = vld [vmem:[%s22 + $0x68] sm:$0xf]
    %v4188 = vld [vmem:[%s22 + $0x6c] sm:$0xf]
    %v4189 = vld [vmem:[%s22 + $0x70] sm:$0xf]
    %v4190 = vld [vmem:[%s22 + $0x74] sm:$0xf]
    %v4191 = vld [vmem:[%s22 + $0x78] sm:$0xf]
    %v4192 = vld [vmem:[%s22 + $0x7c] sm:$0xf]
    %v4193 = vld [vmem:[%s23] sm:$0x1]
    %v4195 = vlaneseq
    %v4196 = vshrl.u32 %v4195, 7
    %v4197 = vsub.s32 0, %v4196
    %v4198 = vrot.slane %v4193, %v4197
    %v4232 = vunpack.c.l.b16 %v4161
    %v4233 = vunpack.c.l.b16 %v4162
    %v4234 = vunpack.c.l.b16 %v4163
    %v4235 = vunpack.c.l.b16 %v4164
    %v4236 = vunpack.c.l.b16 %v4165
    %v4237 = vunpack.c.l.b16 %v4166
    %v4238 = vunpack.c.l.b16 %v4167
    %v4239 = vunpack.c.l.b16 %v4168
    %v4240 = vunpack.c.l.b16 %v4169
    %v4241 = vunpack.c.l.b16 %v4170
    %v4242 = vunpack.c.l.b16 %v4171
    %v4243 = vunpack.c.l.b16 %v4172
    %v4244 = vunpack.c.l.b16 %v4173
    %v4245 = vunpack.c.l.b16 %v4174
    %v4246 = vunpack.c.l.b16 %v4175
    %v4247 = vunpack.c.l.b16 %v4176
    %v4248 = vunpack.c.l.b16 %v4177
    %v4249 = vunpack.c.l.b16 %v4178
    %v4250 = vunpack.c.l.b16 %v4179
    %v4251 = vunpack.c.l.b16 %v4180
    %v4252 = vunpack.c.l.b16 %v4181
    %v4253 = vunpack.c.l.b16 %v4182
    %v4254 = vunpack.c.l.b16 %v4183
    %v4255 = vunpack.c.l.b16 %v4184
    %v4256 = vunpack.c.l.b16 %v4185
    %v4257 = vunpack.c.l.b16 %v4186
    %v4258 = vunpack.c.l.b16 %v4187
    %v4259 = vunpack.c.l.b16 %v4188
    %v4260 = vunpack.c.l.b16 %v4189
    %v4261 = vunpack.c.l.b16 %v4190
    %v4262 = vunpack.c.l.b16 %v4191
    %v4263 = vunpack.c.l.b16 %v4192
    %v4264 = vpack.c.b16 %v4233, %v4232
    %v4265 = vpack.c.b16 %v4235, %v4234
    %v4266 = vpack.c.b16 %v4237, %v4236
    %v4267 = vpack.c.b16 %v4239, %v4238
    %v4268 = vpack.c.b16 %v4241, %v4240
    %v4269 = vpack.c.b16 %v4243, %v4242
    %v4270 = vpack.c.b16 %v4245, %v4244
    %v4271 = vpack.c.b16 %v4247, %v4246
    %v4272 = vpack.c.b16 %v4249, %v4248
    %v4273 = vpack.c.b16 %v4251, %v4250
    %v4274 = vpack.c.b16 %v4253, %v4252
    %v4275 = vpack.c.b16 %v4255, %v4254
    %v4276 = vpack.c.b16 %v4257, %v4256
    %v4277 = vpack.c.b16 %v4259, %v4258
    %v4278 = vpack.c.b16 %v4261, %v4260
    %v4279 = vpack.c.b16 %v4263, %v4262
    %4296 = vmatprep.subr.bf16.mxu0 0
    %4297 = vmatpush1.bf16.msra.mxu0 %v4264
    %4298 = vmatprep.subr.bf16.mxu0 0
    %4299 = vmatpush1.bf16.msra.mxu0 %v4265
    %4300 = vmatprep.subr.bf16.mxu0 0
    %4301 = vmatpush1.bf16.msra.mxu0 %v4266
    %4302 = vmatprep.subr.bf16.mxu0 0
    %4303 = vmatpush1.bf16.msra.mxu0 %v4267
    %4304 = vmatprep.subr.bf16.mxu0 0
    %4305 = vmatpush1.bf16.msra.mxu0 %v4268
    %4306 = vmatprep.subr.bf16.mxu0 0
    %4307 = vmatpush1.bf16.msra.mxu0 %v4269
    %4308 = vmatprep.subr.bf16.mxu0 0
    %4309 = vmatpush1.bf16.msra.mxu0 %v4270
    %4310 = vmatprep.subr.bf16.mxu0 0
    %4311 = vmatpush1.bf16.msra.mxu0 %v4271
    %4312 = vmatprep.subr.bf16.mxu0 0
    %4313 = vmatpush1.bf16.msra.mxu0 %v4272
    %4314 = vmatprep.subr.bf16.mxu0 0
    %4315 = vmatpush1.bf16.msra.mxu0 %v4273
    %4316 = vmatprep.subr.bf16.mxu0 0
    %4317 = vmatpush1.bf16.msra.mxu0 %v4274
    %4318 = vmatprep.subr.bf16.mxu0 0
    %4319 = vmatpush1.bf16.msra.mxu0 %v4275
    %4320 = vmatprep.subr.bf16.mxu0 0
    %4321 = vmatpush1.bf16.msra.mxu0 %v4276
    %4322 = vmatprep.subr.bf16.mxu0 0
    %4323 = vmatpush1.bf16.msra.mxu0 %v4277
    %4324 = vmatprep.subr.bf16.mxu0 0
    %4325 = vmatpush1.bf16.msra.mxu0 %v4278
    %4326 = vmatprep.subr.bf16.mxu0 0
    %4327 = vmatpush1.bf16.msra.mxu0 %v4279
    %4328 = vmatprep.mubr.bf16.mxu0 %v4158
    %4329 = vmatmul.mubr.bf16.gmra.mrb[0].mxu0 %v4157
    %v4330 = vpop.f32.mrb[0].mxu0
    %v4331 = vadd.f32 %v4198, %v4330
    %v4332 = vpop.f32.mrb[0].mxu0
    %v4333 = vpop.f32.mrb[0].mxu0
    %v4334 = vadd.f32 %v4198, %v4333
    %v4335 = vpop.f32.mrb[0].mxu0
    %4336 = vmatprep.mubr.bf16.mxu0 %v4160
    %4337 = vmatmul.mubr.bf16.gmra.mrb[0].mxu0 %v4159
    %v4338 = vpop.f32.mrb[0].mxu0
    %v4339 = vadd.f32 %v4198, %v4338
    %v4340 = vpop.f32.mrb[0].mxu0
    %v4341 = vpop.f32.mrb[0].mxu0
    %v4342 = vadd.f32 %v4198, %v4341
    %v4343 = vpop.f32.mrb[0].mxu0
    %4344 = vdwg.mxu0
    %v4345 = vadd.f32 %v3742, %v4331
    %v4346 = vadd.f32 %v3743, %v4334
    %v4347 = vadd.f32 %v3744, %v4339
    %v4348 = vadd.f32 %v3745, %v4342
    %4349 = vst.msk [vmem:[#allocation25] sm:$0xff] %vm256, %v4345
    %4350 = vst.msk [vmem:[#allocation25 + $0x8] sm:$0xff] %vm256, %v4346
    %4351 = vst.msk [vmem:[#allocation25 + $0x10] sm:$0xff] %vm256, %v4347
    %4352 = vst.msk [vmem:[#allocation25 + $0x18] sm:$0xff] %vm256, %v4348
    // Predicated region
    $region158: #{tpu_custom_call.1} parent=1 // pred_check
      _
    $region159: #{tpu_custom_call.1} parent=1 // pred_check_branch
      %4354 = sbr.rel (0) target = $region161
    $region160: #{tpu_custom_call.1} parent=1 // pred_region
      %s4356 = ssub.s32 512, 512
      %4357 = vsyncadd [#allocation4], %s4356
      %s4358 = sshll.u32 [#allocation25], 4
      %s4359 = int_to_ptr.vmem [resolvable:$true] %s4358
      %4364 = dma.vmem_to_hbm [thread:$0]  %s4359, 512, %s25, [#allocation4], 128, 128, 8
    $region161: #{tpu_custom_call.1} parent=1 // pred_fallthru
      _
    // Predicated region
    $region162: #{tpu_custom_call.1} parent=1 // pred_check
      _
    $region163: #{tpu_custom_call.1} parent=1 // pred_check_branch
      %4366 = sbr.rel (0) target = $region165
    $region164: #{tpu_custom_call.1} parent=1 // pred_region
      %4367 = dma.done [#allocation4], 512
    $region165: #{tpu_custom_call.1} parent=1 // pred_fallthru
      _
    %4368 = vsyncpa [#allocation3], 1
    %4369 = vsyncpa [#allocation6], 1
    %4370 = vsyncpa [#allocation9], 1
    %4371 = vsyncpa [#allocation12], 1
    %4372 = vsyncpa [#allocation15], 1
    %4373 = vsyncpa [#allocation18], 1
    %4374 = vsyncpa [#allocation21], 1
    %4375 = vsyncpa [#allocation24], 1
    %4376 = vsyncpa [#allocation4], 1

</llo_original>
